<compile_context>
chip_gen: v5e
topology: v5e:2x2
jax: 0.10.0
libtpu: 0.0.40
codegen_flags: <defaults>
</compile_context>

<pallas_src>
import jax
import jax.numpy as jnp
from jax import lax
from jax.experimental import pallas as pl
from jax.experimental.pallas import tpu as pltpu


def _sigmoid(x):
    # Single-EUP-push sigmoid: 0.5*(tanh(x/2)+1) (exact identity).
    return 0.5 * (jnp.tanh(0.5 * x) + 1.0)


def _round_up(x, m):
    return (x + m - 1) // m * m


# ----------------------------------------------------------------------------
# Pallas kernel: full bidirectional LSTM recurrence + final FC layer.
# ----------------------------------------------------------------------------
def bilstm_kernel(emb_ref,                        # (T, TB, E)    bf16
                  wx_f_ref, wh_f_ref, b_f_ref,    # (E,4H)bf16 (H,4H)bf16 (1,4H)f32
                  wx_b_ref, wh_b_ref, b_b_ref,    # same, backward dir
                  wfc_f_ref, wfc_b_ref, bfc_ref,  # (H,Op)bf16 x2, (1,Op)f32
                  y_ref,                          # (TB, Op)      f32
                  xg_f_ref, xg_b_ref,             # scratch (T, TB, 4H) bf16
                  h_f_ref, c_f_ref, h_b_ref, c_b_ref):  # scratch (TB, H) f32
    T, TB, E = emb_ref.shape
    H = wh_f_ref.shape[0]
    G = 4 * H

    # ---- Hoisted input projection: one (T*TB, E)@(E, 4H) bf16 matmul per
    # direction (f32 accumulation), bias added once, parked in bf16 scratch.
    x_flat = emb_ref[...].reshape(T * TB, E)
    xg_f_ref[...] = (
        jnp.dot(x_flat, wx_f_ref[...], preferred_element_type=jnp.float32)
        + b_f_ref[...]).astype(xg_f_ref.dtype).reshape(T, TB, G)
    xg_b_ref[...] = (
        jnp.dot(x_flat, wx_b_ref[...], preferred_element_type=jnp.float32)
        + b_b_ref[...]).astype(xg_b_ref.dtype).reshape(T, TB, G)

    # ---- State lives in VMEM scratch, not loop-carried vregs (at production
    # TB*H four f32 states would eat the whole register file).
    h_f_ref[...] = jnp.zeros_like(h_f_ref)
    c_f_ref[...] = jnp.zeros_like(c_f_ref)
    h_b_ref[...] = jnp.zeros_like(h_b_ref)
    c_b_ref[...] = jnp.zeros_like(c_b_ref)

    # Lane mask selecting the "g" gate chunk [2H, 3H); constant, hoisted.
    use_blend = G <= 128
    if use_blend:
        lane = lax.broadcasted_iota(jnp.int32, (TB, G), 1)
        g_mask = (lane >= 2 * H) & (lane < 3 * H)

    def activations(g):
        if use_blend:
            # Two full-tile EUP passes + VPU blend instead of four
            # quarter-lane sliced activations.
            act = jnp.where(g_mask, jnp.tanh(g), _sigmoid(g))
            return (act[:, 0 * H:1 * H], act[:, 1 * H:2 * H],
                    act[:, 2 * H:3 * H], act[:, 3 * H:4 * H])
        return (_sigmoid(g[:, 0 * H:1 * H]), _sigmoid(g[:, 1 * H:2 * H]),
                jnp.tanh(g[:, 2 * H:3 * H]), _sigmoid(g[:, 3 * H:4 * H]))

    # TODO(synk): hold wh_f / wh_b MXU-resident across the T loop via
    # pltpu.matmul_push_rhs / matmul_acc_lhs / matmul_pop to remove the
    # per-step RHS re-push from the serial critical path (v6e/v7x).
    def step(t):
        h_f = h_f_ref[...]
        h_b = h_b_ref[...]
        # fwd / bwd interleaved so one direction's MXU push overlaps the
        # other's EUP/VPU work.
        g_f = xg_f_ref[t].astype(jnp.float32) + jnp.dot(
            h_f.astype(jnp.bfloat16), wh_f_ref[...],
            preferred_element_type=jnp.float32)
        g_b = xg_b_ref[T - 1 - t].astype(jnp.float32) + jnp.dot(
            h_b.astype(jnp.bfloat16), wh_b_ref[...],
            preferred_element_type=jnp.float32)

        i_f, f_f, gg_f, o_f = activations(g_f)
        i_b, f_b, gg_b, o_b = activations(g_b)

        c_f = f_f * c_f_ref[...] + i_f * gg_f
        c_b = f_b * c_b_ref[...] + i_b * gg_b
        c_f_ref[...] = c_f
        c_b_ref[...] = c_b
        h_f_ref[...] = o_f * jnp.tanh(c_f)
        h_b_ref[...] = o_b * jnp.tanh(c_b)

    if T <= 16:
        # Small static T: full unroll (static ref indices, LLO visibility).
        for t in range(T):
            step(t)
    else:
        # Large T: rolled loop with modest unroll; VMEM-resident state keeps
        # live ranges bounded (no vreg-spill blow-up).
        def body(t, carry):
            step(t)
            return carry
        lax.fori_loop(0, T, body, 0, unroll=2)

    # ---- y = [h_fwd_last, h_bwd_last] @ W_fc^T + b_fc (split -> no concat),
    # written to a lane-dense padded output slab.
    y_ref[...] = (
        jnp.dot(h_f_ref[...].astype(jnp.bfloat16), wfc_f_ref[...],
                preferred_element_type=jnp.float32)
        + jnp.dot(h_b_ref[...].astype(jnp.bfloat16), wfc_b_ref[...],
                  preferred_element_type=jnp.float32)
        + bfc_ref[...])


# ----------------------------------------------------------------------------
# JAX wrapper.
# ----------------------------------------------------------------------------
def bilstm_forward(seq, params):
    """seq: (T, B) int32 token ids (time-major). Returns (B, out_dim) f32."""
    T, B = seq.shape
    E = params["embed"].shape[1]
    H = params["wh_f"].shape[0]
    G = 4 * H
    O = params["bfc"].shape[-1]
    O_pad = _round_up(O, 128)            # lane-dense output slab

    # Per-generation VMEM budget (v7x has 64 MiB per TensorCore).
    try:
        vmem_cap = int(pltpu.get_tpu_info().vmem_capacity_bytes)
    except Exception:
        vmem_cap = 64 * 1024 * 1024      # conservative default (v7x)
    budget = (vmem_cap * 3) // 4

    def vmem_bytes(tb):
        xg = 2 * T * tb * G * 2                             # bf16 xg scratch
        emb_b = 2 * T * tb * E * 2                          # dbl-buffered emb
        state = 4 * tb * H * 4                              # h/c f32 scratch
        out = 2 * tb * O_pad * 4                            # dbl-buffered out
        w = 2 * (2 * (E + H) * G * 2 + 2 * H * O_pad * 2
                 + 2 * G * 4 + O_pad * 4)                   # weights / biases
        return xg + emb_b + state + out + w + (2 << 20)     # + headroom

    B8 = _round_up(B, 8)
    if B8 <= 8:
        TB = 8                          # whole batch in one sublane-aligned tile
    else:
        TB = 16
        for cand in (256, 128, 64, 32, 16):
            if cand <= B8 and vmem_bytes(cand) <= budget:
                TB = cand
                break
    # TODO(synk): on v7x, when B_pad // TB == 1 and TB >= 32, halve TB so the
    # "parallel" batch axis actually shards across both TensorCores.
    B_pad = _round_up(B8, TB)
    grid = (B_pad // TB,)

    if B_pad != B:
        seq = jnp.pad(seq, ((0, 0), (0, B_pad - B)))

    # TODO(synk): for large vocab/E, prefetch seq via PrefetchScalarGridSpec
    # and DMA-gather embedding rows in-kernel; here the gather stays in JAX
    # glue, but the table is cast to bf16 so the (T,B,E) HBM round-trip is
    # halved. Dropout is identity at inference.
    emb = params["embed"].astype(jnp.bfloat16)[seq]          # (T, B_pad, E)

    bf16 = jnp.bfloat16
    wx_f = params["wx_f"].astype(bf16)
    wh_f = params["wh_f"].astype(bf16)
    wx_b = params["wx_b"].astype(bf16)
    wh_b = params["wh_b"].astype(bf16)
    b_f = params["b_f"].astype(jnp.float32)
    b_b = params["b_b"].astype(jnp.float32)
    wfc_f = jnp.pad(params["wfc_f"], ((0, 0), (0, O_pad - O))).astype(bf16)
    wfc_b = jnp.pad(params["wfc_b"], ((0, 0), (0, O_pad - O))).astype(bf16)
    bfc = jnp.pad(params["bfc"], ((0, 0), (0, O_pad - O))).astype(jnp.float32)

    vmem_limit = int(min(int(vmem_cap * 0.9),
                         max(2 * vmem_bytes(TB), 32 * 1024 * 1024)))

    kernel = pl.pallas_call(
        bilstm_kernel,
        out_shape=jax.ShapeDtypeStruct((B_pad, O_pad), jnp.float32),
        grid_spec=pltpu.PrefetchScalarGridSpec(
            num_scalar_prefetch=0,
            grid=grid,
            in_specs=[
                pl.BlockSpec((T, TB, E), lambda b: (0, b, 0)),   # emb
                pl.BlockSpec((E, G), lambda b: (0, 0)),          # wx_f
                pl.BlockSpec((H, G), lambda b: (0, 0)),          # wh_f
                pl.BlockSpec((1, G), lambda b: (0, 0)),          # b_f
                pl.BlockSpec((E, G), lambda b: (0, 0)),          # wx_b
                pl.BlockSpec((H, G), lambda b: (0, 0)),          # wh_b
                pl.BlockSpec((1, G), lambda b: (0, 0)),          # b_b
                pl.BlockSpec((H, O_pad), lambda b: (0, 0)),      # wfc_f
                pl.BlockSpec((H, O_pad), lambda b: (0, 0)),      # wfc_b
                pl.BlockSpec((1, O_pad), lambda b: (0, 0)),      # bfc
            ],
            out_specs=pl.BlockSpec((TB, O_pad), lambda b: (b, 0)),
            scratch_shapes=[pltpu.VMEM((T, TB, G), jnp.bfloat16),   # xg_f
                            pltpu.VMEM((T, TB, G), jnp.bfloat16),   # xg_b
                            pltpu.VMEM((TB, H), jnp.float32),       # h_f
                            pltpu.VMEM((TB, H), jnp.float32),       # c_f
                            pltpu.VMEM((TB, H), jnp.float32),       # h_b
                            pltpu.VMEM((TB, H), jnp.float32)],      # c_b
        ),
        compiler_params=pltpu.CompilerParams(
            dimension_semantics=("parallel",),
            vmem_limit_bytes=vmem_limit),
    )
    y = kernel(emb,
               wx_f, wh_f, b_f,
               wx_b, wh_b, b_b,
               wfc_f, wfc_b, bfc)
    return y[:B, :O]


# ----------------------------------------------------------------------------
# Pure-JAX f32 reference (same math, same fused-gate layout).
# ----------------------------------------------------------------------------
def _ref_direction(emb_seq, wx, wh, b, H):
    B = emb_seq.shape[1]

    def step(carry, x):
        h, c = carry
        g = x @ wx + h @ wh + b
        i = jax.nn.sigmoid(g[:, 0 * H:1 * H])
        f = jax.nn.sigmoid(g[:, 1 * H:2 * H])
        gg = jnp.tanh(g[:, 2 * H:3 * H])
        o = jax.nn.sigmoid(g[:, 3 * H:4 * H])
        c = f * c + i * gg
        h = o * jnp.tanh(c)
        return (h, c), None

    (h, _), _ = lax.scan(step, (jnp.zeros((B, H), jnp.float32),
                                jnp.zeros((B, H), jnp.float32)), emb_seq)
    return h


def bilstm_reference(seq, params):
    emb = params["embed"][seq].astype(jnp.float32)
    H = params["wh_f"].shape[0]
    h_f = _ref_direction(emb, params["wx_f"], params["wh_f"], params["b_f"], H)
    h_b = _ref_direction(emb[::-1], params["wx_b"], params["wh_b"],
                         params["b_b"], H)
    return h_f @ params["wfc_f"] + h_b @ params["wfc_b"] + params["bfc"]


# ----------------------------------------------------------------------------
# Deterministic parameter init (PyTorch-like uniform(-1/sqrt(H), 1/sqrt(H))).
# Weights use the fused gate layout: columns are [i | f | g | o].
# ----------------------------------------------------------------------------
def init_params(key, vocab_size, emb_dim, hidden_dim, out_dim):
    ks = jax.random.split(key, 10)
    bound = 1.0 / jnp.sqrt(hidden_dim)
    G = 4 * hidden_dim

    def u(k, shape):
        return jax.random.uniform(k, shape, jnp.float32, -bound, bound)

    return {
        "embed": jax.random.normal(ks[0], (vocab_size, emb_dim), jnp.float32),
        "wx_f": u(ks[1], (emb_dim, G)),
        "wh_f": u(ks[2], (hidden_dim, G)),
        "b_f": u(ks[3], (1, G)),      # b_ih + b_hh combined
        "wx_b": u(ks[4], (emb_dim, G)),
        "wh_b": u(ks[5], (hidden_dim, G)),
        "b_b": u(ks[6], (1, G)),
        "wfc_f": u(ks[7], (hidden_dim, out_dim)),
        "wfc_b": u(ks[8], (hidden_dim, out_dim)),
        "bfc": u(ks[9], (1, out_dim)),
    }


if __name__ == "__main__":
    VOCAB, EMB, HID, OUT = 50, 32, 32, 8   # 4*HID = 128 -> lane-dense gates
    T, B = 10, 8

    key = jax.random.PRNGKey(0)
    k_param, k_seq = jax.random.split(key)
    params = init_params(k_param, VOCAB, EMB, HID, OUT)
    seq = jax.random.randint(k_seq, (T, B), 0, VOCAB, dtype=jnp.int32)

    y = jax.block_until_ready(bilstm_forward(seq, params))
    y_ref = jax.block_until_ready(bilstm_reference(seq, params))

    assert y.shape == (B, OUT), y.shape
    # bf16 MXU operands / bf16 xg scratch vs. the pure-f32 reference: a few
    # 1e-3..1e-2 of absolute drift over T=10 recurrent steps is expected
    # (accumulation, gate sums and cell state stay f32).
    assert jnp.allclose(y, y_ref, atol=5e-2, rtol=5e-2), (
        float(jnp.max(jnp.abs(y - y_ref))))
    print("KERNEL_OK")
</pallas_src>

<mosaic_0001>
module attributes {stable_mosaic.version = 11 : i64} {
  func.func @bilstm_kernel(%arg0: i32, %arg1: memref<10x8x32xbf16, #tpu.memory_space<vmem>>, %arg2: memref<32x128xbf16, #tpu.memory_space<vmem>>, %arg3: memref<32x128xbf16, #tpu.memory_space<vmem>>, %arg4: memref<1x128xf32, #tpu.memory_space<vmem>>, %arg5: memref<32x128xbf16, #tpu.memory_space<vmem>>, %arg6: memref<32x128xbf16, #tpu.memory_space<vmem>>, %arg7: memref<1x128xf32, #tpu.memory_space<vmem>>, %arg8: memref<32x128xbf16, #tpu.memory_space<vmem>>, %arg9: memref<32x128xbf16, #tpu.memory_space<vmem>>, %arg10: memref<1x128xf32, #tpu.memory_space<vmem>>, %arg11: memref<8x128xf32, #tpu.memory_space<vmem>>, %arg12: memref<10x8x128xbf16, #tpu.memory_space<vmem>>, %arg13: memref<10x8x128xbf16, #tpu.memory_space<vmem>>, %arg14: memref<8x32xf32, #tpu.memory_space<vmem>>, %arg15: memref<8x32xf32, #tpu.memory_space<vmem>>, %arg16: memref<8x32xf32, #tpu.memory_space<vmem>>, %arg17: memref<8x32xf32, #tpu.memory_space<vmem>>) attributes {dimension_semantics = [#tpu.dimension_semantics<parallel>], iteration_bounds = array<i64: 1>, scalar_prefetch = 0 : i64, scratch_operands = 6 : i64, tpu.core_type = #tpu.core_type<tc>, window_params = [{transform_indices = @transform_0, window_bounds = array<i64: 10, 8, 32>}, {pipeline_mode = #tpu.pipeline_mode<synchronous>, transform_indices = @transform_1, window_bounds = array<i64: 32, 128>}, {pipeline_mode = #tpu.pipeline_mode<synchronous>, transform_indices = @transform_2, window_bounds = array<i64: 32, 128>}, {pipeline_mode = #tpu.pipeline_mode<synchronous>, transform_indices = @transform_3, window_bounds = array<i64: 1, 128>}, {pipeline_mode = #tpu.pipeline_mode<synchronous>, transform_indices = @transform_4, window_bounds = array<i64: 32, 128>}, {pipeline_mode = #tpu.pipeline_mode<synchronous>, transform_indices = @transform_5, window_bounds = array<i64: 32, 128>}, {pipeline_mode = #tpu.pipeline_mode<synchronous>, transform_indices = @transform_6, window_bounds = array<i64: 1, 128>}, {pipeline_mode = #tpu.pipeline_mode<synchronous>, transform_indices = @transform_7, window_bounds = array<i64: 32, 128>}, {pipeline_mode = #tpu.pipeline_mode<synchronous>, transform_indices = @transform_8, window_bounds = array<i64: 32, 128>}, {pipeline_mode = #tpu.pipeline_mode<synchronous>, transform_indices = @transform_9, window_bounds = array<i64: 1, 128>}, {transform_indices = @transform_10, window_bounds = array<i64: 8, 128>}]} {
    %c0 = arith.constant 0 : index
    %c0_0 = arith.constant 0 : index
    %c0_1 = arith.constant 0 : index
    %0 = vector.load %arg1[%c0, %c0_0, %c0_1] : memref<10x8x32xbf16, #tpu.memory_space<vmem>>, vector<10x8x32xbf16>
    %1 = vector.shape_cast %0 : vector<10x8x32xbf16> to vector<80x32xbf16>
    %c0_2 = arith.constant 0 : index
    %c0_3 = arith.constant 0 : index
    %2 = vector.load %arg2[%c0_2, %c0_3] : memref<32x128xbf16, #tpu.memory_space<vmem>>, vector<32x128xbf16>
    %cst = arith.constant dense<0.000000e+00> : vector<80x128xf32>
    %3 = tpu.matmul %1, %2, %cst {dimension_numbers = #tpu.dot_dimension_numbers<[1], [0], [0], [1], [0, 0, 1, 1], [], []>} : vector<80x32xbf16>, vector<32x128xbf16>, vector<80x128xf32> -> vector<80x128xf32>
    %c0_4 = arith.constant 0 : index
    %c0_5 = arith.constant 0 : index
    %4 = vector.load %arg4[%c0_4, %c0_5] : memref<1x128xf32, #tpu.memory_space<vmem>>, vector<1x128xf32>
    %5 = vector.broadcast %4 : vector<1x128xf32> to vector<80x128xf32>
    %6 = arith.addf %3, %5 : vector<80x128xf32>
    %7 = arith.truncf %6 : vector<80x128xf32> to vector<80x128xbf16>
    %8 = vector.shape_cast %7 : vector<80x128xbf16> to vector<10x8x128xbf16>
    %c0_6 = arith.constant 0 : index
    %c0_7 = arith.constant 0 : index
    %c0_8 = arith.constant 0 : index
    %9 = vector.load %arg12[%c0_6, %c0_7, %c0_8] : memref<10x8x128xbf16, #tpu.memory_space<vmem>>, vector<10x8x128xbf16>
    tpu.vector_store %arg12[%c0_6, %c0_7, %c0_8], %8 {strides = array<i32>} : memref<10x8x128xbf16, #tpu.memory_space<vmem>>, vector<10x8x128xbf16>,
    %c0_9 = arith.constant 0 : index
    %c0_10 = arith.constant 0 : index
    %10 = vector.load %arg5[%c0_9, %c0_10] : memref<32x128xbf16, #tpu.memory_space<vmem>>, vector<32x128xbf16>
    %cst_11 = arith.constant dense<0.000000e+00> : vector<80x128xf32>
    %11 = tpu.matmul %1, %10, %cst_11 {dimension_numbers = #tpu.dot_dimension_numbers<[1], [0], [0], [1], [0, 0, 1, 1], [], []>} : vector<80x32xbf16>, vector<32x128xbf16>, vector<80x128xf32> -> vector<80x128xf32>
    %c0_12 = arith.constant 0 : index
    %c0_13 = arith.constant 0 : index
    %12 = vector.load %arg7[%c0_12, %c0_13] : memref<1x128xf32, #tpu.memory_space<vmem>>, vector<1x128xf32>
    %13 = vector.broadcast %12 : vector<1x128xf32> to vector<80x128xf32>
    %14 = arith.addf %11, %13 : vector<80x128xf32>
    %15 = arith.truncf %14 : vector<80x128xf32> to vector<80x128xbf16>
    %16 = vector.shape_cast %15 : vector<80x128xbf16> to vector<10x8x128xbf16>
    %c0_14 = arith.constant 0 : index
    %c0_15 = arith.constant 0 : index
    %c0_16 = arith.constant 0 : index
    %17 = vector.load %arg13[%c0_14, %c0_15, %c0_16] : memref<10x8x128xbf16, #tpu.memory_space<vmem>>, vector<10x8x128xbf16>
    tpu.vector_store %arg13[%c0_14, %c0_15, %c0_16], %16 {strides = array<i32>} : memref<10x8x128xbf16, #tpu.memory_space<vmem>>, vector<10x8x128xbf16>,
    %cst_17 = arith.constant 0.000000e+00 : f32
    %18 = vector.broadcast %cst_17 : f32 to vector<8x32xf32>
    %c0_18 = arith.constant 0 : index
    %c0_19 = arith.constant 0 : index
    %19 = vector.load %arg14[%c0_18, %c0_19] : memref<8x32xf32, #tpu.memory_space<vmem>>, vector<8x32xf32>
    tpu.vector_store %arg14[%c0_18, %c0_19], %18 {strides = array<i32>} : memref<8x32xf32, #tpu.memory_space<vmem>>, vector<8x32xf32>,
    %cst_20 = arith.constant 0.000000e+00 : f32
    %20 = vector.broadcast %cst_20 : f32 to vector<8x32xf32>
    %c0_21 = arith.constant 0 : index
    %c0_22 = arith.constant 0 : index
    %21 = vector.load %arg15[%c0_21, %c0_22] : memref<8x32xf32, #tpu.memory_space<vmem>>, vector<8x32xf32>
    tpu.vector_store %arg15[%c0_21, %c0_22], %20 {strides = array<i32>} : memref<8x32xf32, #tpu.memory_space<vmem>>, vector<8x32xf32>,
    %cst_23 = arith.constant 0.000000e+00 : f32
    %22 = vector.broadcast %cst_23 : f32 to vector<8x32xf32>
    %c0_24 = arith.constant 0 : index
    %c0_25 = arith.constant 0 : index
    %23 = vector.load %arg16[%c0_24, %c0_25] : memref<8x32xf32, #tpu.memory_space<vmem>>, vector<8x32xf32>
    tpu.vector_store %arg16[%c0_24, %c0_25], %22 {strides = array<i32>} : memref<8x32xf32, #tpu.memory_space<vmem>>, vector<8x32xf32>,
    %cst_26 = arith.constant 0.000000e+00 : f32
    %24 = vector.broadcast %cst_26 : f32 to vector<8x32xf32>
    %c0_27 = arith.constant 0 : index
    %c0_28 = arith.constant 0 : index
    %25 = vector.load %arg17[%c0_27, %c0_28] : memref<8x32xf32, #tpu.memory_space<vmem>>, vector<8x32xf32>
    tpu.vector_store %arg17[%c0_27, %c0_28], %24 {strides = array<i32>} : memref<8x32xf32, #tpu.memory_space<vmem>>, vector<8x32xf32>,
    %26 = tpu.iota {dimensions = array<i32: 1>} : vector<8x128xi32>
    %c64_i32 = arith.constant 64 : i32
    %27 = vector.broadcast %c64_i32 : i32 to vector<8x128xi32>
    %28 = arith.cmpi sge, %26, %27 : vector<8x128xi32>
    %c96_i32 = arith.constant 96 : i32
    %29 = vector.broadcast %c96_i32 : i32 to vector<8x128xi32>
    %30 = arith.cmpi slt, %26, %29 : vector<8x128xi32>
    %31 = arith.andi %28, %30 : vector<8x128xi1>
    %c0_29 = arith.constant 0 : index
    %c0_30 = arith.constant 0 : index
    %32 = vector.load %arg14[%c0_29, %c0_30] : memref<8x32xf32, #tpu.memory_space<vmem>>, vector<8x32xf32>
    %c0_31 = arith.constant 0 : index
    %c0_32 = arith.constant 0 : index
    %33 = vector.load %arg16[%c0_31, %c0_32] : memref<8x32xf32, #tpu.memory_space<vmem>>, vector<8x32xf32>
    %c0_33 = arith.constant 0 : index
    %c0_34 = arith.constant 0 : index
    %c0_35 = arith.constant 0 : index
    %34 = vector.load %arg12[%c0_33, %c0_34, %c0_35] : memref<10x8x128xbf16, #tpu.memory_space<vmem>>, vector<1x8x128xbf16>
    %35 = vector.shape_cast %34 : vector<1x8x128xbf16> to vector<8x128xbf16>
    %36 = arith.extf %35 : vector<8x128xbf16> to vector<8x128xf32>
    %37 = arith.truncf %32 : vector<8x32xf32> to vector<8x32xbf16>
    %c0_36 = arith.constant 0 : index
    %c0_37 = arith.constant 0 : index
    %38 = vector.load %arg3[%c0_36, %c0_37] : memref<32x128xbf16, #tpu.memory_space<vmem>>, vector<32x128xbf16>
    %cst_38 = arith.constant dense<0.000000e+00> : vector<8x128xf32>
    %39 = tpu.matmul %37, %38, %cst_38 {dimension_numbers = #tpu.dot_dimension_numbers<[1], [0], [0], [1], [0, 0, 1, 1], [], []>} : vector<8x32xbf16>, vector<32x128xbf16>, vector<8x128xf32> -> vector<8x128xf32>
    %40 = arith.addf %36, %39 : vector<8x128xf32>
    %c9 = arith.constant 9 : index
    %c0_39 = arith.constant 0 : index
    %c0_40 = arith.constant 0 : index
    %41 = vector.load %arg13[%c9, %c0_39, %c0_40] : memref<10x8x128xbf16, #tpu.memory_space<vmem>>, vector<1x8x128xbf16>
    %42 = vector.shape_cast %41 : vector<1x8x128xbf16> to vector<8x128xbf16>
    %43 = arith.extf %42 : vector<8x128xbf16> to vector<8x128xf32>
    %44 = arith.truncf %33 : vector<8x32xf32> to vector<8x32xbf16>
    %c0_41 = arith.constant 0 : index
    %c0_42 = arith.constant 0 : index
    %45 = vector.load %arg6[%c0_41, %c0_42] : memref<32x128xbf16, #tpu.memory_space<vmem>>, vector<32x128xbf16>
    %cst_43 = arith.constant dense<0.000000e+00> : vector<8x128xf32>
    %46 = tpu.matmul %44, %45, %cst_43 {dimension_numbers = #tpu.dot_dimension_numbers<[1], [0], [0], [1], [0, 0, 1, 1], [], []>} : vector<8x32xbf16>, vector<32x128xbf16>, vector<8x128xf32> -> vector<8x128xf32>
    %47 = arith.addf %43, %46 : vector<8x128xf32>
    %48 = math.tanh %40 : vector<8x128xf32>
    %cst_44 = arith.constant 5.000000e-01 : f32
    %49 = vector.broadcast %cst_44 : f32 to vector<8x128xf32>
    %50 = arith.mulf %49, %40 : vector<8x128xf32>
    %51 = math.tanh %50 : vector<8x128xf32>
    %cst_45 = arith.constant 1.000000e+00 : f32
    %52 = vector.broadcast %cst_45 : f32 to vector<8x128xf32>
    %53 = arith.addf %51, %52 : vector<8x128xf32>
    %cst_46 = arith.constant 5.000000e-01 : f32
    %54 = vector.broadcast %cst_46 : f32 to vector<8x128xf32>
    %55 = arith.mulf %54, %53 : vector<8x128xf32>
    %56 = arith.select %31, %48, %55 : vector<8x128xi1>, vector<8x128xf32>
    %57 = vector.extract_strided_slice %56 {offsets = [0, 0], sizes = [8, 32], strides = [1, 1]} : vector<8x128xf32> to vector<8x32xf32>
    %58 = vector.extract_strided_slice %56 {offsets = [0, 32], sizes = [8, 32], strides = [1, 1]} : vector<8x128xf32> to vector<8x32xf32>
    %59 = vector.extract_strided_slice %56 {offsets = [0, 64], sizes = [8, 32], strides = [1, 1]} : vector<8x128xf32> to vector<8x32xf32>
    %60 = vector.extract_strided_slice %56 {offsets = [0, 96], sizes = [8, 32], strides = [1, 1]} : vector<8x128xf32> to vector<8x32xf32>
    %61 = math.tanh %47 : vector<8x128xf32>
    %cst_47 = arith.constant 5.000000e-01 : f32
    %62 = vector.broadcast %cst_47 : f32 to vector<8x128xf32>
    %63 = arith.mulf %62, %47 : vector<8x128xf32>
    %64 = math.tanh %63 : vector<8x128xf32>
    %cst_48 = arith.constant 1.000000e+00 : f32
    %65 = vector.broadcast %cst_48 : f32 to vector<8x128xf32>
    %66 = arith.addf %64, %65 : vector<8x128xf32>
    %cst_49 = arith.constant 5.000000e-01 : f32
    %67 = vector.broadcast %cst_49 : f32 to vector<8x128xf32>
    %68 = arith.mulf %67, %66 : vector<8x128xf32>
    %69 = arith.select %31, %61, %68 : vector<8x128xi1>, vector<8x128xf32>
    %70 = vector.extract_strided_slice %69 {offsets = [0, 0], sizes = [8, 32], strides = [1, 1]} : vector<8x128xf32> to vector<8x32xf32>
    %71 = vector.extract_strided_slice %69 {offsets = [0, 32], sizes = [8, 32], strides = [1, 1]} : vector<8x128xf32> to vector<8x32xf32>
    %72 = vector.extract_strided_slice %69 {offsets = [0, 64], sizes = [8, 32], strides = [1, 1]} : vector<8x128xf32> to vector<8x32xf32>
    %73 = vector.extract_strided_slice %69 {offsets = [0, 96], sizes = [8, 32], strides = [1, 1]} : vector<8x128xf32> to vector<8x32xf32>
    %c0_50 = arith.constant 0 : index
    %c0_51 = arith.constant 0 : index
    %74 = vector.load %arg15[%c0_50, %c0_51] : memref<8x32xf32, #tpu.memory_space<vmem>>, vector<8x32xf32>
    %75 = arith.mulf %58, %74 : vector<8x32xf32>
    %76 = arith.mulf %57, %59 : vector<8x32xf32>
    %77 = arith.addf %75, %76 : vector<8x32xf32>
    %c0_52 = arith.constant 0 : index
    %c0_53 = arith.constant 0 : index
    %78 = vector.load %arg17[%c0_52, %c0_53] : memref<8x32xf32, #tpu.memory_space<vmem>>, vector<8x32xf32>
    %79 = arith.mulf %71, %78 : vector<8x32xf32>
    %80 = arith.mulf %70, %72 : vector<8x32xf32>
    %81 = arith.addf %79, %80 : vector<8x32xf32>
    %c0_54 = arith.constant 0 : index
    %c0_55 = arith.constant 0 : index
    %82 = vector.load %arg15[%c0_54, %c0_55] : memref<8x32xf32, #tpu.memory_space<vmem>>, vector<8x32xf32>
    tpu.vector_store %arg15[%c0_54, %c0_55], %77 {strides = array<i32>} : memref<8x32xf32, #tpu.memory_space<vmem>>, vector<8x32xf32>,
    %c0_56 = arith.constant 0 : index
    %c0_57 = arith.constant 0 : index
    %83 = vector.load %arg17[%c0_56, %c0_57] : memref<8x32xf32, #tpu.memory_space<vmem>>, vector<8x32xf32>
    tpu.vector_store %arg17[%c0_56, %c0_57], %81 {strides = array<i32>} : memref<8x32xf32, #tpu.memory_space<vmem>>, vector<8x32xf32>,
    %84 = math.tanh %77 : vector<8x32xf32>
    %85 = arith.mulf %60, %84 : vector<8x32xf32>
    %c0_58 = arith.constant 0 : index
    %c0_59 = arith.constant 0 : index
    %86 = vector.load %arg14[%c0_58, %c0_59] : memref<8x32xf32, #tpu.memory_space<vmem>>, vector<8x32xf32>
    tpu.vector_store %arg14[%c0_58, %c0_59], %85 {strides = array<i32>} : memref<8x32xf32, #tpu.memory_space<vmem>>, vector<8x32xf32>,
    %87 = math.tanh %81 : vector<8x32xf32>
    %88 = arith.mulf %73, %87 : vector<8x32xf32>
    %c0_60 = arith.constant 0 : index
    %c0_61 = arith.constant 0 : index
    %89 = vector.load %arg16[%c0_60, %c0_61] : memref<8x32xf32, #tpu.memory_space<vmem>>, vector<8x32xf32>
    tpu.vector_store %arg16[%c0_60, %c0_61], %88 {strides = array<i32>} : memref<8x32xf32, #tpu.memory_space<vmem>>, vector<8x32xf32>,
    %c0_62 = arith.constant 0 : index
    %c0_63 = arith.constant 0 : index
    %90 = vector.load %arg14[%c0_62, %c0_63] : memref<8x32xf32, #tpu.memory_space<vmem>>, vector<8x32xf32>
    %c0_64 = arith.constant 0 : index
    %c0_65 = arith.constant 0 : index
    %91 = vector.load %arg16[%c0_64, %c0_65] : memref<8x32xf32, #tpu.memory_space<vmem>>, vector<8x32xf32>
    %c1 = arith.constant 1 : index
    %c0_66 = arith.constant 0 : index
    %c0_67 = arith.constant 0 : index
    %92 = vector.load %arg12[%c1, %c0_66, %c0_67] : memref<10x8x128xbf16, #tpu.memory_space<vmem>>, vector<1x8x128xbf16>
    %93 = vector.shape_cast %92 : vector<1x8x128xbf16> to vector<8x128xbf16>
    %94 = arith.extf %93 : vector<8x128xbf16> to vector<8x128xf32>
    %95 = arith.truncf %90 : vector<8x32xf32> to vector<8x32xbf16>
    %c0_68 = arith.constant 0 : index
    %c0_69 = arith.constant 0 : index
    %96 = vector.load %arg3[%c0_68, %c0_69] : memref<32x128xbf16, #tpu.memory_space<vmem>>, vector<32x128xbf16>
    %cst_70 = arith.constant dense<0.000000e+00> : vector<8x128xf32>
    %97 = tpu.matmul %95, %96, %cst_70 {dimension_numbers = #tpu.dot_dimension_numbers<[1], [0], [0], [1], [0, 0, 1, 1], [], []>} : vector<8x32xbf16>, vector<32x128xbf16>, vector<8x128xf32> -> vector<8x128xf32>
    %98 = arith.addf %94, %97 : vector<8x128xf32>
    %c8 = arith.constant 8 : index
    %c0_71 = arith.constant 0 : index
    %c0_72 = arith.constant 0 : index
    %99 = vector.load %arg13[%c8, %c0_71, %c0_72] : memref<10x8x128xbf16, #tpu.memory_space<vmem>>, vector<1x8x128xbf16>
    %100 = vector.shape_cast %99 : vector<1x8x128xbf16> to vector<8x128xbf16>
    %101 = arith.extf %100 : vector<8x128xbf16> to vector<8x128xf32>
    %102 = arith.truncf %91 : vector<8x32xf32> to vector<8x32xbf16>
    %c0_73 = arith.constant 0 : index
    %c0_74 = arith.constant 0 : index
    %103 = vector.load %arg6[%c0_73, %c0_74] : memref<32x128xbf16, #tpu.memory_space<vmem>>, vector<32x128xbf16>
    %cst_75 = arith.constant dense<0.000000e+00> : vector<8x128xf32>
    %104 = tpu.matmul %102, %103, %cst_75 {dimension_numbers = #tpu.dot_dimension_numbers<[1], [0], [0], [1], [0, 0, 1, 1], [], []>} : vector<8x32xbf16>, vector<32x128xbf16>, vector<8x128xf32> -> vector<8x128xf32>
    %105 = arith.addf %101, %104 : vector<8x128xf32>
    %106 = math.tanh %98 : vector<8x128xf32>
    %cst_76 = arith.constant 5.000000e-01 : f32
    %107 = vector.broadcast %cst_76 : f32 to vector<8x128xf32>
    %108 = arith.mulf %107, %98 : vector<8x128xf32>
    %109 = math.tanh %108 : vector<8x128xf32>
    %cst_77 = arith.constant 1.000000e+00 : f32
    %110 = vector.broadcast %cst_77 : f32 to vector<8x128xf32>
    %111 = arith.addf %109, %110 : vector<8x128xf32>
    %cst_78 = arith.constant 5.000000e-01 : f32
    %112 = vector.broadcast %cst_78 : f32 to vector<8x128xf32>
    %113 = arith.mulf %112, %111 : vector<8x128xf32>
    %114 = arith.select %31, %106, %113 : vector<8x128xi1>, vector<8x128xf32>
    %115 = vector.extract_strided_slice %114 {offsets = [0, 0], sizes = [8, 32], strides = [1, 1]} : vector<8x128xf32> to vector<8x32xf32>
    %116 = vector.extract_strided_slice %114 {offsets = [0, 32], sizes = [8, 32], strides = [1, 1]} : vector<8x128xf32> to vector<8x32xf32>
    %117 = vector.extract_strided_slice %114 {offsets = [0, 64], sizes = [8, 32], strides = [1, 1]} : vector<8x128xf32> to vector<8x32xf32>
    %118 = vector.extract_strided_slice %114 {offsets = [0, 96], sizes = [8, 32], strides = [1, 1]} : vector<8x128xf32> to vector<8x32xf32>
    %119 = math.tanh %105 : vector<8x128xf32>
    %cst_79 = arith.constant 5.000000e-01 : f32
    %120 = vector.broadcast %cst_79 : f32 to vector<8x128xf32>
    %121 = arith.mulf %120, %105 : vector<8x128xf32>
    %122 = math.tanh %121 : vector<8x128xf32>
    %cst_80 = arith.constant 1.000000e+00 : f32
    %123 = vector.broadcast %cst_80 : f32 to vector<8x128xf32>
    %124 = arith.addf %122, %123 : vector<8x128xf32>
    %cst_81 = arith.constant 5.000000e-01 : f32
    %125 = vector.broadcast %cst_81 : f32 to vector<8x128xf32>
    %126 = arith.mulf %125, %124 : vector<8x128xf32>
    %127 = arith.select %31, %119, %126 : vector<8x128xi1>, vector<8x128xf32>
    %128 = vector.extract_strided_slice %127 {offsets = [0, 0], sizes = [8, 32], strides = [1, 1]} : vector<8x128xf32> to vector<8x32xf32>
    %129 = vector.extract_strided_slice %127 {offsets = [0, 32], sizes = [8, 32], strides = [1, 1]} : vector<8x128xf32> to vector<8x32xf32>
    %130 = vector.extract_strided_slice %127 {offsets = [0, 64], sizes = [8, 32], strides = [1, 1]} : vector<8x128xf32> to vector<8x32xf32>
    %131 = vector.extract_strided_slice %127 {offsets = [0, 96], sizes = [8, 32], strides = [1, 1]} : vector<8x128xf32> to vector<8x32xf32>
    %c0_82 = arith.constant 0 : index
    %c0_83 = arith.constant 0 : index
    %132 = vector.load %arg15[%c0_82, %c0_83] : memref<8x32xf32, #tpu.memory_space<vmem>>, vector<8x32xf32>
    %133 = arith.mulf %116, %132 : vector<8x32xf32>
    %134 = arith.mulf %115, %117 : vector<8x32xf32>
    %135 = arith.addf %133, %134 : vector<8x32xf32>
    %c0_84 = arith.constant 0 : index
    %c0_85 = arith.constant 0 : index
    %136 = vector.load %arg17[%c0_84, %c0_85] : memref<8x32xf32, #tpu.memory_space<vmem>>, vector<8x32xf32>
    %137 = arith.mulf %129, %136 : vector<8x32xf32>
    %138 = arith.mulf %128, %130 : vector<8x32xf32>
    %139 = arith.addf %137, %138 : vector<8x32xf32>
    %c0_86 = arith.constant 0 : index
    %c0_87 = arith.constant 0 : index
    %140 = vector.load %arg15[%c0_86, %c0_87] : memref<8x32xf32, #tpu.memory_space<vmem>>, vector<8x32xf32>
    tpu.vector_store %arg15[%c0_86, %c0_87], %135 {strides = array<i32>} : memref<8x32xf32, #tpu.memory_space<vmem>>, vector<8x32xf32>,
    %c0_88 = arith.constant 0 : index
    %c0_89 = arith.constant 0 : index
    %141 = vector.load %arg17[%c0_88, %c0_89] : memref<8x32xf32, #tpu.memory_space<vmem>>, vector<8x32xf32>
    tpu.vector_store %arg17[%c0_88, %c0_89], %139 {strides = array<i32>} : memref<8x32xf32, #tpu.memory_space<vmem>>, vector<8x32xf32>,
    %142 = math.tanh %135 : vector<8x32xf32>
    %143 = arith.mulf %118, %142 : vector<8x32xf32>
    %c0_90 = arith.constant 0 : index
    %c0_91 = arith.constant 0 : index
    %144 = vector.load %arg14[%c0_90, %c0_91] : memref<8x32xf32, #tpu.memory_space<vmem>>, vector<8x32xf32>
    tpu.vector_store %arg14[%c0_90, %c0_91], %143 {strides = array<i32>} : memref<8x32xf32, #tpu.memory_space<vmem>>, vector<8x32xf32>,
    %145 = math.tanh %139 : vector<8x32xf32>
    %146 = arith.mulf %131, %145 : vector<8x32xf32>
    %c0_92 = arith.constant 0 : index
    %c0_93 = arith.constant 0 : index
    %147 = vector.load %arg16[%c0_92, %c0_93] : memref<8x32xf32, #tpu.memory_space<vmem>>, vector<8x32xf32>
    tpu.vector_store %arg16[%c0_92, %c0_93], %146 {strides = array<i32>} : memref<8x32xf32, #tpu.memory_space<vmem>>, vector<8x32xf32>,
    %c0_94 = arith.constant 0 : index
    %c0_95 = arith.constant 0 : index
    %148 = vector.load %arg14[%c0_94, %c0_95] : memref<8x32xf32, #tpu.memory_space<vmem>>, vector<8x32xf32>
    %c0_96 = arith.constant 0 : index
    %c0_97 = arith.constant 0 : index
    %149 = vector.load %arg16[%c0_96, %c0_97] : memref<8x32xf32, #tpu.memory_space<vmem>>, vector<8x32xf32>
    %c2 = arith.constant 2 : index
    %c0_98 = arith.constant 0 : index
    %c0_99 = arith.constant 0 : index
    %150 = vector.load %arg12[%c2, %c0_98, %c0_99] : memref<10x8x128xbf16, #tpu.memory_space<vmem>>, vector<1x8x128xbf16>
    %151 = vector.shape_cast %150 : vector<1x8x128xbf16> to vector<8x128xbf16>
    %152 = arith.extf %151 : vector<8x128xbf16> to vector<8x128xf32>
    %153 = arith.truncf %148 : vector<8x32xf32> to vector<8x32xbf16>
    %c0_100 = arith.constant 0 : index
    %c0_101 = arith.constant 0 : index
    %154 = vector.load %arg3[%c0_100, %c0_101] : memref<32x128xbf16, #tpu.memory_space<vmem>>, vector<32x128xbf16>
    %cst_102 = arith.constant dense<0.000000e+00> : vector<8x128xf32>
    %155 = tpu.matmul %153, %154, %cst_102 {dimension_numbers = #tpu.dot_dimension_numbers<[1], [0], [0], [1], [0, 0, 1, 1], [], []>} : vector<8x32xbf16>, vector<32x128xbf16>, vector<8x128xf32> -> vector<8x128xf32>
    %156 = arith.addf %152, %155 : vector<8x128xf32>
    %c7 = arith.constant 7 : index
    %c0_103 = arith.constant 0 : index
    %c0_104 = arith.constant 0 : index
    %157 = vector.load %arg13[%c7, %c0_103, %c0_104] : memref<10x8x128xbf16, #tpu.memory_space<vmem>>, vector<1x8x128xbf16>
    %158 = vector.shape_cast %157 : vector<1x8x128xbf16> to vector<8x128xbf16>
    %159 = arith.extf %158 : vector<8x128xbf16> to vector<8x128xf32>
    %160 = arith.truncf %149 : vector<8x32xf32> to vector<8x32xbf16>
    %c0_105 = arith.constant 0 : index
    %c0_106 = arith.constant 0 : index
    %161 = vector.load %arg6[%c0_105, %c0_106] : memref<32x128xbf16, #tpu.memory_space<vmem>>, vector<32x128xbf16>
    %cst_107 = arith.constant dense<0.000000e+00> : vector<8x128xf32>
    %162 = tpu.matmul %160, %161, %cst_107 {dimension_numbers = #tpu.dot_dimension_numbers<[1], [0], [0], [1], [0, 0, 1, 1], [], []>} : vector<8x32xbf16>, vector<32x128xbf16>, vector<8x128xf32> -> vector<8x128xf32>
    %163 = arith.addf %159, %162 : vector<8x128xf32>
    %164 = math.tanh %156 : vector<8x128xf32>
    %cst_108 = arith.constant 5.000000e-01 : f32
    %165 = vector.broadcast %cst_108 : f32 to vector<8x128xf32>
    %166 = arith.mulf %165, %156 : vector<8x128xf32>
    %167 = math.tanh %166 : vector<8x128xf32>
    %cst_109 = arith.constant 1.000000e+00 : f32
    %168 = vector.broadcast %cst_109 : f32 to vector<8x128xf32>
    %169 = arith.addf %167, %168 : vector<8x128xf32>
    %cst_110 = arith.constant 5.000000e-01 : f32
    %170 = vector.broadcast %cst_110 : f32 to vector<8x128xf32>
    %171 = arith.mulf %170, %169 : vector<8x128xf32>
    %172 = arith.select %31, %164, %171 : vector<8x128xi1>, vector<8x128xf32>
    %173 = vector.extract_strided_slice %172 {offsets = [0, 0], sizes = [8, 32], strides = [1, 1]} : vector<8x128xf32> to vector<8x32xf32>
    %174 = vector.extract_strided_slice %172 {offsets = [0, 32], sizes = [8, 32], strides = [1, 1]} : vector<8x128xf32> to vector<8x32xf32>
    %175 = vector.extract_strided_slice %172 {offsets = [0, 64], sizes = [8, 32], strides = [1, 1]} : vector<8x128xf32> to vector<8x32xf32>
    %176 = vector.extract_strided_slice %172 {offsets = [0, 96], sizes = [8, 32], strides = [1, 1]} : vector<8x128xf32> to vector<8x32xf32>
    %177 = math.tanh %163 : vector<8x128xf32>
    %cst_111 = arith.constant 5.000000e-01 : f32
    %178 = vector.broadcast %cst_111 : f32 to vector<8x128xf32>
    %179 = arith.mulf %178, %163 : vector<8x128xf32>
    %180 = math.tanh %179 : vector<8x128xf32>
    %cst_112 = arith.constant 1.000000e+00 : f32
    %181 = vector.broadcast %cst_112 : f32 to vector<8x128xf32>
    %182 = arith.addf %180, %181 : vector<8x128xf32>
    %cst_113 = arith.constant 5.000000e-01 : f32
    %183 = vector.broadcast %cst_113 : f32 to vector<8x128xf32>
    %184 = arith.mulf %183, %182 : vector<8x128xf32>
    %185 = arith.select %31, %177, %184 : vector<8x128xi1>, vector<8x128xf32>
    %186 = vector.extract_strided_slice %185 {offsets = [0, 0], sizes = [8, 32], strides = [1, 1]} : vector<8x128xf32> to vector<8x32xf32>
    %187 = vector.extract_strided_slice %185 {offsets = [0, 32], sizes = [8, 32], strides = [1, 1]} : vector<8x128xf32> to vector<8x32xf32>
    %188 = vector.extract_strided_slice %185 {offsets = [0, 64], sizes = [8, 32], strides = [1, 1]} : vector<8x128xf32> to vector<8x32xf32>
    %189 = vector.extract_strided_slice %185 {offsets = [0, 96], sizes = [8, 32], strides = [1, 1]} : vector<8x128xf32> to vector<8x32xf32>
    %c0_114 = arith.constant 0 : index
    %c0_115 = arith.constant 0 : index
    %190 = vector.load %arg15[%c0_114, %c0_115] : memref<8x32xf32, #tpu.memory_space<vmem>>, vector<8x32xf32>
    %191 = arith.mulf %174, %190 : vector<8x32xf32>
    %192 = arith.mulf %173, %175 : vector<8x32xf32>
    %193 = arith.addf %191, %192 : vector<8x32xf32>
    %c0_116 = arith.constant 0 : index
    %c0_117 = arith.constant 0 : index
    %194 = vector.load %arg17[%c0_116, %c0_117] : memref<8x32xf32, #tpu.memory_space<vmem>>, vector<8x32xf32>
    %195 = arith.mulf %187, %194 : vector<8x32xf32>
    %196 = arith.mulf %186, %188 : vector<8x32xf32>
    %197 = arith.addf %195, %196 : vector<8x32xf32>
    %c0_118 = arith.constant 0 : index
    %c0_119 = arith.constant 0 : index
    %198 = vector.load %arg15[%c0_118, %c0_119] : memref<8x32xf32, #tpu.memory_space<vmem>>, vector<8x32xf32>
    tpu.vector_store %arg15[%c0_118, %c0_119], %193 {strides = array<i32>} : memref<8x32xf32, #tpu.memory_space<vmem>>, vector<8x32xf32>,
    %c0_120 = arith.constant 0 : index
    %c0_121 = arith.constant 0 : index
    %199 = vector.load %arg17[%c0_120, %c0_121] : memref<8x32xf32, #tpu.memory_space<vmem>>, vector<8x32xf32>
    tpu.vector_store %arg17[%c0_120, %c0_121], %197 {strides = array<i32>} : memref<8x32xf32, #tpu.memory_space<vmem>>, vector<8x32xf32>,
    %200 = math.tanh %193 : vector<8x32xf32>
    %201 = arith.mulf %176, %200 : vector<8x32xf32>
    %c0_122 = arith.constant 0 : index
    %c0_123 = arith.constant 0 : index
    %202 = vector.load %arg14[%c0_122, %c0_123] : memref<8x32xf32, #tpu.memory_space<vmem>>, vector<8x32xf32>
    tpu.vector_store %arg14[%c0_122, %c0_123], %201 {strides = array<i32>} : memref<8x32xf32, #tpu.memory_space<vmem>>, vector<8x32xf32>,
    %203 = math.tanh %197 : vector<8x32xf32>
    %204 = arith.mulf %189, %203 : vector<8x32xf32>
    %c0_124 = arith.constant 0 : index
    %c0_125 = arith.constant 0 : index
    %205 = vector.load %arg16[%c0_124, %c0_125] : memref<8x32xf32, #tpu.memory_space<vmem>>, vector<8x32xf32>
    tpu.vector_store %arg16[%c0_124, %c0_125], %204 {strides = array<i32>} : memref<8x32xf32, #tpu.memory_space<vmem>>, vector<8x32xf32>,
    %c0_126 = arith.constant 0 : index
    %c0_127 = arith.constant 0 : index
    %206 = vector.load %arg14[%c0_126, %c0_127] : memref<8x32xf32, #tpu.memory_space<vmem>>, vector<8x32xf32>
    %c0_128 = arith.constant 0 : index
    %c0_129 = arith.constant 0 : index
    %207 = vector.load %arg16[%c0_128, %c0_129] : memref<8x32xf32, #tpu.memory_space<vmem>>, vector<8x32xf32>
    %c3 = arith.constant 3 : index
    %c0_130 = arith.constant 0 : index
    %c0_131 = arith.constant 0 : index
    %208 = vector.load %arg12[%c3, %c0_130, %c0_131] : memref<10x8x128xbf16, #tpu.memory_space<vmem>>, vector<1x8x128xbf16>
    %209 = vector.shape_cast %208 : vector<1x8x128xbf16> to vector<8x128xbf16>
    %210 = arith.extf %209 : vector<8x128xbf16> to vector<8x128xf32>
    %211 = arith.truncf %206 : vector<8x32xf32> to vector<8x32xbf16>
    %c0_132 = arith.constant 0 : index
    %c0_133 = arith.constant 0 : index
    %212 = vector.load %arg3[%c0_132, %c0_133] : memref<32x128xbf16, #tpu.memory_space<vmem>>, vector<32x128xbf16>
    %cst_134 = arith.constant dense<0.000000e+00> : vector<8x128xf32>
    %213 = tpu.matmul %211, %212, %cst_134 {dimension_numbers = #tpu.dot_dimension_numbers<[1], [0], [0], [1], [0, 0, 1, 1], [], []>} : vector<8x32xbf16>, vector<32x128xbf16>, vector<8x128xf32> -> vector<8x128xf32>
    %214 = arith.addf %210, %213 : vector<8x128xf32>
    %c6 = arith.constant 6 : index
    %c0_135 = arith.constant 0 : index
    %c0_136 = arith.constant 0 : index
    %215 = vector.load %arg13[%c6, %c0_135, %c0_136] : memref<10x8x128xbf16, #tpu.memory_space<vmem>>, vector<1x8x128xbf16>
    %216 = vector.shape_cast %215 : vector<1x8x128xbf16> to vector<8x128xbf16>
    %217 = arith.extf %216 : vector<8x128xbf16> to vector<8x128xf32>
    %218 = arith.truncf %207 : vector<8x32xf32> to vector<8x32xbf16>
    %c0_137 = arith.constant 0 : index
    %c0_138 = arith.constant 0 : index
    %219 = vector.load %arg6[%c0_137, %c0_138] : memref<32x128xbf16, #tpu.memory_space<vmem>>, vector<32x128xbf16>
    %cst_139 = arith.constant dense<0.000000e+00> : vector<8x128xf32>
    %220 = tpu.matmul %218, %219, %cst_139 {dimension_numbers = #tpu.dot_dimension_numbers<[1], [0], [0], [1], [0, 0, 1, 1], [], []>} : vector<8x32xbf16>, vector<32x128xbf16>, vector<8x128xf32> -> vector<8x128xf32>
    %221 = arith.addf %217, %220 : vector<8x128xf32>
    %222 = math.tanh %214 : vector<8x128xf32>
    %cst_140 = arith.constant 5.000000e-01 : f32
    %223 = vector.broadcast %cst_140 : f32 to vector<8x128xf32>
    %224 = arith.mulf %223, %214 : vector<8x128xf32>
    %225 = math.tanh %224 : vector<8x128xf32>
    %cst_141 = arith.constant 1.000000e+00 : f32
    %226 = vector.broadcast %cst_141 : f32 to vector<8x128xf32>
    %227 = arith.addf %225, %226 : vector<8x128xf32>
    %cst_142 = arith.constant 5.000000e-01 : f32
    %228 = vector.broadcast %cst_142 : f32 to vector<8x128xf32>
    %229 = arith.mulf %228, %227 : vector<8x128xf32>
    %230 = arith.select %31, %222, %229 : vector<8x128xi1>, vector<8x128xf32>
    %231 = vector.extract_strided_slice %230 {offsets = [0, 0], sizes = [8, 32], strides = [1, 1]} : vector<8x128xf32> to vector<8x32xf32>
    %232 = vector.extract_strided_slice %230 {offsets = [0, 32], sizes = [8, 32], strides = [1, 1]} : vector<8x128xf32> to vector<8x32xf32>
    %233 = vector.extract_strided_slice %230 {offsets = [0, 64], sizes = [8, 32], strides = [1, 1]} : vector<8x128xf32> to vector<8x32xf32>
    %234 = vector.extract_strided_slice %230 {offsets = [0, 96], sizes = [8, 32], strides = [1, 1]} : vector<8x128xf32> to vector<8x32xf32>
    %235 = math.tanh %221 : vector<8x128xf32>
    %cst_143 = arith.constant 5.000000e-01 : f32
    %236 = vector.broadcast %cst_143 : f32 to vector<8x128xf32>
    %237 = arith.mulf %236, %221 : vector<8x128xf32>
    %238 = math.tanh %237 : vector<8x128xf32>
    %cst_144 = arith.constant 1.000000e+00 : f32
    %239 = vector.broadcast %cst_144 : f32 to vector<8x128xf32>
    %240 = arith.addf %238, %239 : vector<8x128xf32>
    %cst_145 = arith.constant 5.000000e-01 : f32
    %241 = vector.broadcast %cst_145 : f32 to vector<8x128xf32>
    %242 = arith.mulf %241, %240 : vector<8x128xf32>
    %243 = arith.select %31, %235, %242 : vector<8x128xi1>, vector<8x128xf32>
    %244 = vector.extract_strided_slice %243 {offsets = [0, 0], sizes = [8, 32], strides = [1, 1]} : vector<8x128xf32> to vector<8x32xf32>
    %245 = vector.extract_strided_slice %243 {offsets = [0, 32], sizes = [8, 32], strides = [1, 1]} : vector<8x128xf32> to vector<8x32xf32>
    %246 = vector.extract_strided_slice %243 {offsets = [0, 64], sizes = [8, 32], strides = [1, 1]} : vector<8x128xf32> to vector<8x32xf32>
    %247 = vector.extract_strided_slice %243 {offsets = [0, 96], sizes = [8, 32], strides = [1, 1]} : vector<8x128xf32> to vector<8x32xf32>
    %c0_146 = arith.constant 0 : index
    %c0_147 = arith.constant 0 : index
    %248 = vector.load %arg15[%c0_146, %c0_147] : memref<8x32xf32, #tpu.memory_space<vmem>>, vector<8x32xf32>
    %249 = arith.mulf %232, %248 : vector<8x32xf32>
    %250 = arith.mulf %231, %233 : vector<8x32xf32>
    %251 = arith.addf %249, %250 : vector<8x32xf32>
    %c0_148 = arith.constant 0 : index
    %c0_149 = arith.constant 0 : index
    %252 = vector.load %arg17[%c0_148, %c0_149] : memref<8x32xf32, #tpu.memory_space<vmem>>, vector<8x32xf32>
    %253 = arith.mulf %245, %252 : vector<8x32xf32>
    %254 = arith.mulf %244, %246 : vector<8x32xf32>
    %255 = arith.addf %253, %254 : vector<8x32xf32>
    %c0_150 = arith.constant 0 : index
    %c0_151 = arith.constant 0 : index
    %256 = vector.load %arg15[%c0_150, %c0_151] : memref<8x32xf32, #tpu.memory_space<vmem>>, vector<8x32xf32>
    tpu.vector_store %arg15[%c0_150, %c0_151], %251 {strides = array<i32>} : memref<8x32xf32, #tpu.memory_space<vmem>>, vector<8x32xf32>,
    %c0_152 = arith.constant 0 : index
    %c0_153 = arith.constant 0 : index
    %257 = vector.load %arg17[%c0_152, %c0_153] : memref<8x32xf32, #tpu.memory_space<vmem>>, vector<8x32xf32>
    tpu.vector_store %arg17[%c0_152, %c0_153], %255 {strides = array<i32>} : memref<8x32xf32, #tpu.memory_space<vmem>>, vector<8x32xf32>,
    %258 = math.tanh %251 : vector<8x32xf32>
    %259 = arith.mulf %234, %258 : vector<8x32xf32>
    %c0_154 = arith.constant 0 : index
    %c0_155 = arith.constant 0 : index
    %260 = vector.load %arg14[%c0_154, %c0_155] : memref<8x32xf32, #tpu.memory_space<vmem>>, vector<8x32xf32>
    tpu.vector_store %arg14[%c0_154, %c0_155], %259 {strides = array<i32>} : memref<8x32xf32, #tpu.memory_space<vmem>>, vector<8x32xf32>,
    %261 = math.tanh %255 : vector<8x32xf32>
    %262 = arith.mulf %247, %261 : vector<8x32xf32>
    %c0_156 = arith.constant 0 : index
    %c0_157 = arith.constant 0 : index
    %263 = vector.load %arg16[%c0_156, %c0_157] : memref<8x32xf32, #tpu.memory_space<vmem>>, vector<8x32xf32>
    tpu.vector_store %arg16[%c0_156, %c0_157], %262 {strides = array<i32>} : memref<8x32xf32, #tpu.memory_space<vmem>>, vector<8x32xf32>,
    %c0_158 = arith.constant 0 : index
    %c0_159 = arith.constant 0 : index
    %264 = vector.load %arg14[%c0_158, %c0_159] : memref<8x32xf32, #tpu.memory_space<vmem>>, vector<8x32xf32>
    %c0_160 = arith.constant 0 : index
    %c0_161 = arith.constant 0 : index
    %265 = vector.load %arg16[%c0_160, %c0_161] : memref<8x32xf32, #tpu.memory_space<vmem>>, vector<8x32xf32>
    %c4 = arith.constant 4 : index
    %c0_162 = arith.constant 0 : index
    %c0_163 = arith.constant 0 : index
    %266 = vector.load %arg12[%c4, %c0_162, %c0_163] : memref<10x8x128xbf16, #tpu.memory_space<vmem>>, vector<1x8x128xbf16>
    %267 = vector.shape_cast %266 : vector<1x8x128xbf16> to vector<8x128xbf16>
    %268 = arith.extf %267 : vector<8x128xbf16> to vector<8x128xf32>
    %269 = arith.truncf %264 : vector<8x32xf32> to vector<8x32xbf16>
    %c0_164 = arith.constant 0 : index
    %c0_165 = arith.constant 0 : index
    %270 = vector.load %arg3[%c0_164, %c0_165] : memref<32x128xbf16, #tpu.memory_space<vmem>>, vector<32x128xbf16>
    %cst_166 = arith.constant dense<0.000000e+00> : vector<8x128xf32>
    %271 = tpu.matmul %269, %270, %cst_166 {dimension_numbers = #tpu.dot_dimension_numbers<[1], [0], [0], [1], [0, 0, 1, 1], [], []>} : vector<8x32xbf16>, vector<32x128xbf16>, vector<8x128xf32> -> vector<8x128xf32>
    %272 = arith.addf %268, %271 : vector<8x128xf32>
    %c5 = arith.constant 5 : index
    %c0_167 = arith.constant 0 : index
    %c0_168 = arith.constant 0 : index
    %273 = vector.load %arg13[%c5, %c0_167, %c0_168] : memref<10x8x128xbf16, #tpu.memory_space<vmem>>, vector<1x8x128xbf16>
    %274 = vector.shape_cast %273 : vector<1x8x128xbf16> to vector<8x128xbf16>
    %275 = arith.extf %274 : vector<8x128xbf16> to vector<8x128xf32>
    %276 = arith.truncf %265 : vector<8x32xf32> to vector<8x32xbf16>
    %c0_169 = arith.constant 0 : index
    %c0_170 = arith.constant 0 : index
    %277 = vector.load %arg6[%c0_169, %c0_170] : memref<32x128xbf16, #tpu.memory_space<vmem>>, vector<32x128xbf16>
    %cst_171 = arith.constant dense<0.000000e+00> : vector<8x128xf32>
    %278 = tpu.matmul %276, %277, %cst_171 {dimension_numbers = #tpu.dot_dimension_numbers<[1], [0], [0], [1], [0, 0, 1, 1], [], []>} : vector<8x32xbf16>, vector<32x128xbf16>, vector<8x128xf32> -> vector<8x128xf32>
    %279 = arith.addf %275, %278 : vector<8x128xf32>
    %280 = math.tanh %272 : vector<8x128xf32>
    %cst_172 = arith.constant 5.000000e-01 : f32
    %281 = vector.broadcast %cst_172 : f32 to vector<8x128xf32>
    %282 = arith.mulf %281, %272 : vector<8x128xf32>
    %283 = math.tanh %282 : vector<8x128xf32>
    %cst_173 = arith.constant 1.000000e+00 : f32
    %284 = vector.broadcast %cst_173 : f32 to vector<8x128xf32>
    %285 = arith.addf %283, %284 : vector<8x128xf32>
    %cst_174 = arith.constant 5.000000e-01 : f32
    %286 = vector.broadcast %cst_174 : f32 to vector<8x128xf32>
    %287 = arith.mulf %286, %285 : vector<8x128xf32>
    %288 = arith.select %31, %280, %287 : vector<8x128xi1>, vector<8x128xf32>
    %289 = vector.extract_strided_slice %288 {offsets = [0, 0], sizes = [8, 32], strides = [1, 1]} : vector<8x128xf32> to vector<8x32xf32>
    %290 = vector.extract_strided_slice %288 {offsets = [0, 32], sizes = [8, 32], strides = [1, 1]} : vector<8x128xf32> to vector<8x32xf32>
    %291 = vector.extract_strided_slice %288 {offsets = [0, 64], sizes = [8, 32], strides = [1, 1]} : vector<8x128xf32> to vector<8x32xf32>
    %292 = vector.extract_strided_slice %288 {offsets = [0, 96], sizes = [8, 32], strides = [1, 1]} : vector<8x128xf32> to vector<8x32xf32>
    %293 = math.tanh %279 : vector<8x128xf32>
    %cst_175 = arith.constant 5.000000e-01 : f32
    %294 = vector.broadcast %cst_175 : f32 to vector<8x128xf32>
    %295 = arith.mulf %294, %279 : vector<8x128xf32>
    %296 = math.tanh %295 : vector<8x128xf32>
    %cst_176 = arith.constant 1.000000e+00 : f32
    %297 = vector.broadcast %cst_176 : f32 to vector<8x128xf32>
    %298 = arith.addf %296, %297 : vector<8x128xf32>
    %cst_177 = arith.constant 5.000000e-01 : f32
    %299 = vector.broadcast %cst_177 : f32 to vector<8x128xf32>
    %300 = arith.mulf %299, %298 : vector<8x128xf32>
    %301 = arith.select %31, %293, %300 : vector<8x128xi1>, vector<8x128xf32>
    %302 = vector.extract_strided_slice %301 {offsets = [0, 0], sizes = [8, 32], strides = [1, 1]} : vector<8x128xf32> to vector<8x32xf32>
    %303 = vector.extract_strided_slice %301 {offsets = [0, 32], sizes = [8, 32], strides = [1, 1]} : vector<8x128xf32> to vector<8x32xf32>
    %304 = vector.extract_strided_slice %301 {offsets = [0, 64], sizes = [8, 32], strides = [1, 1]} : vector<8x128xf32> to vector<8x32xf32>
    %305 = vector.extract_strided_slice %301 {offsets = [0, 96], sizes = [8, 32], strides = [1, 1]} : vector<8x128xf32> to vector<8x32xf32>
    %c0_178 = arith.constant 0 : index
    %c0_179 = arith.constant 0 : index
    %306 = vector.load %arg15[%c0_178, %c0_179] : memref<8x32xf32, #tpu.memory_space<vmem>>, vector<8x32xf32>
    %307 = arith.mulf %290, %306 : vector<8x32xf32>
    %308 = arith.mulf %289, %291 : vector<8x32xf32>
    %309 = arith.addf %307, %308 : vector<8x32xf32>
    %c0_180 = arith.constant 0 : index
    %c0_181 = arith.constant 0 : index
    %310 = vector.load %arg17[%c0_180, %c0_181] : memref<8x32xf32, #tpu.memory_space<vmem>>, vector<8x32xf32>
    %311 = arith.mulf %303, %310 : vector<8x32xf32>
    %312 = arith.mulf %302, %304 : vector<8x32xf32>
    %313 = arith.addf %311, %312 : vector<8x32xf32>
    %c0_182 = arith.constant 0 : index
    %c0_183 = arith.constant 0 : index
    %314 = vector.load %arg15[%c0_182, %c0_183] : memref<8x32xf32, #tpu.memory_space<vmem>>, vector<8x32xf32>
    tpu.vector_store %arg15[%c0_182, %c0_183], %309 {strides = array<i32>} : memref<8x32xf32, #tpu.memory_space<vmem>>, vector<8x32xf32>,
    %c0_184 = arith.constant 0 : index
    %c0_185 = arith.constant 0 : index
    %315 = vector.load %arg17[%c0_184, %c0_185] : memref<8x32xf32, #tpu.memory_space<vmem>>, vector<8x32xf32>
    tpu.vector_store %arg17[%c0_184, %c0_185], %313 {strides = array<i32>} : memref<8x32xf32, #tpu.memory_space<vmem>>, vector<8x32xf32>,
    %316 = math.tanh %309 : vector<8x32xf32>
    %317 = arith.mulf %292, %316 : vector<8x32xf32>
    %c0_186 = arith.constant 0 : index
    %c0_187 = arith.constant 0 : index
    %318 = vector.load %arg14[%c0_186, %c0_187] : memref<8x32xf32, #tpu.memory_space<vmem>>, vector<8x32xf32>
    tpu.vector_store %arg14[%c0_186, %c0_187], %317 {strides = array<i32>} : memref<8x32xf32, #tpu.memory_space<vmem>>, vector<8x32xf32>,
    %319 = math.tanh %313 : vector<8x32xf32>
    %320 = arith.mulf %305, %319 : vector<8x32xf32>
    %c0_188 = arith.constant 0 : index
    %c0_189 = arith.constant 0 : index
    %321 = vector.load %arg16[%c0_188, %c0_189] : memref<8x32xf32, #tpu.memory_space<vmem>>, vector<8x32xf32>
    tpu.vector_store %arg16[%c0_188, %c0_189], %320 {strides = array<i32>} : memref<8x32xf32, #tpu.memory_space<vmem>>, vector<8x32xf32>,
    %c0_190 = arith.constant 0 : index
    %c0_191 = arith.constant 0 : index
    %322 = vector.load %arg14[%c0_190, %c0_191] : memref<8x32xf32, #tpu.memory_space<vmem>>, vector<8x32xf32>
    %c0_192 = arith.constant 0 : index
    %c0_193 = arith.constant 0 : index
    %323 = vector.load %arg16[%c0_192, %c0_193] : memref<8x32xf32, #tpu.memory_space<vmem>>, vector<8x32xf32>
    %c5_194 = arith.constant 5 : index
    %c0_195 = arith.constant 0 : index
    %c0_196 = arith.constant 0 : index
    %324 = vector.load %arg12[%c5_194, %c0_195, %c0_196] : memref<10x8x128xbf16, #tpu.memory_space<vmem>>, vector<1x8x128xbf16>
    %325 = vector.shape_cast %324 : vector<1x8x128xbf16> to vector<8x128xbf16>
    %326 = arith.extf %325 : vector<8x128xbf16> to vector<8x128xf32>
    %327 = arith.truncf %322 : vector<8x32xf32> to vector<8x32xbf16>
    %c0_197 = arith.constant 0 : index
    %c0_198 = arith.constant 0 : index
    %328 = vector.load %arg3[%c0_197, %c0_198] : memref<32x128xbf16, #tpu.memory_space<vmem>>, vector<32x128xbf16>
    %cst_199 = arith.constant dense<0.000000e+00> : vector<8x128xf32>
    %329 = tpu.matmul %327, %328, %cst_199 {dimension_numbers = #tpu.dot_dimension_numbers<[1], [0], [0], [1], [0, 0, 1, 1], [], []>} : vector<8x32xbf16>, vector<32x128xbf16>, vector<8x128xf32> -> vector<8x128xf32>
    %330 = arith.addf %326, %329 : vector<8x128xf32>
    %c4_200 = arith.constant 4 : index
    %c0_201 = arith.constant 0 : index
    %c0_202 = arith.constant 0 : index
    %331 = vector.load %arg13[%c4_200, %c0_201, %c0_202] : memref<10x8x128xbf16, #tpu.memory_space<vmem>>, vector<1x8x128xbf16>
    %332 = vector.shape_cast %331 : vector<1x8x128xbf16> to vector<8x128xbf16>
    %333 = arith.extf %332 : vector<8x128xbf16> to vector<8x128xf32>
    %334 = arith.truncf %323 : vector<8x32xf32> to vector<8x32xbf16>
    %c0_203 = arith.constant 0 : index
    %c0_204 = arith.constant 0 : index
    %335 = vector.load %arg6[%c0_203, %c0_204] : memref<32x128xbf16, #tpu.memory_space<vmem>>, vector<32x128xbf16>
    %cst_205 = arith.constant dense<0.000000e+00> : vector<8x128xf32>
    %336 = tpu.matmul %334, %335, %cst_205 {dimension_numbers = #tpu.dot_dimension_numbers<[1], [0], [0], [1], [0, 0, 1, 1], [], []>} : vector<8x32xbf16>, vector<32x128xbf16>, vector<8x128xf32> -> vector<8x128xf32>
    %337 = arith.addf %333, %336 : vector<8x128xf32>
    %338 = math.tanh %330 : vector<8x128xf32>
    %cst_206 = arith.constant 5.000000e-01 : f32
    %339 = vector.broadcast %cst_206 : f32 to vector<8x128xf32>
    %340 = arith.mulf %339, %330 : vector<8x128xf32>
    %341 = math.tanh %340 : vector<8x128xf32>
    %cst_207 = arith.constant 1.000000e+00 : f32
    %342 = vector.broadcast %cst_207 : f32 to vector<8x128xf32>
    %343 = arith.addf %341, %342 : vector<8x128xf32>
    %cst_208 = arith.constant 5.000000e-01 : f32
    %344 = vector.broadcast %cst_208 : f32 to vector<8x128xf32>
    %345 = arith.mulf %344, %343 : vector<8x128xf32>
    %346 = arith.select %31, %338, %345 : vector<8x128xi1>, vector<8x128xf32>
    %347 = vector.extract_strided_slice %346 {offsets = [0, 0], sizes = [8, 32], strides = [1, 1]} : vector<8x128xf32> to vector<8x32xf32>
    %348 = vector.extract_strided_slice %346 {offsets = [0, 32], sizes = [8, 32], strides = [1, 1]} : vector<8x128xf32> to vector<8x32xf32>
    %349 = vector.extract_strided_slice %346 {offsets = [0, 64], sizes = [8, 32], strides = [1, 1]} : vector<8x128xf32> to vector<8x32xf32>
    %350 = vector.extract_strided_slice %346 {offsets = [0, 96], sizes = [8, 32], strides = [1, 1]} : vector<8x128xf32> to vector<8x32xf32>
    %351 = math.tanh %337 : vector<8x128xf32>
    %cst_209 = arith.constant 5.000000e-01 : f32
    %352 = vector.broadcast %cst_209 : f32 to vector<8x128xf32>
    %353 = arith.mulf %352, %337 : vector<8x128xf32>
    %354 = math.tanh %353 : vector<8x128xf32>
    %cst_210 = arith.constant 1.000000e+00 : f32
    %355 = vector.broadcast %cst_210 : f32 to vector<8x128xf32>
    %356 = arith.addf %354, %355 : vector<8x128xf32>
    %cst_211 = arith.constant 5.000000e-01 : f32
    %357 = vector.broadcast %cst_211 : f32 to vector<8x128xf32>
    %358 = arith.mulf %357, %356 : vector<8x128xf32>
    %359 = arith.select %31, %351, %358 : vector<8x128xi1>, vector<8x128xf32>
    %360 = vector.extract_strided_slice %359 {offsets = [0, 0], sizes = [8, 32], strides = [1, 1]} : vector<8x128xf32> to vector<8x32xf32>
    %361 = vector.extract_strided_slice %359 {offsets = [0, 32], sizes = [8, 32], strides = [1, 1]} : vector<8x128xf32> to vector<8x32xf32>
    %362 = vector.extract_strided_slice %359 {offsets = [0, 64], sizes = [8, 32], strides = [1, 1]} : vector<8x128xf32> to vector<8x32xf32>
    %363 = vector.extract_strided_slice %359 {offsets = [0, 96], sizes = [8, 32], strides = [1, 1]} : vector<8x128xf32> to vector<8x32xf32>
    %c0_212 = arith.constant 0 : index
    %c0_213 = arith.constant 0 : index
    %364 = vector.load %arg15[%c0_212, %c0_213] : memref<8x32xf32, #tpu.memory_space<vmem>>, vector<8x32xf32>
    %365 = arith.mulf %348, %364 : vector<8x32xf32>
    %366 = arith.mulf %347, %349 : vector<8x32xf32>
    %367 = arith.addf %365, %366 : vector<8x32xf32>
    %c0_214 = arith.constant 0 : index
    %c0_215 = arith.constant 0 : index
    %368 = vector.load %arg17[%c0_214, %c0_215] : memref<8x32xf32, #tpu.memory_space<vmem>>, vector<8x32xf32>
    %369 = arith.mulf %361, %368 : vector<8x32xf32>
    %370 = arith.mulf %360, %362 : vector<8x32xf32>
    %371 = arith.addf %369, %370 : vector<8x32xf32>
    %c0_216 = arith.constant 0 : index
    %c0_217 = arith.constant 0 : index
    %372 = vector.load %arg15[%c0_216, %c0_217] : memref<8x32xf32, #tpu.memory_space<vmem>>, vector<8x32xf32>
    tpu.vector_store %arg15[%c0_216, %c0_217], %367 {strides = array<i32>} : memref<8x32xf32, #tpu.memory_space<vmem>>, vector<8x32xf32>,
    %c0_218 = arith.constant 0 : index
    %c0_219 = arith.constant 0 : index
    %373 = vector.load %arg17[%c0_218, %c0_219] : memref<8x32xf32, #tpu.memory_space<vmem>>, vector<8x32xf32>
    tpu.vector_store %arg17[%c0_218, %c0_219], %371 {strides = array<i32>} : memref<8x32xf32, #tpu.memory_space<vmem>>, vector<8x32xf32>,
    %374 = math.tanh %367 : vector<8x32xf32>
    %375 = arith.mulf %350, %374 : vector<8x32xf32>
    %c0_220 = arith.constant 0 : index
    %c0_221 = arith.constant 0 : index
    %376 = vector.load %arg14[%c0_220, %c0_221] : memref<8x32xf32, #tpu.memory_space<vmem>>, vector<8x32xf32>
    tpu.vector_store %arg14[%c0_220, %c0_221], %375 {strides = array<i32>} : memref<8x32xf32, #tpu.memory_space<vmem>>, vector<8x32xf32>,
    %377 = math.tanh %371 : vector<8x32xf32>
    %378 = arith.mulf %363, %377 : vector<8x32xf32>
    %c0_222 = arith.constant 0 : index
    %c0_223 = arith.constant 0 : index
    %379 = vector.load %arg16[%c0_222, %c0_223] : memref<8x32xf32, #tpu.memory_space<vmem>>, vector<8x32xf32>
    tpu.vector_store %arg16[%c0_222, %c0_223], %378 {strides = array<i32>} : memref<8x32xf32, #tpu.memory_space<vmem>>, vector<8x32xf32>,
    %c0_224 = arith.constant 0 : index
    %c0_225 = arith.constant 0 : index
    %380 = vector.load %arg14[%c0_224, %c0_225] : memref<8x32xf32, #tpu.memory_space<vmem>>, vector<8x32xf32>
    %c0_226 = arith.constant 0 : index
    %c0_227 = arith.constant 0 : index
    %381 = vector.load %arg16[%c0_226, %c0_227] : memref<8x32xf32, #tpu.memory_space<vmem>>, vector<8x32xf32>
    %c6_228 = arith.constant 6 : index
    %c0_229 = arith.constant 0 : index
    %c0_230 = arith.constant 0 : index
    %382 = vector.load %arg12[%c6_228, %c0_229, %c0_230] : memref<10x8x128xbf16, #tpu.memory_space<vmem>>, vector<1x8x128xbf16>
    %383 = vector.shape_cast %382 : vector<1x8x128xbf16> to vector<8x128xbf16>
    %384 = arith.extf %383 : vector<8x128xbf16> to vector<8x128xf32>
    %385 = arith.truncf %380 : vector<8x32xf32> to vector<8x32xbf16>
    %c0_231 = arith.constant 0 : index
    %c0_232 = arith.constant 0 : index
    %386 = vector.load %arg3[%c0_231, %c0_232] : memref<32x128xbf16, #tpu.memory_space<vmem>>, vector<32x128xbf16>
    %cst_233 = arith.constant dense<0.000000e+00> : vector<8x128xf32>
    %387 = tpu.matmul %385, %386, %cst_233 {dimension_numbers = #tpu.dot_dimension_numbers<[1], [0], [0], [1], [0, 0, 1, 1], [], []>} : vector<8x32xbf16>, vector<32x128xbf16>, vector<8x128xf32> -> vector<8x128xf32>
    %388 = arith.addf %384, %387 : vector<8x128xf32>
    %c3_234 = arith.constant 3 : index
    %c0_235 = arith.constant 0 : index
    %c0_236 = arith.constant 0 : index
    %389 = vector.load %arg13[%c3_234, %c0_235, %c0_236] : memref<10x8x128xbf16, #tpu.memory_space<vmem>>, vector<1x8x128xbf16>
    %390 = vector.shape_cast %389 : vector<1x8x128xbf16> to vector<8x128xbf16>
    %391 = arith.extf %390 : vector<8x128xbf16> to vector<8x128xf32>
    %392 = arith.truncf %381 : vector<8x32xf32> to vector<8x32xbf16>
    %c0_237 = arith.constant 0 : index
    %c0_238 = arith.constant 0 : index
    %393 = vector.load %arg6[%c0_237, %c0_238] : memref<32x128xbf16, #tpu.memory_space<vmem>>, vector<32x128xbf16>
    %cst_239 = arith.constant dense<0.000000e+00> : vector<8x128xf32>
    %394 = tpu.matmul %392, %393, %cst_239 {dimension_numbers = #tpu.dot_dimension_numbers<[1], [0], [0], [1], [0, 0, 1, 1], [], []>} : vector<8x32xbf16>, vector<32x128xbf16>, vector<8x128xf32> -> vector<8x128xf32>
    %395 = arith.addf %391, %394 : vector<8x128xf32>
    %396 = math.tanh %388 : vector<8x128xf32>
    %cst_240 = arith.constant 5.000000e-01 : f32
    %397 = vector.broadcast %cst_240 : f32 to vector<8x128xf32>
    %398 = arith.mulf %397, %388 : vector<8x128xf32>
    %399 = math.tanh %398 : vector<8x128xf32>
    %cst_241 = arith.constant 1.000000e+00 : f32
    %400 = vector.broadcast %cst_241 : f32 to vector<8x128xf32>
    %401 = arith.addf %399, %400 : vector<8x128xf32>
    %cst_242 = arith.constant 5.000000e-01 : f32
    %402 = vector.broadcast %cst_242 : f32 to vector<8x128xf32>
    %403 = arith.mulf %402, %401 : vector<8x128xf32>
    %404 = arith.select %31, %396, %403 : vector<8x128xi1>, vector<8x128xf32>
    %405 = vector.extract_strided_slice %404 {offsets = [0, 0], sizes = [8, 32], strides = [1, 1]} : vector<8x128xf32> to vector<8x32xf32>
    %406 = vector.extract_strided_slice %404 {offsets = [0, 32], sizes = [8, 32], strides = [1, 1]} : vector<8x128xf32> to vector<8x32xf32>
    %407 = vector.extract_strided_slice %404 {offsets = [0, 64], sizes = [8, 32], strides = [1, 1]} : vector<8x128xf32> to vector<8x32xf32>
    %408 = vector.extract_strided_slice %404 {offsets = [0, 96], sizes = [8, 32], strides = [1, 1]} : vector<8x128xf32> to vector<8x32xf32>
    %409 = math.tanh %395 : vector<8x128xf32>
    %cst_243 = arith.constant 5.000000e-01 : f32
    %410 = vector.broadcast %cst_243 : f32 to vector<8x128xf32>
    %411 = arith.mulf %410, %395 : vector<8x128xf32>
    %412 = math.tanh %411 : vector<8x128xf32>
    %cst_244 = arith.constant 1.000000e+00 : f32
    %413 = vector.broadcast %cst_244 : f32 to vector<8x128xf32>
    %414 = arith.addf %412, %413 : vector<8x128xf32>
    %cst_245 = arith.constant 5.000000e-01 : f32
    %415 = vector.broadcast %cst_245 : f32 to vector<8x128xf32>
    %416 = arith.mulf %415, %414 : vector<8x128xf32>
    %417 = arith.select %31, %409, %416 : vector<8x128xi1>, vector<8x128xf32>
    %418 = vector.extract_strided_slice %417 {offsets = [0, 0], sizes = [8, 32], strides = [1, 1]} : vector<8x128xf32> to vector<8x32xf32>
    %419 = vector.extract_strided_slice %417 {offsets = [0, 32], sizes = [8, 32], strides = [1, 1]} : vector<8x128xf32> to vector<8x32xf32>
    %420 = vector.extract_strided_slice %417 {offsets = [0, 64], sizes = [8, 32], strides = [1, 1]} : vector<8x128xf32> to vector<8x32xf32>
    %421 = vector.extract_strided_slice %417 {offsets = [0, 96], sizes = [8, 32], strides = [1, 1]} : vector<8x128xf32> to vector<8x32xf32>
    %c0_246 = arith.constant 0 : index
    %c0_247 = arith.constant 0 : index
    %422 = vector.load %arg15[%c0_246, %c0_247] : memref<8x32xf32, #tpu.memory_space<vmem>>, vector<8x32xf32>
    %423 = arith.mulf %406, %422 : vector<8x32xf32>
    %424 = arith.mulf %405, %407 : vector<8x32xf32>
    %425 = arith.addf %423, %424 : vector<8x32xf32>
    %c0_248 = arith.constant 0 : index
    %c0_249 = arith.constant 0 : index
    %426 = vector.load %arg17[%c0_248, %c0_249] : memref<8x32xf32, #tpu.memory_space<vmem>>, vector<8x32xf32>
    %427 = arith.mulf %419, %426 : vector<8x32xf32>
    %428 = arith.mulf %418, %420 : vector<8x32xf32>
    %429 = arith.addf %427, %428 : vector<8x32xf32>
    %c0_250 = arith.constant 0 : index
    %c0_251 = arith.constant 0 : index
    %430 = vector.load %arg15[%c0_250, %c0_251] : memref<8x32xf32, #tpu.memory_space<vmem>>, vector<8x32xf32>
    tpu.vector_store %arg15[%c0_250, %c0_251], %425 {strides = array<i32>} : memref<8x32xf32, #tpu.memory_space<vmem>>, vector<8x32xf32>,
    %c0_252 = arith.constant 0 : index
    %c0_253 = arith.constant 0 : index
    %431 = vector.load %arg17[%c0_252, %c0_253] : memref<8x32xf32, #tpu.memory_space<vmem>>, vector<8x32xf32>
    tpu.vector_store %arg17[%c0_252, %c0_253], %429 {strides = array<i32>} : memref<8x32xf32, #tpu.memory_space<vmem>>, vector<8x32xf32>,
    %432 = math.tanh %425 : vector<8x32xf32>
    %433 = arith.mulf %408, %432 : vector<8x32xf32>
    %c0_254 = arith.constant 0 : index
    %c0_255 = arith.constant 0 : index
    %434 = vector.load %arg14[%c0_254, %c0_255] : memref<8x32xf32, #tpu.memory_space<vmem>>, vector<8x32xf32>
    tpu.vector_store %arg14[%c0_254, %c0_255], %433 {strides = array<i32>} : memref<8x32xf32, #tpu.memory_space<vmem>>, vector<8x32xf32>,
    %435 = math.tanh %429 : vector<8x32xf32>
    %436 = arith.mulf %421, %435 : vector<8x32xf32>
    %c0_256 = arith.constant 0 : index
    %c0_257 = arith.constant 0 : index
    %437 = vector.load %arg16[%c0_256, %c0_257] : memref<8x32xf32, #tpu.memory_space<vmem>>, vector<8x32xf32>
    tpu.vector_store %arg16[%c0_256, %c0_257], %436 {strides = array<i32>} : memref<8x32xf32, #tpu.memory_space<vmem>>, vector<8x32xf32>,
    %c0_258 = arith.constant 0 : index
    %c0_259 = arith.constant 0 : index
    %438 = vector.load %arg14[%c0_258, %c0_259] : memref<8x32xf32, #tpu.memory_space<vmem>>, vector<8x32xf32>
    %c0_260 = arith.constant 0 : index
    %c0_261 = arith.constant 0 : index
    %439 = vector.load %arg16[%c0_260, %c0_261] : memref<8x32xf32, #tpu.memory_space<vmem>>, vector<8x32xf32>
    %c7_262 = arith.constant 7 : index
    %c0_263 = arith.constant 0 : index
    %c0_264 = arith.constant 0 : index
    %440 = vector.load %arg12[%c7_262, %c0_263, %c0_264] : memref<10x8x128xbf16, #tpu.memory_space<vmem>>, vector<1x8x128xbf16>
    %441 = vector.shape_cast %440 : vector<1x8x128xbf16> to vector<8x128xbf16>
    %442 = arith.extf %441 : vector<8x128xbf16> to vector<8x128xf32>
    %443 = arith.truncf %438 : vector<8x32xf32> to vector<8x32xbf16>
    %c0_265 = arith.constant 0 : index
    %c0_266 = arith.constant 0 : index
    %444 = vector.load %arg3[%c0_265, %c0_266] : memref<32x128xbf16, #tpu.memory_space<vmem>>, vector<32x128xbf16>
    %cst_267 = arith.constant dense<0.000000e+00> : vector<8x128xf32>
    %445 = tpu.matmul %443, %444, %cst_267 {dimension_numbers = #tpu.dot_dimension_numbers<[1], [0], [0], [1], [0, 0, 1, 1], [], []>} : vector<8x32xbf16>, vector<32x128xbf16>, vector<8x128xf32> -> vector<8x128xf32>
    %446 = arith.addf %442, %445 : vector<8x128xf32>
    %c2_268 = arith.constant 2 : index
    %c0_269 = arith.constant 0 : index
    %c0_270 = arith.constant 0 : index
    %447 = vector.load %arg13[%c2_268, %c0_269, %c0_270] : memref<10x8x128xbf16, #tpu.memory_space<vmem>>, vector<1x8x128xbf16>
    %448 = vector.shape_cast %447 : vector<1x8x128xbf16> to vector<8x128xbf16>
    %449 = arith.extf %448 : vector<8x128xbf16> to vector<8x128xf32>
    %450 = arith.truncf %439 : vector<8x32xf32> to vector<8x32xbf16>
    %c0_271 = arith.constant 0 : index
    %c0_272 = arith.constant 0 : index
    %451 = vector.load %arg6[%c0_271, %c0_272] : memref<32x128xbf16, #tpu.memory_space<vmem>>, vector<32x128xbf16>
    %cst_273 = arith.constant dense<0.000000e+00> : vector<8x128xf32>
    %452 = tpu.matmul %450, %451, %cst_273 {dimension_numbers = #tpu.dot_dimension_numbers<[1], [0], [0], [1], [0, 0, 1, 1], [], []>} : vector<8x32xbf16>, vector<32x128xbf16>, vector<8x128xf32> -> vector<8x128xf32>
    %453 = arith.addf %449, %452 : vector<8x128xf32>
    %454 = math.tanh %446 : vector<8x128xf32>
    %cst_274 = arith.constant 5.000000e-01 : f32
    %455 = vector.broadcast %cst_274 : f32 to vector<8x128xf32>
    %456 = arith.mulf %455, %446 : vector<8x128xf32>
    %457 = math.tanh %456 : vector<8x128xf32>
    %cst_275 = arith.constant 1.000000e+00 : f32
    %458 = vector.broadcast %cst_275 : f32 to vector<8x128xf32>
    %459 = arith.addf %457, %458 : vector<8x128xf32>
    %cst_276 = arith.constant 5.000000e-01 : f32
    %460 = vector.broadcast %cst_276 : f32 to vector<8x128xf32>
    %461 = arith.mulf %460, %459 : vector<8x128xf32>
    %462 = arith.select %31, %454, %461 : vector<8x128xi1>, vector<8x128xf32>
    %463 = vector.extract_strided_slice %462 {offsets = [0, 0], sizes = [8, 32], strides = [1, 1]} : vector<8x128xf32> to vector<8x32xf32>
    %464 = vector.extract_strided_slice %462 {offsets = [0, 32], sizes = [8, 32], strides = [1, 1]} : vector<8x128xf32> to vector<8x32xf32>
    %465 = vector.extract_strided_slice %462 {offsets = [0, 64], sizes = [8, 32], strides = [1, 1]} : vector<8x128xf32> to vector<8x32xf32>
    %466 = vector.extract_strided_slice %462 {offsets = [0, 96], sizes = [8, 32], strides = [1, 1]} : vector<8x128xf32> to vector<8x32xf32>
    %467 = math.tanh %453 : vector<8x128xf32>
    %cst_277 = arith.constant 5.000000e-01 : f32
    %468 = vector.broadcast %cst_277 : f32 to vector<8x128xf32>
    %469 = arith.mulf %468, %453 : vector<8x128xf32>
    %470 = math.tanh %469 : vector<8x128xf32>
    %cst_278 = arith.constant 1.000000e+00 : f32
    %471 = vector.broadcast %cst_278 : f32 to vector<8x128xf32>
    %472 = arith.addf %470, %471 : vector<8x128xf32>
    %cst_279 = arith.constant 5.000000e-01 : f32
    %473 = vector.broadcast %cst_279 : f32 to vector<8x128xf32>
    %474 = arith.mulf %473, %472 : vector<8x128xf32>
    %475 = arith.select %31, %467, %474 : vector<8x128xi1>, vector<8x128xf32>
    %476 = vector.extract_strided_slice %475 {offsets = [0, 0], sizes = [8, 32], strides = [1, 1]} : vector<8x128xf32> to vector<8x32xf32>
    %477 = vector.extract_strided_slice %475 {offsets = [0, 32], sizes = [8, 32], strides = [1, 1]} : vector<8x128xf32> to vector<8x32xf32>
    %478 = vector.extract_strided_slice %475 {offsets = [0, 64], sizes = [8, 32], strides = [1, 1]} : vector<8x128xf32> to vector<8x32xf32>
    %479 = vector.extract_strided_slice %475 {offsets = [0, 96], sizes = [8, 32], strides = [1, 1]} : vector<8x128xf32> to vector<8x32xf32>
    %c0_280 = arith.constant 0 : index
    %c0_281 = arith.constant 0 : index
    %480 = vector.load %arg15[%c0_280, %c0_281] : memref<8x32xf32, #tpu.memory_space<vmem>>, vector<8x32xf32>
    %481 = arith.mulf %464, %480 : vector<8x32xf32>
    %482 = arith.mulf %463, %465 : vector<8x32xf32>
    %483 = arith.addf %481, %482 : vector<8x32xf32>
    %c0_282 = arith.constant 0 : index
    %c0_283 = arith.constant 0 : index
    %484 = vector.load %arg17[%c0_282, %c0_283] : memref<8x32xf32, #tpu.memory_space<vmem>>, vector<8x32xf32>
    %485 = arith.mulf %477, %484 : vector<8x32xf32>
    %486 = arith.mulf %476, %478 : vector<8x32xf32>
    %487 = arith.addf %485, %486 : vector<8x32xf32>
    %c0_284 = arith.constant 0 : index
    %c0_285 = arith.constant 0 : index
    %488 = vector.load %arg15[%c0_284, %c0_285] : memref<8x32xf32, #tpu.memory_space<vmem>>, vector<8x32xf32>
    tpu.vector_store %arg15[%c0_284, %c0_285], %483 {strides = array<i32>} : memref<8x32xf32, #tpu.memory_space<vmem>>, vector<8x32xf32>,
    %c0_286 = arith.constant 0 : index
    %c0_287 = arith.constant 0 : index
    %489 = vector.load %arg17[%c0_286, %c0_287] : memref<8x32xf32, #tpu.memory_space<vmem>>, vector<8x32xf32>
    tpu.vector_store %arg17[%c0_286, %c0_287], %487 {strides = array<i32>} : memref<8x32xf32, #tpu.memory_space<vmem>>, vector<8x32xf32>,
    %490 = math.tanh %483 : vector<8x32xf32>
    %491 = arith.mulf %466, %490 : vector<8x32xf32>
    %c0_288 = arith.constant 0 : index
    %c0_289 = arith.constant 0 : index
    %492 = vector.load %arg14[%c0_288, %c0_289] : memref<8x32xf32, #tpu.memory_space<vmem>>, vector<8x32xf32>
    tpu.vector_store %arg14[%c0_288, %c0_289], %491 {strides = array<i32>} : memref<8x32xf32, #tpu.memory_space<vmem>>, vector<8x32xf32>,
    %493 = math.tanh %487 : vector<8x32xf32>
    %494 = arith.mulf %479, %493 : vector<8x32xf32>
    %c0_290 = arith.constant 0 : index
    %c0_291 = arith.constant 0 : index
    %495 = vector.load %arg16[%c0_290, %c0_291] : memref<8x32xf32, #tpu.memory_space<vmem>>, vector<8x32xf32>
    tpu.vector_store %arg16[%c0_290, %c0_291], %494 {strides = array<i32>} : memref<8x32xf32, #tpu.memory_space<vmem>>, vector<8x32xf32>,
    %c0_292 = arith.constant 0 : index
    %c0_293 = arith.constant 0 : index
    %496 = vector.load %arg14[%c0_292, %c0_293] : memref<8x32xf32, #tpu.memory_space<vmem>>, vector<8x32xf32>
    %c0_294 = arith.constant 0 : index
    %c0_295 = arith.constant 0 : index
    %497 = vector.load %arg16[%c0_294, %c0_295] : memref<8x32xf32, #tpu.memory_space<vmem>>, vector<8x32xf32>
    %c8_296 = arith.constant 8 : index
    %c0_297 = arith.constant 0 : index
    %c0_298 = arith.constant 0 : index
    %498 = vector.load %arg12[%c8_296, %c0_297, %c0_298] : memref<10x8x128xbf16, #tpu.memory_space<vmem>>, vector<1x8x128xbf16>
    %499 = vector.shape_cast %498 : vector<1x8x128xbf16> to vector<8x128xbf16>
    %500 = arith.extf %499 : vector<8x128xbf16> to vector<8x128xf32>
    %501 = arith.truncf %496 : vector<8x32xf32> to vector<8x32xbf16>
    %c0_299 = arith.constant 0 : index
    %c0_300 = arith.constant 0 : index
    %502 = vector.load %arg3[%c0_299, %c0_300] : memref<32x128xbf16, #tpu.memory_space<vmem>>, vector<32x128xbf16>
    %cst_301 = arith.constant dense<0.000000e+00> : vector<8x128xf32>
    %503 = tpu.matmul %501, %502, %cst_301 {dimension_numbers = #tpu.dot_dimension_numbers<[1], [0], [0], [1], [0, 0, 1, 1], [], []>} : vector<8x32xbf16>, vector<32x128xbf16>, vector<8x128xf32> -> vector<8x128xf32>
    %504 = arith.addf %500, %503 : vector<8x128xf32>
    %c1_302 = arith.constant 1 : index
    %c0_303 = arith.constant 0 : index
    %c0_304 = arith.constant 0 : index
    %505 = vector.load %arg13[%c1_302, %c0_303, %c0_304] : memref<10x8x128xbf16, #tpu.memory_space<vmem>>, vector<1x8x128xbf16>
    %506 = vector.shape_cast %505 : vector<1x8x128xbf16> to vector<8x128xbf16>
    %507 = arith.extf %506 : vector<8x128xbf16> to vector<8x128xf32>
    %508 = arith.truncf %497 : vector<8x32xf32> to vector<8x32xbf16>
    %c0_305 = arith.constant 0 : index
    %c0_306 = arith.constant 0 : index
    %509 = vector.load %arg6[%c0_305, %c0_306] : memref<32x128xbf16, #tpu.memory_space<vmem>>, vector<32x128xbf16>
    %cst_307 = arith.constant dense<0.000000e+00> : vector<8x128xf32>
    %510 = tpu.matmul %508, %509, %cst_307 {dimension_numbers = #tpu.dot_dimension_numbers<[1], [0], [0], [1], [0, 0, 1, 1], [], []>} : vector<8x32xbf16>, vector<32x128xbf16>, vector<8x128xf32> -> vector<8x128xf32>
    %511 = arith.addf %507, %510 : vector<8x128xf32>
    %512 = math.tanh %504 : vector<8x128xf32>
    %cst_308 = arith.constant 5.000000e-01 : f32
    %513 = vector.broadcast %cst_308 : f32 to vector<8x128xf32>
    %514 = arith.mulf %513, %504 : vector<8x128xf32>
    %515 = math.tanh %514 : vector<8x128xf32>
    %cst_309 = arith.constant 1.000000e+00 : f32
    %516 = vector.broadcast %cst_309 : f32 to vector<8x128xf32>
    %517 = arith.addf %515, %516 : vector<8x128xf32>
    %cst_310 = arith.constant 5.000000e-01 : f32
    %518 = vector.broadcast %cst_310 : f32 to vector<8x128xf32>
    %519 = arith.mulf %518, %517 : vector<8x128xf32>
    %520 = arith.select %31, %512, %519 : vector<8x128xi1>, vector<8x128xf32>
    %521 = vector.extract_strided_slice %520 {offsets = [0, 0], sizes = [8, 32], strides = [1, 1]} : vector<8x128xf32> to vector<8x32xf32>
    %522 = vector.extract_strided_slice %520 {offsets = [0, 32], sizes = [8, 32], strides = [1, 1]} : vector<8x128xf32> to vector<8x32xf32>
    %523 = vector.extract_strided_slice %520 {offsets = [0, 64], sizes = [8, 32], strides = [1, 1]} : vector<8x128xf32> to vector<8x32xf32>
    %524 = vector.extract_strided_slice %520 {offsets = [0, 96], sizes = [8, 32], strides = [1, 1]} : vector<8x128xf32> to vector<8x32xf32>
    %525 = math.tanh %511 : vector<8x128xf32>
    %cst_311 = arith.constant 5.000000e-01 : f32
    %526 = vector.broadcast %cst_311 : f32 to vector<8x128xf32>
    %527 = arith.mulf %526, %511 : vector<8x128xf32>
    %528 = math.tanh %527 : vector<8x128xf32>
    %cst_312 = arith.constant 1.000000e+00 : f32
    %529 = vector.broadcast %cst_312 : f32 to vector<8x128xf32>
    %530 = arith.addf %528, %529 : vector<8x128xf32>
    %cst_313 = arith.constant 5.000000e-01 : f32
    %531 = vector.broadcast %cst_313 : f32 to vector<8x128xf32>
    %532 = arith.mulf %531, %530 : vector<8x128xf32>
    %533 = arith.select %31, %525, %532 : vector<8x128xi1>, vector<8x128xf32>
    %534 = vector.extract_strided_slice %533 {offsets = [0, 0], sizes = [8, 32], strides = [1, 1]} : vector<8x128xf32> to vector<8x32xf32>
    %535 = vector.extract_strided_slice %533 {offsets = [0, 32], sizes = [8, 32], strides = [1, 1]} : vector<8x128xf32> to vector<8x32xf32>
    %536 = vector.extract_strided_slice %533 {offsets = [0, 64], sizes = [8, 32], strides = [1, 1]} : vector<8x128xf32> to vector<8x32xf32>
    %537 = vector.extract_strided_slice %533 {offsets = [0, 96], sizes = [8, 32], strides = [1, 1]} : vector<8x128xf32> to vector<8x32xf32>
    %c0_314 = arith.constant 0 : index
    %c0_315 = arith.constant 0 : index
    %538 = vector.load %arg15[%c0_314, %c0_315] : memref<8x32xf32, #tpu.memory_space<vmem>>, vector<8x32xf32>
    %539 = arith.mulf %522, %538 : vector<8x32xf32>
    %540 = arith.mulf %521, %523 : vector<8x32xf32>
    %541 = arith.addf %539, %540 : vector<8x32xf32>
    %c0_316 = arith.constant 0 : index
    %c0_317 = arith.constant 0 : index
    %542 = vector.load %arg17[%c0_316, %c0_317] : memref<8x32xf32, #tpu.memory_space<vmem>>, vector<8x32xf32>
    %543 = arith.mulf %535, %542 : vector<8x32xf32>
    %544 = arith.mulf %534, %536 : vector<8x32xf32>
    %545 = arith.addf %543, %544 : vector<8x32xf32>
    %c0_318 = arith.constant 0 : index
    %c0_319 = arith.constant 0 : index
    %546 = vector.load %arg15[%c0_318, %c0_319] : memref<8x32xf32, #tpu.memory_space<vmem>>, vector<8x32xf32>
    tpu.vector_store %arg15[%c0_318, %c0_319], %541 {strides = array<i32>} : memref<8x32xf32, #tpu.memory_space<vmem>>, vector<8x32xf32>,
    %c0_320 = arith.constant 0 : index
    %c0_321 = arith.constant 0 : index
    %547 = vector.load %arg17[%c0_320, %c0_321] : memref<8x32xf32, #tpu.memory_space<vmem>>, vector<8x32xf32>
    tpu.vector_store %arg17[%c0_320, %c0_321], %545 {strides = array<i32>} : memref<8x32xf32, #tpu.memory_space<vmem>>, vector<8x32xf32>,
    %548 = math.tanh %541 : vector<8x32xf32>
    %549 = arith.mulf %524, %548 : vector<8x32xf32>
    %c0_322 = arith.constant 0 : index
    %c0_323 = arith.constant 0 : index
    %550 = vector.load %arg14[%c0_322, %c0_323] : memref<8x32xf32, #tpu.memory_space<vmem>>, vector<8x32xf32>
    tpu.vector_store %arg14[%c0_322, %c0_323], %549 {strides = array<i32>} : memref<8x32xf32, #tpu.memory_space<vmem>>, vector<8x32xf32>,
    %551 = math.tanh %545 : vector<8x32xf32>
    %552 = arith.mulf %537, %551 : vector<8x32xf32>
    %c0_324 = arith.constant 0 : index
    %c0_325 = arith.constant 0 : index
    %553 = vector.load %arg16[%c0_324, %c0_325] : memref<8x32xf32, #tpu.memory_space<vmem>>, vector<8x32xf32>
    tpu.vector_store %arg16[%c0_324, %c0_325], %552 {strides = array<i32>} : memref<8x32xf32, #tpu.memory_space<vmem>>, vector<8x32xf32>,
    %c0_326 = arith.constant 0 : index
    %c0_327 = arith.constant 0 : index
    %554 = vector.load %arg14[%c0_326, %c0_327] : memref<8x32xf32, #tpu.memory_space<vmem>>, vector<8x32xf32>
    %c0_328 = arith.constant 0 : index
    %c0_329 = arith.constant 0 : index
    %555 = vector.load %arg16[%c0_328, %c0_329] : memref<8x32xf32, #tpu.memory_space<vmem>>, vector<8x32xf32>
    %c9_330 = arith.constant 9 : index
    %c0_331 = arith.constant 0 : index
    %c0_332 = arith.constant 0 : index
    %556 = vector.load %arg12[%c9_330, %c0_331, %c0_332] : memref<10x8x128xbf16, #tpu.memory_space<vmem>>, vector<1x8x128xbf16>
    %557 = vector.shape_cast %556 : vector<1x8x128xbf16> to vector<8x128xbf16>
    %558 = arith.extf %557 : vector<8x128xbf16> to vector<8x128xf32>
    %559 = arith.truncf %554 : vector<8x32xf32> to vector<8x32xbf16>
    %c0_333 = arith.constant 0 : index
    %c0_334 = arith.constant 0 : index
    %560 = vector.load %arg3[%c0_333, %c0_334] : memref<32x128xbf16, #tpu.memory_space<vmem>>, vector<32x128xbf16>
    %cst_335 = arith.constant dense<0.000000e+00> : vector<8x128xf32>
    %561 = tpu.matmul %559, %560, %cst_335 {dimension_numbers = #tpu.dot_dimension_numbers<[1], [0], [0], [1], [0, 0, 1, 1], [], []>} : vector<8x32xbf16>, vector<32x128xbf16>, vector<8x128xf32> -> vector<8x128xf32>
    %562 = arith.addf %558, %561 : vector<8x128xf32>
    %c0_336 = arith.constant 0 : index
    %c0_337 = arith.constant 0 : index
    %c0_338 = arith.constant 0 : index
    %563 = vector.load %arg13[%c0_336, %c0_337, %c0_338] : memref<10x8x128xbf16, #tpu.memory_space<vmem>>, vector<1x8x128xbf16>
    %564 = vector.shape_cast %563 : vector<1x8x128xbf16> to vector<8x128xbf16>
    %565 = arith.extf %564 : vector<8x128xbf16> to vector<8x128xf32>
    %566 = arith.truncf %555 : vector<8x32xf32> to vector<8x32xbf16>
    %c0_339 = arith.constant 0 : index
    %c0_340 = arith.constant 0 : index
    %567 = vector.load %arg6[%c0_339, %c0_340] : memref<32x128xbf16, #tpu.memory_space<vmem>>, vector<32x128xbf16>
    %cst_341 = arith.constant dense<0.000000e+00> : vector<8x128xf32>
    %568 = tpu.matmul %566, %567, %cst_341 {dimension_numbers = #tpu.dot_dimension_numbers<[1], [0], [0], [1], [0, 0, 1, 1], [], []>} : vector<8x32xbf16>, vector<32x128xbf16>, vector<8x128xf32> -> vector<8x128xf32>
    %569 = arith.addf %565, %568 : vector<8x128xf32>
    %570 = math.tanh %562 : vector<8x128xf32>
    %cst_342 = arith.constant 5.000000e-01 : f32
    %571 = vector.broadcast %cst_342 : f32 to vector<8x128xf32>
    %572 = arith.mulf %571, %562 : vector<8x128xf32>
    %573 = math.tanh %572 : vector<8x128xf32>
    %cst_343 = arith.constant 1.000000e+00 : f32
    %574 = vector.broadcast %cst_343 : f32 to vector<8x128xf32>
    %575 = arith.addf %573, %574 : vector<8x128xf32>
    %cst_344 = arith.constant 5.000000e-01 : f32
    %576 = vector.broadcast %cst_344 : f32 to vector<8x128xf32>
    %577 = arith.mulf %576, %575 : vector<8x128xf32>
    %578 = arith.select %31, %570, %577 : vector<8x128xi1>, vector<8x128xf32>
    %579 = vector.extract_strided_slice %578 {offsets = [0, 0], sizes = [8, 32], strides = [1, 1]} : vector<8x128xf32> to vector<8x32xf32>
    %580 = vector.extract_strided_slice %578 {offsets = [0, 32], sizes = [8, 32], strides = [1, 1]} : vector<8x128xf32> to vector<8x32xf32>
    %581 = vector.extract_strided_slice %578 {offsets = [0, 64], sizes = [8, 32], strides = [1, 1]} : vector<8x128xf32> to vector<8x32xf32>
    %582 = vector.extract_strided_slice %578 {offsets = [0, 96], sizes = [8, 32], strides = [1, 1]} : vector<8x128xf32> to vector<8x32xf32>
    %583 = math.tanh %569 : vector<8x128xf32>
    %cst_345 = arith.constant 5.000000e-01 : f32
    %584 = vector.broadcast %cst_345 : f32 to vector<8x128xf32>
    %585 = arith.mulf %584, %569 : vector<8x128xf32>
    %586 = math.tanh %585 : vector<8x128xf32>
    %cst_346 = arith.constant 1.000000e+00 : f32
    %587 = vector.broadcast %cst_346 : f32 to vector<8x128xf32>
    %588 = arith.addf %586, %587 : vector<8x128xf32>
    %cst_347 = arith.constant 5.000000e-01 : f32
    %589 = vector.broadcast %cst_347 : f32 to vector<8x128xf32>
    %590 = arith.mulf %589, %588 : vector<8x128xf32>
    %591 = arith.select %31, %583, %590 : vector<8x128xi1>, vector<8x128xf32>
    %592 = vector.extract_strided_slice %591 {offsets = [0, 0], sizes = [8, 32], strides = [1, 1]} : vector<8x128xf32> to vector<8x32xf32>
    %593 = vector.extract_strided_slice %591 {offsets = [0, 32], sizes = [8, 32], strides = [1, 1]} : vector<8x128xf32> to vector<8x32xf32>
    %594 = vector.extract_strided_slice %591 {offsets = [0, 64], sizes = [8, 32], strides = [1, 1]} : vector<8x128xf32> to vector<8x32xf32>
    %595 = vector.extract_strided_slice %591 {offsets = [0, 96], sizes = [8, 32], strides = [1, 1]} : vector<8x128xf32> to vector<8x32xf32>
    %c0_348 = arith.constant 0 : index
    %c0_349 = arith.constant 0 : index
    %596 = vector.load %arg15[%c0_348, %c0_349] : memref<8x32xf32, #tpu.memory_space<vmem>>, vector<8x32xf32>
    %597 = arith.mulf %580, %596 : vector<8x32xf32>
    %598 = arith.mulf %579, %581 : vector<8x32xf32>
    %599 = arith.addf %597, %598 : vector<8x32xf32>
    %c0_350 = arith.constant 0 : index
    %c0_351 = arith.constant 0 : index
    %600 = vector.load %arg17[%c0_350, %c0_351] : memref<8x32xf32, #tpu.memory_space<vmem>>, vector<8x32xf32>
    %601 = arith.mulf %593, %600 : vector<8x32xf32>
    %602 = arith.mulf %592, %594 : vector<8x32xf32>
    %603 = arith.addf %601, %602 : vector<8x32xf32>
    %c0_352 = arith.constant 0 : index
    %c0_353 = arith.constant 0 : index
    %604 = vector.load %arg15[%c0_352, %c0_353] : memref<8x32xf32, #tpu.memory_space<vmem>>, vector<8x32xf32>
    tpu.vector_store %arg15[%c0_352, %c0_353], %599 {strides = array<i32>} : memref<8x32xf32, #tpu.memory_space<vmem>>, vector<8x32xf32>,
    %c0_354 = arith.constant 0 : index
    %c0_355 = arith.constant 0 : index
    %605 = vector.load %arg17[%c0_354, %c0_355] : memref<8x32xf32, #tpu.memory_space<vmem>>, vector<8x32xf32>
    tpu.vector_store %arg17[%c0_354, %c0_355], %603 {strides = array<i32>} : memref<8x32xf32, #tpu.memory_space<vmem>>, vector<8x32xf32>,
    %606 = math.tanh %599 : vector<8x32xf32>
    %607 = arith.mulf %582, %606 : vector<8x32xf32>
    %c0_356 = arith.constant 0 : index
    %c0_357 = arith.constant 0 : index
    %608 = vector.load %arg14[%c0_356, %c0_357] : memref<8x32xf32, #tpu.memory_space<vmem>>, vector<8x32xf32>
    tpu.vector_store %arg14[%c0_356, %c0_357], %607 {strides = array<i32>} : memref<8x32xf32, #tpu.memory_space<vmem>>, vector<8x32xf32>,
    %609 = math.tanh %603 : vector<8x32xf32>
    %610 = arith.mulf %595, %609 : vector<8x32xf32>
    %c0_358 = arith.constant 0 : index
    %c0_359 = arith.constant 0 : index
    %611 = vector.load %arg16[%c0_358, %c0_359] : memref<8x32xf32, #tpu.memory_space<vmem>>, vector<8x32xf32>
    tpu.vector_store %arg16[%c0_358, %c0_359], %610 {strides = array<i32>} : memref<8x32xf32, #tpu.memory_space<vmem>>, vector<8x32xf32>,
    %c0_360 = arith.constant 0 : index
    %c0_361 = arith.constant 0 : index
    %612 = vector.load %arg14[%c0_360, %c0_361] : memref<8x32xf32, #tpu.memory_space<vmem>>, vector<8x32xf32>
    %613 = arith.truncf %612 : vector<8x32xf32> to vector<8x32xbf16>
    %c0_362 = arith.constant 0 : index
    %c0_363 = arith.constant 0 : index
    %614 = vector.load %arg8[%c0_362, %c0_363] : memref<32x128xbf16, #tpu.memory_space<vmem>>, vector<32x128xbf16>
    %cst_364 = arith.constant dense<0.000000e+00> : vector<8x128xf32>
    %615 = tpu.matmul %613, %614, %cst_364 {dimension_numbers = #tpu.dot_dimension_numbers<[1], [0], [0], [1], [0, 0, 1, 1], [], []>} : vector<8x32xbf16>, vector<32x128xbf16>, vector<8x128xf32> -> vector<8x128xf32>
    %c0_365 = arith.constant 0 : index
    %c0_366 = arith.constant 0 : index
    %616 = vector.load %arg16[%c0_365, %c0_366] : memref<8x32xf32, #tpu.memory_space<vmem>>, vector<8x32xf32>
    %617 = arith.truncf %616 : vector<8x32xf32> to vector<8x32xbf16>
    %c0_367 = arith.constant 0 : index
    %c0_368 = arith.constant 0 : index
    %618 = vector.load %arg9[%c0_367, %c0_368] : memref<32x128xbf16, #tpu.memory_space<vmem>>, vector<32x128xbf16>
    %cst_369 = arith.constant dense<0.000000e+00> : vector<8x128xf32>
    %619 = tpu.matmul %617, %618, %cst_369 {dimension_numbers = #tpu.dot_dimension_numbers<[1], [0], [0], [1], [0, 0, 1, 1], [], []>} : vector<8x32xbf16>, vector<32x128xbf16>, vector<8x128xf32> -> vector<8x128xf32>
    %620 = arith.addf %615, %619 : vector<8x128xf32>
    %c0_370 = arith.constant 0 : index
    %c0_371 = arith.constant 0 : index
    %621 = vector.load %arg10[%c0_370, %c0_371] : memref<1x128xf32, #tpu.memory_space<vmem>>, vector<1x128xf32>
    %622 = vector.broadcast %621 : vector<1x128xf32> to vector<8x128xf32>
    %623 = arith.addf %620, %622 : vector<8x128xf32>
    %c0_372 = arith.constant 0 : index
    %c0_373 = arith.constant 0 : index
    %624 = vector.load %arg11[%c0_372, %c0_373] : memref<8x128xf32, #tpu.memory_space<vmem>>, vector<8x128xf32>
    tpu.vector_store %arg11[%c0_372, %c0_373], %623 {strides = array<i32>} : memref<8x128xf32, #tpu.memory_space<vmem>>, vector<8x128xf32>,
    return
  }
  func.func @transform_0(%arg0: i32) -> (i32, i32, i32) {
    %c0_i32 = arith.constant 0 : i32
    %c0_i32_0 = arith.constant 0 : i32
    %c0_i32_1 = arith.constant 0 : i32
    return %c0_i32, %arg0, %c0_i32_0 : i32, i32, i32
  }
  func.func @transform_1(%arg0: i32) -> (i32, i32) {
    %c0_i32 = arith.constant 0 : i32
    %c0_i32_0 = arith.constant 0 : i32
    %c0_i32_1 = arith.constant 0 : i32
    return %c0_i32, %c0_i32_0 : i32, i32
  }
  func.func @transform_2(%arg0: i32) -> (i32, i32) {
    %c0_i32 = arith.constant 0 : i32
    %c0_i32_0 = arith.constant 0 : i32
    %c0_i32_1 = arith.constant 0 : i32
    return %c0_i32, %c0_i32_0 : i32, i32
  }
  func.func @transform_3(%arg0: i32) -> (i32, i32) {
    %c0_i32 = arith.constant 0 : i32
    %c0_i32_0 = arith.constant 0 : i32
    %c0_i32_1 = arith.constant 0 : i32
    return %c0_i32, %c0_i32_0 : i32, i32
  }
  func.func @transform_4(%arg0: i32) -> (i32, i32) {
    %c0_i32 = arith.constant 0 : i32
    %c0_i32_0 = arith.constant 0 : i32
    %c0_i32_1 = arith.constant 0 : i32
    return %c0_i32, %c0_i32_0 : i32, i32
  }
  func.func @transform_5(%arg0: i32) -> (i32, i32) {
    %c0_i32 = arith.constant 0 : i32
    %c0_i32_0 = arith.constant 0 : i32
    %c0_i32_1 = arith.constant 0 : i32
    return %c0_i32, %c0_i32_0 : i32, i32
  }
  func.func @transform_6(%arg0: i32) -> (i32, i32) {
    %c0_i32 = arith.constant 0 : i32
    %c0_i32_0 = arith.constant 0 : i32
    %c0_i32_1 = arith.constant 0 : i32
    return %c0_i32, %c0_i32_0 : i32, i32
  }
  func.func @transform_7(%arg0: i32) -> (i32, i32) {
    %c0_i32 = arith.constant 0 : i32
    %c0_i32_0 = arith.constant 0 : i32
    %c0_i32_1 = arith.constant 0 : i32
    return %c0_i32, %c0_i32_0 : i32, i32
  }
  func.func @transform_8(%arg0: i32) -> (i32, i32) {
    %c0_i32 = arith.constant 0 : i32
    %c0_i32_0 = arith.constant 0 : i32
    %c0_i32_1 = arith.constant 0 : i32
    return %c0_i32, %c0_i32_0 : i32, i32
  }
  func.func @transform_9(%arg0: i32) -> (i32, i32) {
    %c0_i32 = arith.constant 0 : i32
    %c0_i32_0 = arith.constant 0 : i32
    %c0_i32_1 = arith.constant 0 : i32
    return %c0_i32, %c0_i32_0 : i32, i32
  }
  func.func @transform_10(%arg0: i32) -> (i32, i32) {
    %c0_i32 = arith.constant 0 : i32
    %c0_i32_0 = arith.constant 0 : i32
    return %arg0, %c0_i32 : i32, i32
  }
}

</mosaic_0001>

<llo_original>
// kernel: tpu_custom_call.1
$region0: #{tpu_custom_call.1}
  #allocation0 [shape = 'u32[]', space=smem, size = 0x4, offset = 0x4, fixed_abs, tag = 'smem constant byte address 0x4 - core index']
  #allocation1 [shape = 'u32[72,128]{1,0:T(1,128)}', space=vmem, size = 0x9000, scoped, tag = 'internal scratch']
  #allocation2 [shape = 'bf16[10,8,128]{2,1,0:T(8,128)(2,1)}', space=vmem, size = 0x5000, scoped, tag = 'scratch operand']
  #allocation3 [shape = 'bf16[10,8,128]{2,1,0:T(8,128)(2,1)}', space=vmem, size = 0x5000, scoped, tag = 'scratch operand']
  #allocation4 [shape = 'f32[8,32]{1,0:T(8,128)}', space=vmem, size = 0x1000, scoped, tag = 'scratch operand']
  #allocation5 [shape = 'f32[8,32]{1,0:T(8,128)}', space=vmem, size = 0x1000, scoped, tag = 'scratch operand']
  #allocation6 [shape = 'f32[8,32]{1,0:T(8,128)}', space=vmem, size = 0x1000, scoped, tag = 'scratch operand']
  #allocation7 [shape = 'f32[8,32]{1,0:T(8,128)}', space=vmem, size = 0x1000, scoped, tag = 'scratch operand']
  %s0 = inlined_call_operand.hbm [shape: bf16[10,8,32], index: 0, kind: input, shape index: {}]
  %s1 = inlined_call_operand.hbm [shape: bf16[32,128], index: 1, kind: input, shape index: {}]
  %s2 = inlined_call_operand.hbm [shape: bf16[32,128], index: 2, kind: input, shape index: {}]
  %s3 = inlined_call_operand.vmem [shape: f32[1,128], index: 3, kind: input, shape index: {}]
  %s4 = inlined_call_operand.hbm [shape: bf16[32,128], index: 4, kind: input, shape index: {}]
  %s5 = inlined_call_operand.hbm [shape: bf16[32,128], index: 5, kind: input, shape index: {}]
  %s6 = inlined_call_operand.vmem [shape: f32[1,128], index: 6, kind: input, shape index: {}]
  %s7 = inlined_call_operand.hbm [shape: bf16[32,128], index: 7, kind: input, shape index: {}]
  %s8 = inlined_call_operand.hbm [shape: bf16[32,128], index: 8, kind: input, shape index: {}]
  %s9 = inlined_call_operand.vmem [shape: f32[1,128], index: 9, kind: input, shape index: {}]
  %s10 = inlined_call_operand.hbm [shape: f32[8,128], index: 10, kind: output, shape index: {}]
  %s11 = sld [smem:[#allocation0]]
  $region78: #{tpu_custom_call.1} parent=0
    _
  %s13 = ssub.s32 1, %s11
  %s14 = scalar_select 0, %s13, %s11
  $region1: #{tpu_custom_call.1} parent=0
    #allocation8 [shape = 'u8[20480]{0}', space=vmem, size = 0x5000, scoped, tag = 'input window, operand 0, single buffered']
    #allocation9 [shape = 's32[1]{0}', space=sflag, size = 0x4, scoped, tag = 'scoped memory for tpu_custom_call.1']
    #allocation10 [shape = 's32[1]{0}', space=sflag, size = 0x4, scoped, tag = 'scoped memory for tpu_custom_call.1']
    #allocation11 [shape = 'u8[8192]{0}', space=vmem, size = 0x2000, scoped, tag = 'input window, operand 1, single buffered']
    #allocation12 [shape = 's32[1]{0}', space=sflag, size = 0x4, scoped, tag = 'scoped memory for tpu_custom_call.1']
    #allocation13 [shape = 'u8[8192]{0}', space=vmem, size = 0x2000, scoped, tag = 'input window, operand 2, single buffered']
    #allocation14 [shape = 'u8[8192]{0}', space=vmem, size = 0x2000, scoped, tag = 'input window, operand 4, single buffered']
    #allocation15 [shape = 's32[1]{0}', space=sflag, size = 0x4, scoped, tag = 'scoped memory for tpu_custom_call.1']
    #allocation16 [shape = 'u8[8192]{0}', space=vmem, size = 0x2000, scoped, tag = 'input window, operand 5, single buffered']
    #allocation17 [shape = 'u8[8192]{0}', space=vmem, size = 0x2000, scoped, tag = 'input window, operand 7, single buffered']
    #allocation18 [shape = 's32[1]{0}', space=sflag, size = 0x4, scoped, tag = 'scoped memory for tpu_custom_call.1']
    #allocation19 [shape = 'u8[8192]{0}', space=vmem, size = 0x2000, scoped, tag = 'input window, operand 8, single buffered']
    #allocation20 [shape = 'u8[4096]{0}', space=vmem, size = 0x1000, scoped, tag = 'output window, operand 0, single buffered']
    %15 = vsyncpa [#allocation9], 0
    %16 = vsyncpa [#allocation12], 0
    %17 = vsyncpa [#allocation15], 0
    %18 = vsyncpa [#allocation18], 0
    %19 = vsyncpa [#allocation10], 0
    // Predicated region
    $region2: #{tpu_custom_call.1} parent=1 // pred_check
      _
    $region3: #{tpu_custom_call.1} parent=1 // pred_check_branch
      %21 = sbr.rel (0) target = $region5
    $region4: #{tpu_custom_call.1} parent=1 // pred_region
      %23 = vsyncadd [#allocation9], 0
      %s24 = sshll.u32 %s0, 4
      %s25 = int_to_ptr.hbm [resolvable:$true] %s24
      %s26 = sshll.u32 [#allocation8], 4
      %s27 = int_to_ptr.vmem [resolvable:$true] %s26
      %32 = dma.hbm_to_vmem [thread:$0]  %s25, 640, %s27, [#allocation9], 64, 64, 4
    $region5: #{tpu_custom_call.1} parent=1 // pred_fallthru
      _
    // Predicated region
    $region6: #{tpu_custom_call.1} parent=1 // pred_check
      _
    $region7: #{tpu_custom_call.1} parent=1 // pred_check_branch
      %34 = sbr.rel (0) target = $region9
    $region8: #{tpu_custom_call.1} parent=1 // pred_region
      %36 = vsyncadd [#allocation12], 0
      %s37 = sshll.u32 %s1, 4
      %s38 = int_to_ptr.hbm [resolvable:$true] %s37
      %s39 = sshll.u32 [#allocation11], 4
      %s40 = int_to_ptr.vmem [resolvable:$true] %s39
      %45 = dma.hbm_to_vmem [thread:$0]  %s38, 256, %s40, [#allocation12], 64, 64, 4
    $region9: #{tpu_custom_call.1} parent=1 // pred_fallthru
      _
    // Predicated region
    $region10: #{tpu_custom_call.1} parent=1 // pred_check
      _
    $region11: #{tpu_custom_call.1} parent=1 // pred_check_branch
      %47 = sbr.rel (0) target = $region13
    $region12: #{tpu_custom_call.1} parent=1 // pred_region
      %49 = vsyncadd [#allocation12], 0
      %s50 = sshll.u32 %s2, 4
      %s51 = int_to_ptr.hbm [resolvable:$true] %s50
      %s52 = sshll.u32 [#allocation13], 4
      %s53 = int_to_ptr.vmem [resolvable:$true] %s52
      %58 = dma.hbm_to_vmem [thread:$0]  %s51, 256, %s53, [#allocation12], 64, 64, 4
    $region13: #{tpu_custom_call.1} parent=1 // pred_fallthru
      _
    // Predicated region
    $region14: #{tpu_custom_call.1} parent=1 // pred_check
      _
    $region15: #{tpu_custom_call.1} parent=1 // pred_check_branch
      %60 = sbr.rel (0) target = $region17
    $region16: #{tpu_custom_call.1} parent=1 // pred_region
      _
    $region17: #{tpu_custom_call.1} parent=1 // pred_fallthru
      _
    // Predicated region
    $region18: #{tpu_custom_call.1} parent=1 // pred_check
      _
    $region19: #{tpu_custom_call.1} parent=1 // pred_check_branch
      %62 = sbr.rel (0) target = $region21
    $region20: #{tpu_custom_call.1} parent=1 // pred_region
      %64 = vsyncadd [#allocation15], 0
      %s65 = sshll.u32 %s4, 4
      %s66 = int_to_ptr.hbm [resolvable:$true] %s65
      %s67 = sshll.u32 [#allocation14], 4
      %s68 = int_to_ptr.vmem [resolvable:$true] %s67
      %73 = dma.hbm_to_vmem [thread:$0]  %s66, 256, %s68, [#allocation15], 64, 64, 4
    $region21: #{tpu_custom_call.1} parent=1 // pred_fallthru
      _
    // Predicated region
    $region22: #{tpu_custom_call.1} parent=1 // pred_check
      _
    $region23: #{tpu_custom_call.1} parent=1 // pred_check_branch
      %75 = sbr.rel (0) target = $region25
    $region24: #{tpu_custom_call.1} parent=1 // pred_region
      %77 = vsyncadd [#allocation15], 0
      %s78 = sshll.u32 %s5, 4
      %s79 = int_to_ptr.hbm [resolvable:$true] %s78
      %s80 = sshll.u32 [#allocation16], 4
      %s81 = int_to_ptr.vmem [resolvable:$true] %s80
      %86 = dma.hbm_to_vmem [thread:$0]  %s79, 256, %s81, [#allocation15], 64, 64, 4
    $region25: #{tpu_custom_call.1} parent=1 // pred_fallthru
      _
    // Predicated region
    $region26: #{tpu_custom_call.1} parent=1 // pred_check
      _
    $region27: #{tpu_custom_call.1} parent=1 // pred_check_branch
      %88 = sbr.rel (0) target = $region29
    $region28: #{tpu_custom_call.1} parent=1 // pred_region
      _
    $region29: #{tpu_custom_call.1} parent=1 // pred_fallthru
      _
    // Predicated region
    $region30: #{tpu_custom_call.1} parent=1 // pred_check
      _
    $region31: #{tpu_custom_call.1} parent=1 // pred_check_branch
      %90 = sbr.rel (0) target = $region33
    $region32: #{tpu_custom_call.1} parent=1 // pred_region
      %92 = vsyncadd [#allocation18], 0
      %s93 = sshll.u32 %s7, 4
      %s94 = int_to_ptr.hbm [resolvable:$true] %s93
      %s95 = sshll.u32 [#allocation17], 4
      %s96 = int_to_ptr.vmem [resolvable:$true] %s95
      %101 = dma.hbm_to_vmem [thread:$0]  %s94, 256, %s96, [#allocation18], 64, 64, 4
    $region33: #{tpu_custom_call.1} parent=1 // pred_fallthru
      _
    // Predicated region
    $region34: #{tpu_custom_call.1} parent=1 // pred_check
      _
    $region35: #{tpu_custom_call.1} parent=1 // pred_check_branch
      %103 = sbr.rel (0) target = $region37
    $region36: #{tpu_custom_call.1} parent=1 // pred_region
      %105 = vsyncadd [#allocation18], 0
      %s106 = sshll.u32 %s8, 4
      %s107 = int_to_ptr.hbm [resolvable:$true] %s106
      %s108 = sshll.u32 [#allocation19], 4
      %s109 = int_to_ptr.vmem [resolvable:$true] %s108
      %114 = dma.hbm_to_vmem [thread:$0]  %s107, 256, %s109, [#allocation18], 64, 64, 4
    $region37: #{tpu_custom_call.1} parent=1 // pred_fallthru
      _
    // Predicated region
    $region38: #{tpu_custom_call.1} parent=1 // pred_check
      _
    $region39: #{tpu_custom_call.1} parent=1 // pred_check_branch
      %116 = sbr.rel (0) target = $region41
    $region40: #{tpu_custom_call.1} parent=1 // pred_region
      _
    $region41: #{tpu_custom_call.1} parent=1 // pred_fallthru
      _
    // Predicated region
    $region42: #{tpu_custom_call.1} parent=1 // pred_check
      _
    $region43: #{tpu_custom_call.1} parent=1 // pred_check_branch
      %118 = sbr.rel (0) target = $region45
    $region44: #{tpu_custom_call.1} parent=1 // pred_region
      %120 = dma.done [#allocation9], 640
    $region45: #{tpu_custom_call.1} parent=1 // pred_fallthru
      _
    // Predicated region
    $region46: #{tpu_custom_call.1} parent=1 // pred_check
      _
    $region47: #{tpu_custom_call.1} parent=1 // pred_check_branch
      %122 = sbr.rel (0) target = $region49
    $region48: #{tpu_custom_call.1} parent=1 // pred_region
      %124 = dma.done [#allocation12], 256
    $region49: #{tpu_custom_call.1} parent=1 // pred_fallthru
      _
    // Predicated region
    $region50: #{tpu_custom_call.1} parent=1 // pred_check
      _
    $region51: #{tpu_custom_call.1} parent=1 // pred_check_branch
      %126 = sbr.rel (0) target = $region53
    $region52: #{tpu_custom_call.1} parent=1 // pred_region
      %128 = dma.done [#allocation12], 256
    $region53: #{tpu_custom_call.1} parent=1 // pred_fallthru
      _
    // Predicated region
    $region54: #{tpu_custom_call.1} parent=1 // pred_check
      _
    $region55: #{tpu_custom_call.1} parent=1 // pred_check_branch
      %130 = sbr.rel (0) target = $region57
    $region56: #{tpu_custom_call.1} parent=1 // pred_region
      %132 = dma.done [#allocation15], 256
    $region57: #{tpu_custom_call.1} parent=1 // pred_fallthru
      _
    // Predicated region
    $region58: #{tpu_custom_call.1} parent=1 // pred_check
      _
    $region59: #{tpu_custom_call.1} parent=1 // pred_check_branch
      %134 = sbr.rel (0) target = $region61
    $region60: #{tpu_custom_call.1} parent=1 // pred_region
      %136 = dma.done [#allocation15], 256
    $region61: #{tpu_custom_call.1} parent=1 // pred_fallthru
      _
    // Predicated region
    $region62: #{tpu_custom_call.1} parent=1 // pred_check
      _
    $region63: #{tpu_custom_call.1} parent=1 // pred_check_branch
      %138 = sbr.rel (0) target = $region65
    $region64: #{tpu_custom_call.1} parent=1 // pred_region
      %140 = dma.done [#allocation18], 256
    $region65: #{tpu_custom_call.1} parent=1 // pred_fallthru
      _
    // Predicated region
    $region66: #{tpu_custom_call.1} parent=1 // pred_check
      _
    $region67: #{tpu_custom_call.1} parent=1 // pred_check_branch
      %142 = sbr.rel (0) target = $region69
    $region68: #{tpu_custom_call.1} parent=1 // pred_region
      %144 = dma.done [#allocation18], 256
    $region69: #{tpu_custom_call.1} parent=1 // pred_fallthru
      _
    %v146 = vld [vmem:[#allocation8] sm:$0xf]
    %v147 = vld [vmem:[#allocation8 + $0x4] sm:$0xf]
    %v148 = vld [vmem:[#allocation8 + $0x8] sm:$0xf]
    %v149 = vld [vmem:[#allocation8 + $0xc] sm:$0xf]
    %v150 = vld [vmem:[#allocation8 + $0x10] sm:$0xf]
    %v151 = vld [vmem:[#allocation8 + $0x14] sm:$0xf]
    %v152 = vld [vmem:[#allocation8 + $0x18] sm:$0xf]
    %v153 = vld [vmem:[#allocation8 + $0x1c] sm:$0xf]
    %v154 = vld [vmem:[#allocation8 + $0x20] sm:$0xf]
    %v155 = vld [vmem:[#allocation8 + $0x24] sm:$0xf]
    %v156 = vld [vmem:[#allocation11] sm:$0xf]
    %v157 = vld [vmem:[#allocation11 + $0x4] sm:$0xf]
    %v158 = vld [vmem:[#allocation11 + $0x8] sm:$0xf]
    %v159 = vld [vmem:[#allocation11 + $0xc] sm:$0xf]
    %v160 = vld [vmem:[%s3] sm:$0x1]
    %v162 = vperm.slane %v160, 0
    %v174 = vunpack.c.l.b16 %v146
    %v175 = vunpack.c.l.b16 %v147
    %v176 = vunpack.c.l.b16 %v148
    %v177 = vunpack.c.l.b16 %v149
    %v178 = vunpack.c.l.b16 %v150
    %v179 = vunpack.c.l.b16 %v151
    %v180 = vunpack.c.l.b16 %v152
    %v181 = vunpack.c.l.b16 %v153
    %v182 = vunpack.c.l.b16 %v154
    %v183 = vunpack.c.l.b16 %v155
    %v184 = vpack.c.b16 %v175, %v174
    %v185 = vpack.c.b16 %v177, %v176
    %v186 = vpack.c.b16 %v179, %v178
    %v187 = vpack.c.b16 %v181, %v180
    %v188 = vpack.c.b16 %v183, %v182
    %v193 = vunpack.c.l.b16 %v156
    %v194 = vunpack.c.l.b16 %v157
    %v195 = vunpack.c.l.b16 %v158
    %v196 = vunpack.c.l.b16 %v159
    %v197 = vpack.c.b16 %v194, %v193
    %v198 = vpack.c.b16 %v196, %v195
    %vm201 = vcmask 261120
    %v203 = vsel %vm201, %v184, 0
    %v206 = vsel %vm201, %v185, 0
    %v209 = vsel %vm201, %v186, 0
    %v212 = vsel %vm201, %v187, 0
    %v215 = vsel %vm201, %v188, 0
    %217 = vmatpush.bf16.msra.mxu0 0
    %218 = vmatpush.bf16.msra.mxu0 0
    %219 = vmatpush.bf16.msra.mxu0 0
    %220 = vmatpush.bf16.msra.mxu0 0
    %221 = vmatpush.bf16.msra.mxu0 0
    %222 = vmatpush.bf16.msra.mxu0 0
    %223 = vmatpush.bf16.msra.mxu0 %v198
    %224 = vmatpush.bf16.msra.mxu0 %v197
    %225 = vmatmul.bf16.gmra.mxu0 %v203
    %v226 = vpop.f32.mrf.mxu0
    %v227 = vadd.f32 %v162, %v226
    %v228 = vpop.f32.mrf.mxu0
    %v229 = vadd.f32 %v162, %v228
    %230 = vmatmul.bf16.gmra.mxu0 %v206
    %v231 = vpop.f32.mrf.mxu0
    %v232 = vadd.f32 %v162, %v231
    %v233 = vpop.f32.mrf.mxu0
    %v234 = vadd.f32 %v162, %v233
    %235 = vmatmul.bf16.gmra.mxu0 %v209
    %v236 = vpop.f32.mrf.mxu0
    %v237 = vadd.f32 %v162, %v236
    %v238 = vpop.f32.mrf.mxu0
    %v239 = vadd.f32 %v162, %v238
    %240 = vmatmul.bf16.gmra.mxu0 %v212
    %v241 = vpop.f32.mrf.mxu0
    %v242 = vadd.f32 %v162, %v241
    %v243 = vpop.f32.mrf.mxu0
    %v244 = vadd.f32 %v162, %v243
    %245 = vmatmul.bf16.gmra.mxu0 %v215
    %v246 = vpop.f32.mrf.mxu0
    %v247 = vadd.f32 %v162, %v246
    %v248 = vpop.f32.mrf.mxu0
    %v249 = vadd.f32 %v162, %v248
    %250 = vdwg.mxu0
    %v251 = vpack.c.bf16 %v227, %v227
    %v252 = vpack.c.bf16 %v229, %v229
    %v253 = vpack.c.bf16 %v232, %v232
    %v254 = vpack.c.bf16 %v234, %v234
    %v255 = vpack.c.bf16 %v237, %v237
    %v256 = vpack.c.bf16 %v239, %v239
    %v257 = vpack.c.bf16 %v242, %v242
    %v258 = vpack.c.bf16 %v244, %v244
    %v259 = vpack.c.bf16 %v247, %v247
    %v260 = vpack.c.bf16 %v249, %v249
    %261 = vst [vmem:[#allocation2] sm:$0xf] %v251
    %262 = vst [vmem:[#allocation2 + $0x4] sm:$0xf] %v252
    %263 = vst [vmem:[#allocation2 + $0x8] sm:$0xf] %v253
    %264 = vst [vmem:[#allocation2 + $0xc] sm:$0xf] %v254
    %265 = vst [vmem:[#allocation2 + $0x10] sm:$0xf] %v255
    %266 = vst [vmem:[#allocation2 + $0x14] sm:$0xf] %v256
    %267 = vst [vmem:[#allocation2 + $0x18] sm:$0xf] %v257
    %268 = vst [vmem:[#allocation2 + $0x1c] sm:$0xf] %v258
    %269 = vst [vmem:[#allocation2 + $0x20] sm:$0xf] %v259
    %270 = vst [vmem:[#allocation2 + $0x24] sm:$0xf] %v260
    %v271 = vld [vmem:[#allocation14] sm:$0xf]
    %v272 = vld [vmem:[#allocation14 + $0x4] sm:$0xf]
    %v273 = vld [vmem:[#allocation14 + $0x8] sm:$0xf]
    %v274 = vld [vmem:[#allocation14 + $0xc] sm:$0xf]
    %v275 = vld [vmem:[%s6] sm:$0x1]
    %v277 = vperm.slane %v275, 0
    %v283 = vunpack.c.l.b16 %v271
    %v284 = vunpack.c.l.b16 %v272
    %v285 = vunpack.c.l.b16 %v273
    %v286 = vunpack.c.l.b16 %v274
    %v287 = vpack.c.b16 %v284, %v283
    %v288 = vpack.c.b16 %v286, %v285
    %291 = vmatpush.bf16.msra.mxu0 0
    %292 = vmatpush.bf16.msra.mxu0 0
    %293 = vmatpush.bf16.msra.mxu0 0
    %294 = vmatpush.bf16.msra.mxu0 0
    %295 = vmatpush.bf16.msra.mxu0 0
    %296 = vmatpush.bf16.msra.mxu0 0
    %297 = vmatpush.bf16.msra.mxu0 %v288
    %298 = vmatpush.bf16.msra.mxu0 %v287
    %299 = vmatmul.bf16.gmra.mxu0 %v203
    %v300 = vpop.f32.mrf.mxu0
    %v301 = vadd.f32 %v277, %v300
    %v302 = vpop.f32.mrf.mxu0
    %v303 = vadd.f32 %v277, %v302
    %304 = vmatmul.bf16.gmra.mxu0 %v206
    %v305 = vpop.f32.mrf.mxu0
    %v306 = vadd.f32 %v277, %v305
    %v307 = vpop.f32.mrf.mxu0
    %v308 = vadd.f32 %v277, %v307
    %309 = vmatmul.bf16.gmra.mxu0 %v209
    %v310 = vpop.f32.mrf.mxu0
    %v311 = vadd.f32 %v277, %v310
    %v312 = vpop.f32.mrf.mxu0
    %v313 = vadd.f32 %v277, %v312
    %314 = vmatmul.bf16.gmra.mxu0 %v212
    %v315 = vpop.f32.mrf.mxu0
    %v316 = vadd.f32 %v277, %v315
    %v317 = vpop.f32.mrf.mxu0
    %v318 = vadd.f32 %v277, %v317
    %319 = vmatmul.bf16.gmra.mxu0 %v215
    %v320 = vpop.f32.mrf.mxu0
    %v321 = vadd.f32 %v277, %v320
    %v322 = vpop.f32.mrf.mxu0
    %v323 = vadd.f32 %v277, %v322
    %324 = vdwg.mxu0
    %v325 = vpack.c.bf16 %v301, %v301
    %v326 = vpack.c.bf16 %v303, %v303
    %v327 = vpack.c.bf16 %v306, %v306
    %v328 = vpack.c.bf16 %v308, %v308
    %v329 = vpack.c.bf16 %v311, %v311
    %v330 = vpack.c.bf16 %v313, %v313
    %v331 = vpack.c.bf16 %v316, %v316
    %v332 = vpack.c.bf16 %v318, %v318
    %v333 = vpack.c.bf16 %v321, %v321
    %v334 = vpack.c.bf16 %v323, %v323
    %335 = vst [vmem:[#allocation3] sm:$0xf] %v325
    %336 = vst [vmem:[#allocation3 + $0x4] sm:$0xf] %v326
    %337 = vst [vmem:[#allocation3 + $0x8] sm:$0xf] %v327
    %338 = vst [vmem:[#allocation3 + $0xc] sm:$0xf] %v328
    %339 = vst [vmem:[#allocation3 + $0x10] sm:$0xf] %v329
    %340 = vst [vmem:[#allocation3 + $0x14] sm:$0xf] %v330
    %341 = vst [vmem:[#allocation3 + $0x18] sm:$0xf] %v331
    %342 = vst [vmem:[#allocation3 + $0x1c] sm:$0xf] %v332
    %343 = vst [vmem:[#allocation3 + $0x20] sm:$0xf] %v333
    %344 = vst [vmem:[#allocation3 + $0x24] sm:$0xf] %v334
    %345 = vst.msk [vmem:[#allocation4] sm:$0xff] %vm201, 0.0
    %346 = vst.msk [vmem:[#allocation5] sm:$0xff] %vm201, 0.0
    %347 = vst.msk [vmem:[#allocation6] sm:$0xff] %vm201, 0.0
    %348 = vst.msk [vmem:[#allocation7] sm:$0xff] %vm201, 0.0
    %v349 = vlaneseq
    %v350 = vand.u32 %v349, 127
    %vm351 = vcmp.ge.s32.totalorder %v350, 64
    %vm352 = vcmp.lt.s32.totalorder %v350, 96
    %vm353 = vmand %vm351, %vm352
    %v354 = vld [vmem:[#allocation4] sm:$0xff]
    %v355 = vld [vmem:[#allocation6] sm:$0xff]
    %v356 = vld [vmem:[#allocation2] sm:$0xf]
    %v357 = vunpack.c.l.bf16 %v356
    %v358 = vpack.c.bf16 %v354, %v354
    %v359 = vld [vmem:[#allocation13] sm:$0xf]
    %v360 = vld [vmem:[#allocation13 + $0x4] sm:$0xf]
    %v361 = vld [vmem:[#allocation13 + $0x8] sm:$0xf]
    %v362 = vld [vmem:[#allocation13 + $0xc] sm:$0xf]
    %v367 = vunpack.c.l.b16 %v359
    %v368 = vunpack.c.l.b16 %v360
    %v369 = vunpack.c.l.b16 %v361
    %v370 = vunpack.c.l.b16 %v362
    %v371 = vpack.c.b16 %v368, %v367
    %v372 = vpack.c.b16 %v370, %v369
    %v376 = vsel %vm201, %v358, 0
    %378 = vmatpush.bf16.msra.mxu0 0
    %379 = vmatpush.bf16.msra.mxu0 0
    %380 = vmatpush.bf16.msra.mxu0 0
    %381 = vmatpush.bf16.msra.mxu0 0
    %382 = vmatpush.bf16.msra.mxu0 0
    %383 = vmatpush.bf16.msra.mxu0 0
    %384 = vmatpush.bf16.msra.mxu0 %v372
    %385 = vmatpush.bf16.msra.mxu0 %v371
    %386 = vmatmul.bf16.gmra.mxu0 %v376
    %v387 = vpop.f32.mrf.mxu0
    %v388 = vadd.f32 0.0, %v387
    %v389 = vpop.f32.mrf.mxu0
    %390 = vdwg.mxu0
    %v391 = vadd.f32 %v357, %v388
    %s392 = scalar_lea.vmem [#allocation3], 36
    %v393 = vld [vmem:[%s392] sm:$0xf]
    %v394 = vunpack.c.l.bf16 %v393
    %v395 = vpack.c.bf16 %v355, %v355
    %v396 = vld [vmem:[#allocation16] sm:$0xf]
    %v397 = vld [vmem:[#allocation16 + $0x4] sm:$0xf]
    %v398 = vld [vmem:[#allocation16 + $0x8] sm:$0xf]
    %v399 = vld [vmem:[#allocation16 + $0xc] sm:$0xf]
    %v404 = vunpack.c.l.b16 %v396
    %v405 = vunpack.c.l.b16 %v397
    %v406 = vunpack.c.l.b16 %v398
    %v407 = vunpack.c.l.b16 %v399
    %v408 = vpack.c.b16 %v405, %v404
    %v409 = vpack.c.b16 %v407, %v406
    %v413 = vsel %vm201, %v395, 0
    %415 = vmatpush.bf16.msra.mxu0 0
    %416 = vmatpush.bf16.msra.mxu0 0
    %417 = vmatpush.bf16.msra.mxu0 0
    %418 = vmatpush.bf16.msra.mxu0 0
    %419 = vmatpush.bf16.msra.mxu0 0
    %420 = vmatpush.bf16.msra.mxu0 0
    %421 = vmatpush.bf16.msra.mxu0 %v409
    %422 = vmatpush.bf16.msra.mxu0 %v408
    %423 = vmatmul.bf16.gmra.mxu0 %v413
    %v424 = vpop.f32.mrf.mxu0
    %v425 = vadd.f32 0.0, %v424
    %v426 = vpop.f32.mrf.mxu0
    %427 = vdwg.mxu0
    %v428 = vadd.f32 %v394, %v425
    %v429 = vtanh.pop %v391
    %v430 = vmul.f32 %v391, 0.5
    %v431 = vtanh.pop %v430
    %v432 = vadd.f32 %v431, 1.0
    %v433 = vmul.f32 %v432, 0.5
    %v434 = vsel %vm353, %v429, %v433
    %v435 = vtanh.pop %v428
    %v436 = vmul.f32 %v428, 0.5
    %v437 = vtanh.pop %v436
    %v438 = vadd.f32 %v437, 1.0
    %v439 = vmul.f32 %v438, 0.5
    %v440 = vsel %vm353, %v435, %v439
    %v441 = vld [vmem:[#allocation5] sm:$0xff]
    %443 = vrot.lane.b32.xlu0 %v441, 32
    %v444 = vpop.permute.xlu0 %443
    %v446 = vmul.f32 %v434, %v444
    %448 = vrot.lane.b32.xlu0 %v434, 64
    %v449 = vpop.permute.xlu0 %448
    %v451 = vmul.f32 %v434, %v449
    %453 = vrot.lane.b32.xlu0 %v451, 32
    %v454 = vpop.permute.xlu0 %453
    %v456 = vadd.f32 %v446, %v454
    %v457 = vld [vmem:[#allocation7] sm:$0xff]
    %459 = vrot.lane.b32.xlu0 %v457, 32
    %v460 = vpop.permute.xlu0 %459
    %v462 = vmul.f32 %v440, %v460
    %464 = vrot.lane.b32.xlu0 %v440, 64
    %v465 = vpop.permute.xlu0 %464
    %v467 = vmul.f32 %v440, %v465
    %469 = vrot.lane.b32.xlu0 %v467, 32
    %v470 = vpop.permute.xlu0 %469
    %v472 = vadd.f32 %v462, %v470
    %474 = vrot.lane.b32.xlu0 %v456, 96
    %v475 = vpop.permute.xlu0 %474
    %477 = vst.msk [vmem:[#allocation5] sm:$0xff] %vm201, %v475
    %479 = vrot.lane.b32.xlu0 %v472, 96
    %v480 = vpop.permute.xlu0 %479
    %482 = vst.msk [vmem:[#allocation7] sm:$0xff] %vm201, %v480
    %v483 = vtanh.pop %v456
    %485 = vrot.lane.b32.xlu0 %v483, 64
    %v486 = vpop.permute.xlu0 %485
    %v488 = vmul.f32 %v434, %v486
    %490 = vrot.lane.b32.xlu0 %v488, 32
    %v491 = vpop.permute.xlu0 %490
    %493 = vst.msk [vmem:[#allocation4] sm:$0xff] %vm201, %v491
    %v494 = vtanh.pop %v472
    %496 = vrot.lane.b32.xlu0 %v494, 64
    %v497 = vpop.permute.xlu0 %496
    %v499 = vmul.f32 %v440, %v497
    %501 = vrot.lane.b32.xlu0 %v499, 32
    %v502 = vpop.permute.xlu0 %501
    %504 = vst.msk [vmem:[#allocation6] sm:$0xff] %vm201, %v502
    %v505 = vld [vmem:[#allocation4] sm:$0xff]
    %v506 = vld [vmem:[#allocation6] sm:$0xff]
    %s507 = scalar_lea.vmem [#allocation2], 4
    %v508 = vld [vmem:[%s507] sm:$0xf]
    %v509 = vunpack.c.l.bf16 %v508
    %v510 = vpack.c.bf16 %v505, %v505
    %v511 = vld [vmem:[#allocation13] sm:$0xf]
    %v512 = vld [vmem:[#allocation13 + $0x4] sm:$0xf]
    %v513 = vld [vmem:[#allocation13 + $0x8] sm:$0xf]
    %v514 = vld [vmem:[#allocation13 + $0xc] sm:$0xf]
    %v519 = vunpack.c.l.b16 %v511
    %v520 = vunpack.c.l.b16 %v512
    %v521 = vunpack.c.l.b16 %v513
    %v522 = vunpack.c.l.b16 %v514
    %v523 = vpack.c.b16 %v520, %v519
    %v524 = vpack.c.b16 %v522, %v521
    %v528 = vsel %vm201, %v510, 0
    %530 = vmatpush.bf16.msra.mxu0 0
    %531 = vmatpush.bf16.msra.mxu0 0
    %532 = vmatpush.bf16.msra.mxu0 0
    %533 = vmatpush.bf16.msra.mxu0 0
    %534 = vmatpush.bf16.msra.mxu0 0
    %535 = vmatpush.bf16.msra.mxu0 0
    %536 = vmatpush.bf16.msra.mxu0 %v524
    %537 = vmatpush.bf16.msra.mxu0 %v523
    %538 = vmatmul.bf16.gmra.mxu0 %v528
    %v539 = vpop.f32.mrf.mxu0
    %v540 = vadd.f32 0.0, %v539
    %v541 = vpop.f32.mrf.mxu0
    %542 = vdwg.mxu0
    %v543 = vadd.f32 %v509, %v540
    %s544 = scalar_lea.vmem [#allocation3], 32
    %v545 = vld [vmem:[%s544] sm:$0xf]
    %v546 = vunpack.c.l.bf16 %v545
    %v547 = vpack.c.bf16 %v506, %v506
    %v548 = vld [vmem:[#allocation16] sm:$0xf]
    %v549 = vld [vmem:[#allocation16 + $0x4] sm:$0xf]
    %v550 = vld [vmem:[#allocation16 + $0x8] sm:$0xf]
    %v551 = vld [vmem:[#allocation16 + $0xc] sm:$0xf]
    %v556 = vunpack.c.l.b16 %v548
    %v557 = vunpack.c.l.b16 %v549
    %v558 = vunpack.c.l.b16 %v550
    %v559 = vunpack.c.l.b16 %v551
    %v560 = vpack.c.b16 %v557, %v556
    %v561 = vpack.c.b16 %v559, %v558
    %v565 = vsel %vm201, %v547, 0
    %567 = vmatpush.bf16.msra.mxu0 0
    %568 = vmatpush.bf16.msra.mxu0 0
    %569 = vmatpush.bf16.msra.mxu0 0
    %570 = vmatpush.bf16.msra.mxu0 0
    %571 = vmatpush.bf16.msra.mxu0 0
    %572 = vmatpush.bf16.msra.mxu0 0
    %573 = vmatpush.bf16.msra.mxu0 %v561
    %574 = vmatpush.bf16.msra.mxu0 %v560
    %575 = vmatmul.bf16.gmra.mxu0 %v565
    %v576 = vpop.f32.mrf.mxu0
    %v577 = vadd.f32 0.0, %v576
    %v578 = vpop.f32.mrf.mxu0
    %579 = vdwg.mxu0
    %v580 = vadd.f32 %v546, %v577
    %v581 = vtanh.pop %v543
    %v582 = vmul.f32 %v543, 0.5
    %v583 = vtanh.pop %v582
    %v584 = vadd.f32 %v583, 1.0
    %v585 = vmul.f32 %v584, 0.5
    %v586 = vsel %vm353, %v581, %v585
    %v587 = vtanh.pop %v580
    %v588 = vmul.f32 %v580, 0.5
    %v589 = vtanh.pop %v588
    %v590 = vadd.f32 %v589, 1.0
    %v591 = vmul.f32 %v590, 0.5
    %v592 = vsel %vm353, %v587, %v591
    %v593 = vld [vmem:[#allocation5] sm:$0xff]
    %595 = vrot.lane.b32.xlu0 %v593, 32
    %v596 = vpop.permute.xlu0 %595
    %v598 = vmul.f32 %v586, %v596
    %600 = vrot.lane.b32.xlu0 %v586, 64
    %v601 = vpop.permute.xlu0 %600
    %v603 = vmul.f32 %v586, %v601
    %605 = vrot.lane.b32.xlu0 %v603, 32
    %v606 = vpop.permute.xlu0 %605
    %v608 = vadd.f32 %v598, %v606
    %v609 = vld [vmem:[#allocation7] sm:$0xff]
    %611 = vrot.lane.b32.xlu0 %v609, 32
    %v612 = vpop.permute.xlu0 %611
    %v614 = vmul.f32 %v592, %v612
    %616 = vrot.lane.b32.xlu0 %v592, 64
    %v617 = vpop.permute.xlu0 %616
    %v619 = vmul.f32 %v592, %v617
    %621 = vrot.lane.b32.xlu0 %v619, 32
    %v622 = vpop.permute.xlu0 %621
    %v624 = vadd.f32 %v614, %v622
    %626 = vrot.lane.b32.xlu0 %v608, 96
    %v627 = vpop.permute.xlu0 %626
    %629 = vst.msk [vmem:[#allocation5] sm:$0xff] %vm201, %v627
    %631 = vrot.lane.b32.xlu0 %v624, 96
    %v632 = vpop.permute.xlu0 %631
    %634 = vst.msk [vmem:[#allocation7] sm:$0xff] %vm201, %v632
    %v635 = vtanh.pop %v608
    %637 = vrot.lane.b32.xlu0 %v635, 64
    %v638 = vpop.permute.xlu0 %637
    %v640 = vmul.f32 %v586, %v638
    %642 = vrot.lane.b32.xlu0 %v640, 32
    %v643 = vpop.permute.xlu0 %642
    %645 = vst.msk [vmem:[#allocation4] sm:$0xff] %vm201, %v643
    %v646 = vtanh.pop %v624
    %648 = vrot.lane.b32.xlu0 %v646, 64
    %v649 = vpop.permute.xlu0 %648
    %v651 = vmul.f32 %v592, %v649
    %653 = vrot.lane.b32.xlu0 %v651, 32
    %v654 = vpop.permute.xlu0 %653
    %656 = vst.msk [vmem:[#allocation6] sm:$0xff] %vm201, %v654
    %v657 = vld [vmem:[#allocation4] sm:$0xff]
    %v658 = vld [vmem:[#allocation6] sm:$0xff]
    %s659 = scalar_lea.vmem [#allocation2], 8
    %v660 = vld [vmem:[%s659] sm:$0xf]
    %v661 = vunpack.c.l.bf16 %v660
    %v662 = vpack.c.bf16 %v657, %v657
    %v663 = vld [vmem:[#allocation13] sm:$0xf]
    %v664 = vld [vmem:[#allocation13 + $0x4] sm:$0xf]
    %v665 = vld [vmem:[#allocation13 + $0x8] sm:$0xf]
    %v666 = vld [vmem:[#allocation13 + $0xc] sm:$0xf]
    %v671 = vunpack.c.l.b16 %v663
    %v672 = vunpack.c.l.b16 %v664
    %v673 = vunpack.c.l.b16 %v665
    %v674 = vunpack.c.l.b16 %v666
    %v675 = vpack.c.b16 %v672, %v671
    %v676 = vpack.c.b16 %v674, %v673
    %v680 = vsel %vm201, %v662, 0
    %682 = vmatpush.bf16.msra.mxu0 0
    %683 = vmatpush.bf16.msra.mxu0 0
    %684 = vmatpush.bf16.msra.mxu0 0
    %685 = vmatpush.bf16.msra.mxu0 0
    %686 = vmatpush.bf16.msra.mxu0 0
    %687 = vmatpush.bf16.msra.mxu0 0
    %688 = vmatpush.bf16.msra.mxu0 %v676
    %689 = vmatpush.bf16.msra.mxu0 %v675
    %690 = vmatmul.bf16.gmra.mxu0 %v680
    %v691 = vpop.f32.mrf.mxu0
    %v692 = vadd.f32 0.0, %v691
    %v693 = vpop.f32.mrf.mxu0
    %694 = vdwg.mxu0
    %v695 = vadd.f32 %v661, %v692
    %s696 = scalar_lea.vmem [#allocation3], 28
    %v697 = vld [vmem:[%s696] sm:$0xf]
    %v698 = vunpack.c.l.bf16 %v697
    %v699 = vpack.c.bf16 %v658, %v658
    %v700 = vld [vmem:[#allocation16] sm:$0xf]
    %v701 = vld [vmem:[#allocation16 + $0x4] sm:$0xf]
    %v702 = vld [vmem:[#allocation16 + $0x8] sm:$0xf]
    %v703 = vld [vmem:[#allocation16 + $0xc] sm:$0xf]
    %v708 = vunpack.c.l.b16 %v700
    %v709 = vunpack.c.l.b16 %v701
    %v710 = vunpack.c.l.b16 %v702
    %v711 = vunpack.c.l.b16 %v703
    %v712 = vpack.c.b16 %v709, %v708
    %v713 = vpack.c.b16 %v711, %v710
    %v717 = vsel %vm201, %v699, 0
    %719 = vmatpush.bf16.msra.mxu0 0
    %720 = vmatpush.bf16.msra.mxu0 0
    %721 = vmatpush.bf16.msra.mxu0 0
    %722 = vmatpush.bf16.msra.mxu0 0
    %723 = vmatpush.bf16.msra.mxu0 0
    %724 = vmatpush.bf16.msra.mxu0 0
    %725 = vmatpush.bf16.msra.mxu0 %v713
    %726 = vmatpush.bf16.msra.mxu0 %v712
    %727 = vmatmul.bf16.gmra.mxu0 %v717
    %v728 = vpop.f32.mrf.mxu0
    %v729 = vadd.f32 0.0, %v728
    %v730 = vpop.f32.mrf.mxu0
    %731 = vdwg.mxu0
    %v732 = vadd.f32 %v698, %v729
    %v733 = vtanh.pop %v695
    %v734 = vmul.f32 %v695, 0.5
    %v735 = vtanh.pop %v734
    %v736 = vadd.f32 %v735, 1.0
    %v737 = vmul.f32 %v736, 0.5
    %v738 = vsel %vm353, %v733, %v737
    %v739 = vtanh.pop %v732
    %v740 = vmul.f32 %v732, 0.5
    %v741 = vtanh.pop %v740
    %v742 = vadd.f32 %v741, 1.0
    %v743 = vmul.f32 %v742, 0.5
    %v744 = vsel %vm353, %v739, %v743
    %v745 = vld [vmem:[#allocation5] sm:$0xff]
    %747 = vrot.lane.b32.xlu0 %v745, 32
    %v748 = vpop.permute.xlu0 %747
    %v750 = vmul.f32 %v738, %v748
    %752 = vrot.lane.b32.xlu0 %v738, 64
    %v753 = vpop.permute.xlu0 %752
    %v755 = vmul.f32 %v738, %v753
    %757 = vrot.lane.b32.xlu0 %v755, 32
    %v758 = vpop.permute.xlu0 %757
    %v760 = vadd.f32 %v750, %v758
    %v761 = vld [vmem:[#allocation7] sm:$0xff]
    %763 = vrot.lane.b32.xlu0 %v761, 32
    %v764 = vpop.permute.xlu0 %763
    %v766 = vmul.f32 %v744, %v764
    %768 = vrot.lane.b32.xlu0 %v744, 64
    %v769 = vpop.permute.xlu0 %768
    %v771 = vmul.f32 %v744, %v769
    %773 = vrot.lane.b32.xlu0 %v771, 32
    %v774 = vpop.permute.xlu0 %773
    %v776 = vadd.f32 %v766, %v774
    %778 = vrot.lane.b32.xlu0 %v760, 96
    %v779 = vpop.permute.xlu0 %778
    %781 = vst.msk [vmem:[#allocation5] sm:$0xff] %vm201, %v779
    %783 = vrot.lane.b32.xlu0 %v776, 96
    %v784 = vpop.permute.xlu0 %783
    %786 = vst.msk [vmem:[#allocation7] sm:$0xff] %vm201, %v784
    %v787 = vtanh.pop %v760
    %789 = vrot.lane.b32.xlu0 %v787, 64
    %v790 = vpop.permute.xlu0 %789
    %v792 = vmul.f32 %v738, %v790
    %794 = vrot.lane.b32.xlu0 %v792, 32
    %v795 = vpop.permute.xlu0 %794
    %797 = vst.msk [vmem:[#allocation4] sm:$0xff] %vm201, %v795
    %v798 = vtanh.pop %v776
    %800 = vrot.lane.b32.xlu0 %v798, 64
    %v801 = vpop.permute.xlu0 %800
    %v803 = vmul.f32 %v744, %v801
    %805 = vrot.lane.b32.xlu0 %v803, 32
    %v806 = vpop.permute.xlu0 %805
    %808 = vst.msk [vmem:[#allocation6] sm:$0xff] %vm201, %v806
    %v809 = vld [vmem:[#allocation4] sm:$0xff]
    %v810 = vld [vmem:[#allocation6] sm:$0xff]
    %s811 = scalar_lea.vmem [#allocation2], 12
    %v812 = vld [vmem:[%s811] sm:$0xf]
    %v813 = vunpack.c.l.bf16 %v812
    %v814 = vpack.c.bf16 %v809, %v809
    %v815 = vld [vmem:[#allocation13] sm:$0xf]
    %v816 = vld [vmem:[#allocation13 + $0x4] sm:$0xf]
    %v817 = vld [vmem:[#allocation13 + $0x8] sm:$0xf]
    %v818 = vld [vmem:[#allocation13 + $0xc] sm:$0xf]
    %v823 = vunpack.c.l.b16 %v815
    %v824 = vunpack.c.l.b16 %v816
    %v825 = vunpack.c.l.b16 %v817
    %v826 = vunpack.c.l.b16 %v818
    %v827 = vpack.c.b16 %v824, %v823
    %v828 = vpack.c.b16 %v826, %v825
    %v832 = vsel %vm201, %v814, 0
    %834 = vmatpush.bf16.msra.mxu0 0
    %835 = vmatpush.bf16.msra.mxu0 0
    %836 = vmatpush.bf16.msra.mxu0 0
    %837 = vmatpush.bf16.msra.mxu0 0
    %838 = vmatpush.bf16.msra.mxu0 0
    %839 = vmatpush.bf16.msra.mxu0 0
    %840 = vmatpush.bf16.msra.mxu0 %v828
    %841 = vmatpush.bf16.msra.mxu0 %v827
    %842 = vmatmul.bf16.gmra.mxu0 %v832
    %v843 = vpop.f32.mrf.mxu0
    %v844 = vadd.f32 0.0, %v843
    %v845 = vpop.f32.mrf.mxu0
    %846 = vdwg.mxu0
    %v847 = vadd.f32 %v813, %v844
    %s848 = scalar_lea.vmem [#allocation3], 24
    %v849 = vld [vmem:[%s848] sm:$0xf]
    %v850 = vunpack.c.l.bf16 %v849
    %v851 = vpack.c.bf16 %v810, %v810
    %v852 = vld [vmem:[#allocation16] sm:$0xf]
    %v853 = vld [vmem:[#allocation16 + $0x4] sm:$0xf]
    %v854 = vld [vmem:[#allocation16 + $0x8] sm:$0xf]
    %v855 = vld [vmem:[#allocation16 + $0xc] sm:$0xf]
    %v860 = vunpack.c.l.b16 %v852
    %v861 = vunpack.c.l.b16 %v853
    %v862 = vunpack.c.l.b16 %v854
    %v863 = vunpack.c.l.b16 %v855
    %v864 = vpack.c.b16 %v861, %v860
    %v865 = vpack.c.b16 %v863, %v862
    %v869 = vsel %vm201, %v851, 0
    %871 = vmatpush.bf16.msra.mxu0 0
    %872 = vmatpush.bf16.msra.mxu0 0
    %873 = vmatpush.bf16.msra.mxu0 0
    %874 = vmatpush.bf16.msra.mxu0 0
    %875 = vmatpush.bf16.msra.mxu0 0
    %876 = vmatpush.bf16.msra.mxu0 0
    %877 = vmatpush.bf16.msra.mxu0 %v865
    %878 = vmatpush.bf16.msra.mxu0 %v864
    %879 = vmatmul.bf16.gmra.mxu0 %v869
    %v880 = vpop.f32.mrf.mxu0
    %v881 = vadd.f32 0.0, %v880
    %v882 = vpop.f32.mrf.mxu0
    %883 = vdwg.mxu0
    %v884 = vadd.f32 %v850, %v881
    %v885 = vtanh.pop %v847
    %v886 = vmul.f32 %v847, 0.5
    %v887 = vtanh.pop %v886
    %v888 = vadd.f32 %v887, 1.0
    %v889 = vmul.f32 %v888, 0.5
    %v890 = vsel %vm353, %v885, %v889
    %v891 = vtanh.pop %v884
    %v892 = vmul.f32 %v884, 0.5
    %v893 = vtanh.pop %v892
    %v894 = vadd.f32 %v893, 1.0
    %v895 = vmul.f32 %v894, 0.5
    %v896 = vsel %vm353, %v891, %v895
    %v897 = vld [vmem:[#allocation5] sm:$0xff]
    %899 = vrot.lane.b32.xlu0 %v897, 32
    %v900 = vpop.permute.xlu0 %899
    %v902 = vmul.f32 %v890, %v900
    %904 = vrot.lane.b32.xlu0 %v890, 64
    %v905 = vpop.permute.xlu0 %904
    %v907 = vmul.f32 %v890, %v905
    %909 = vrot.lane.b32.xlu0 %v907, 32
    %v910 = vpop.permute.xlu0 %909
    %v912 = vadd.f32 %v902, %v910
    %v913 = vld [vmem:[#allocation7] sm:$0xff]
    %915 = vrot.lane.b32.xlu0 %v913, 32
    %v916 = vpop.permute.xlu0 %915
    %v918 = vmul.f32 %v896, %v916
    %920 = vrot.lane.b32.xlu0 %v896, 64
    %v921 = vpop.permute.xlu0 %920
    %v923 = vmul.f32 %v896, %v921
    %925 = vrot.lane.b32.xlu0 %v923, 32
    %v926 = vpop.permute.xlu0 %925
    %v928 = vadd.f32 %v918, %v926
    %930 = vrot.lane.b32.xlu0 %v912, 96
    %v931 = vpop.permute.xlu0 %930
    %933 = vst.msk [vmem:[#allocation5] sm:$0xff] %vm201, %v931
    %935 = vrot.lane.b32.xlu0 %v928, 96
    %v936 = vpop.permute.xlu0 %935
    %938 = vst.msk [vmem:[#allocation7] sm:$0xff] %vm201, %v936
    %v939 = vtanh.pop %v912
    %941 = vrot.lane.b32.xlu0 %v939, 64
    %v942 = vpop.permute.xlu0 %941
    %v944 = vmul.f32 %v890, %v942
    %946 = vrot.lane.b32.xlu0 %v944, 32
    %v947 = vpop.permute.xlu0 %946
    %949 = vst.msk [vmem:[#allocation4] sm:$0xff] %vm201, %v947
    %v950 = vtanh.pop %v928
    %952 = vrot.lane.b32.xlu0 %v950, 64
    %v953 = vpop.permute.xlu0 %952
    %v955 = vmul.f32 %v896, %v953
    %957 = vrot.lane.b32.xlu0 %v955, 32
    %v958 = vpop.permute.xlu0 %957
    %960 = vst.msk [vmem:[#allocation6] sm:$0xff] %vm201, %v958
    %v961 = vld [vmem:[#allocation4] sm:$0xff]
    %v962 = vld [vmem:[#allocation6] sm:$0xff]
    %s963 = scalar_lea.vmem [#allocation2], 16
    %v964 = vld [vmem:[%s963] sm:$0xf]
    %v965 = vunpack.c.l.bf16 %v964
    %v966 = vpack.c.bf16 %v961, %v961
    %v967 = vld [vmem:[#allocation13] sm:$0xf]
    %v968 = vld [vmem:[#allocation13 + $0x4] sm:$0xf]
    %v969 = vld [vmem:[#allocation13 + $0x8] sm:$0xf]
    %v970 = vld [vmem:[#allocation13 + $0xc] sm:$0xf]
    %v975 = vunpack.c.l.b16 %v967
    %v976 = vunpack.c.l.b16 %v968
    %v977 = vunpack.c.l.b16 %v969
    %v978 = vunpack.c.l.b16 %v970
    %v979 = vpack.c.b16 %v976, %v975
    %v980 = vpack.c.b16 %v978, %v977
    %v984 = vsel %vm201, %v966, 0
    %986 = vmatpush.bf16.msra.mxu0 0
    %987 = vmatpush.bf16.msra.mxu0 0
    %988 = vmatpush.bf16.msra.mxu0 0
    %989 = vmatpush.bf16.msra.mxu0 0
    %990 = vmatpush.bf16.msra.mxu0 0
    %991 = vmatpush.bf16.msra.mxu0 0
    %992 = vmatpush.bf16.msra.mxu0 %v980
    %993 = vmatpush.bf16.msra.mxu0 %v979
    %994 = vmatmul.bf16.gmra.mxu0 %v984
    %v995 = vpop.f32.mrf.mxu0
    %v996 = vadd.f32 0.0, %v995
    %v997 = vpop.f32.mrf.mxu0
    %998 = vdwg.mxu0
    %v999 = vadd.f32 %v965, %v996
    %s1000 = scalar_lea.vmem [#allocation3], 20
    %v1001 = vld [vmem:[%s1000] sm:$0xf]
    %v1002 = vunpack.c.l.bf16 %v1001
    %v1003 = vpack.c.bf16 %v962, %v962
    %v1004 = vld [vmem:[#allocation16] sm:$0xf]
    %v1005 = vld [vmem:[#allocation16 + $0x4] sm:$0xf]
    %v1006 = vld [vmem:[#allocation16 + $0x8] sm:$0xf]
    %v1007 = vld [vmem:[#allocation16 + $0xc] sm:$0xf]
    %v1012 = vunpack.c.l.b16 %v1004
    %v1013 = vunpack.c.l.b16 %v1005
    %v1014 = vunpack.c.l.b16 %v1006
    %v1015 = vunpack.c.l.b16 %v1007
    %v1016 = vpack.c.b16 %v1013, %v1012
    %v1017 = vpack.c.b16 %v1015, %v1014
    %v1021 = vsel %vm201, %v1003, 0
    %1023 = vmatpush.bf16.msra.mxu0 0
    %1024 = vmatpush.bf16.msra.mxu0 0
    %1025 = vmatpush.bf16.msra.mxu0 0
    %1026 = vmatpush.bf16.msra.mxu0 0
    %1027 = vmatpush.bf16.msra.mxu0 0
    %1028 = vmatpush.bf16.msra.mxu0 0
    %1029 = vmatpush.bf16.msra.mxu0 %v1017
    %1030 = vmatpush.bf16.msra.mxu0 %v1016
    %1031 = vmatmul.bf16.gmra.mxu0 %v1021
    %v1032 = vpop.f32.mrf.mxu0
    %v1033 = vadd.f32 0.0, %v1032
    %v1034 = vpop.f32.mrf.mxu0
    %1035 = vdwg.mxu0
    %v1036 = vadd.f32 %v1002, %v1033
    %v1037 = vtanh.pop %v999
    %v1038 = vmul.f32 %v999, 0.5
    %v1039 = vtanh.pop %v1038
    %v1040 = vadd.f32 %v1039, 1.0
    %v1041 = vmul.f32 %v1040, 0.5
    %v1042 = vsel %vm353, %v1037, %v1041
    %v1043 = vtanh.pop %v1036
    %v1044 = vmul.f32 %v1036, 0.5
    %v1045 = vtanh.pop %v1044
    %v1046 = vadd.f32 %v1045, 1.0
    %v1047 = vmul.f32 %v1046, 0.5
    %v1048 = vsel %vm353, %v1043, %v1047
    %v1049 = vld [vmem:[#allocation5] sm:$0xff]
    %1051 = vrot.lane.b32.xlu0 %v1049, 32
    %v1052 = vpop.permute.xlu0 %1051
    %v1054 = vmul.f32 %v1042, %v1052
    %1056 = vrot.lane.b32.xlu0 %v1042, 64
    %v1057 = vpop.permute.xlu0 %1056
    %v1059 = vmul.f32 %v1042, %v1057
    %1061 = vrot.lane.b32.xlu0 %v1059, 32
    %v1062 = vpop.permute.xlu0 %1061
    %v1064 = vadd.f32 %v1054, %v1062
    %v1065 = vld [vmem:[#allocation7] sm:$0xff]
    %1067 = vrot.lane.b32.xlu0 %v1065, 32
    %v1068 = vpop.permute.xlu0 %1067
    %v1070 = vmul.f32 %v1048, %v1068
    %1072 = vrot.lane.b32.xlu0 %v1048, 64
    %v1073 = vpop.permute.xlu0 %1072
    %v1075 = vmul.f32 %v1048, %v1073
    %1077 = vrot.lane.b32.xlu0 %v1075, 32
    %v1078 = vpop.permute.xlu0 %1077
    %v1080 = vadd.f32 %v1070, %v1078
    %1082 = vrot.lane.b32.xlu0 %v1064, 96
    %v1083 = vpop.permute.xlu0 %1082
    %1085 = vst.msk [vmem:[#allocation5] sm:$0xff] %vm201, %v1083
    %1087 = vrot.lane.b32.xlu0 %v1080, 96
    %v1088 = vpop.permute.xlu0 %1087
    %1090 = vst.msk [vmem:[#allocation7] sm:$0xff] %vm201, %v1088
    %v1091 = vtanh.pop %v1064
    %1093 = vrot.lane.b32.xlu0 %v1091, 64
    %v1094 = vpop.permute.xlu0 %1093
    %v1096 = vmul.f32 %v1042, %v1094
    %1098 = vrot.lane.b32.xlu0 %v1096, 32
    %v1099 = vpop.permute.xlu0 %1098
    %1101 = vst.msk [vmem:[#allocation4] sm:$0xff] %vm201, %v1099
    %v1102 = vtanh.pop %v1080
    %1104 = vrot.lane.b32.xlu0 %v1102, 64
    %v1105 = vpop.permute.xlu0 %1104
    %v1107 = vmul.f32 %v1048, %v1105
    %1109 = vrot.lane.b32.xlu0 %v1107, 32
    %v1110 = vpop.permute.xlu0 %1109
    %1112 = vst.msk [vmem:[#allocation6] sm:$0xff] %vm201, %v1110
    %v1113 = vld [vmem:[#allocation4] sm:$0xff]
    %v1114 = vld [vmem:[#allocation6] sm:$0xff]
    %s1115 = scalar_lea.vmem [#allocation2], 20
    %v1116 = vld [vmem:[%s1115] sm:$0xf]
    %v1117 = vunpack.c.l.bf16 %v1116
    %v1118 = vpack.c.bf16 %v1113, %v1113
    %v1119 = vld [vmem:[#allocation13] sm:$0xf]
    %v1120 = vld [vmem:[#allocation13 + $0x4] sm:$0xf]
    %v1121 = vld [vmem:[#allocation13 + $0x8] sm:$0xf]
    %v1122 = vld [vmem:[#allocation13 + $0xc] sm:$0xf]
    %v1127 = vunpack.c.l.b16 %v1119
    %v1128 = vunpack.c.l.b16 %v1120
    %v1129 = vunpack.c.l.b16 %v1121
    %v1130 = vunpack.c.l.b16 %v1122
    %v1131 = vpack.c.b16 %v1128, %v1127
    %v1132 = vpack.c.b16 %v1130, %v1129
    %v1136 = vsel %vm201, %v1118, 0
    %1138 = vmatpush.bf16.msra.mxu0 0
    %1139 = vmatpush.bf16.msra.mxu0 0
    %1140 = vmatpush.bf16.msra.mxu0 0
    %1141 = vmatpush.bf16.msra.mxu0 0
    %1142 = vmatpush.bf16.msra.mxu0 0
    %1143 = vmatpush.bf16.msra.mxu0 0
    %1144 = vmatpush.bf16.msra.mxu0 %v1132
    %1145 = vmatpush.bf16.msra.mxu0 %v1131
    %1146 = vmatmul.bf16.gmra.mxu0 %v1136
    %v1147 = vpop.f32.mrf.mxu0
    %v1148 = vadd.f32 0.0, %v1147
    %v1149 = vpop.f32.mrf.mxu0
    %1150 = vdwg.mxu0
    %v1151 = vadd.f32 %v1117, %v1148
    %s1152 = scalar_lea.vmem [#allocation3], 16
    %v1153 = vld [vmem:[%s1152] sm:$0xf]
    %v1154 = vunpack.c.l.bf16 %v1153
    %v1155 = vpack.c.bf16 %v1114, %v1114
    %v1156 = vld [vmem:[#allocation16] sm:$0xf]
    %v1157 = vld [vmem:[#allocation16 + $0x4] sm:$0xf]
    %v1158 = vld [vmem:[#allocation16 + $0x8] sm:$0xf]
    %v1159 = vld [vmem:[#allocation16 + $0xc] sm:$0xf]
    %v1164 = vunpack.c.l.b16 %v1156
    %v1165 = vunpack.c.l.b16 %v1157
    %v1166 = vunpack.c.l.b16 %v1158
    %v1167 = vunpack.c.l.b16 %v1159
    %v1168 = vpack.c.b16 %v1165, %v1164
    %v1169 = vpack.c.b16 %v1167, %v1166
    %v1173 = vsel %vm201, %v1155, 0
    %1175 = vmatpush.bf16.msra.mxu0 0
    %1176 = vmatpush.bf16.msra.mxu0 0
    %1177 = vmatpush.bf16.msra.mxu0 0
    %1178 = vmatpush.bf16.msra.mxu0 0
    %1179 = vmatpush.bf16.msra.mxu0 0
    %1180 = vmatpush.bf16.msra.mxu0 0
    %1181 = vmatpush.bf16.msra.mxu0 %v1169
    %1182 = vmatpush.bf16.msra.mxu0 %v1168
    %1183 = vmatmul.bf16.gmra.mxu0 %v1173
    %v1184 = vpop.f32.mrf.mxu0
    %v1185 = vadd.f32 0.0, %v1184
    %v1186 = vpop.f32.mrf.mxu0
    %1187 = vdwg.mxu0
    %v1188 = vadd.f32 %v1154, %v1185
    %v1189 = vtanh.pop %v1151
    %v1190 = vmul.f32 %v1151, 0.5
    %v1191 = vtanh.pop %v1190
    %v1192 = vadd.f32 %v1191, 1.0
    %v1193 = vmul.f32 %v1192, 0.5
    %v1194 = vsel %vm353, %v1189, %v1193
    %v1195 = vtanh.pop %v1188
    %v1196 = vmul.f32 %v1188, 0.5
    %v1197 = vtanh.pop %v1196
    %v1198 = vadd.f32 %v1197, 1.0
    %v1199 = vmul.f32 %v1198, 0.5
    %v1200 = vsel %vm353, %v1195, %v1199
    %v1201 = vld [vmem:[#allocation5] sm:$0xff]
    %1203 = vrot.lane.b32.xlu0 %v1201, 32
    %v1204 = vpop.permute.xlu0 %1203
    %v1206 = vmul.f32 %v1194, %v1204
    %1208 = vrot.lane.b32.xlu0 %v1194, 64
    %v1209 = vpop.permute.xlu0 %1208
    %v1211 = vmul.f32 %v1194, %v1209
    %1213 = vrot.lane.b32.xlu0 %v1211, 32
    %v1214 = vpop.permute.xlu0 %1213
    %v1216 = vadd.f32 %v1206, %v1214
    %v1217 = vld [vmem:[#allocation7] sm:$0xff]
    %1219 = vrot.lane.b32.xlu0 %v1217, 32
    %v1220 = vpop.permute.xlu0 %1219
    %v1222 = vmul.f32 %v1200, %v1220
    %1224 = vrot.lane.b32.xlu0 %v1200, 64
    %v1225 = vpop.permute.xlu0 %1224
    %v1227 = vmul.f32 %v1200, %v1225
    %1229 = vrot.lane.b32.xlu0 %v1227, 32
    %v1230 = vpop.permute.xlu0 %1229
    %v1232 = vadd.f32 %v1222, %v1230
    %1234 = vrot.lane.b32.xlu0 %v1216, 96
    %v1235 = vpop.permute.xlu0 %1234
    %1237 = vst.msk [vmem:[#allocation5] sm:$0xff] %vm201, %v1235
    %1239 = vrot.lane.b32.xlu0 %v1232, 96
    %v1240 = vpop.permute.xlu0 %1239
    %1242 = vst.msk [vmem:[#allocation7] sm:$0xff] %vm201, %v1240
    %v1243 = vtanh.pop %v1216
    %1245 = vrot.lane.b32.xlu0 %v1243, 64
    %v1246 = vpop.permute.xlu0 %1245
    %v1248 = vmul.f32 %v1194, %v1246
    %1250 = vrot.lane.b32.xlu0 %v1248, 32
    %v1251 = vpop.permute.xlu0 %1250
    %1253 = vst.msk [vmem:[#allocation4] sm:$0xff] %vm201, %v1251
    %v1254 = vtanh.pop %v1232
    %1256 = vrot.lane.b32.xlu0 %v1254, 64
    %v1257 = vpop.permute.xlu0 %1256
    %v1259 = vmul.f32 %v1200, %v1257
    %1261 = vrot.lane.b32.xlu0 %v1259, 32
    %v1262 = vpop.permute.xlu0 %1261
    %1264 = vst.msk [vmem:[#allocation6] sm:$0xff] %vm201, %v1262
    %v1265 = vld [vmem:[#allocation4] sm:$0xff]
    %v1266 = vld [vmem:[#allocation6] sm:$0xff]
    %s1267 = scalar_lea.vmem [#allocation2], 24
    %v1268 = vld [vmem:[%s1267] sm:$0xf]
    %v1269 = vunpack.c.l.bf16 %v1268
    %v1270 = vpack.c.bf16 %v1265, %v1265
    %v1271 = vld [vmem:[#allocation13] sm:$0xf]
    %v1272 = vld [vmem:[#allocation13 + $0x4] sm:$0xf]
    %v1273 = vld [vmem:[#allocation13 + $0x8] sm:$0xf]
    %v1274 = vld [vmem:[#allocation13 + $0xc] sm:$0xf]
    %v1279 = vunpack.c.l.b16 %v1271
    %v1280 = vunpack.c.l.b16 %v1272
    %v1281 = vunpack.c.l.b16 %v1273
    %v1282 = vunpack.c.l.b16 %v1274
    %v1283 = vpack.c.b16 %v1280, %v1279
    %v1284 = vpack.c.b16 %v1282, %v1281
    %v1288 = vsel %vm201, %v1270, 0
    %1290 = vmatpush.bf16.msra.mxu0 0
    %1291 = vmatpush.bf16.msra.mxu0 0
    %1292 = vmatpush.bf16.msra.mxu0 0
    %1293 = vmatpush.bf16.msra.mxu0 0
    %1294 = vmatpush.bf16.msra.mxu0 0
    %1295 = vmatpush.bf16.msra.mxu0 0
    %1296 = vmatpush.bf16.msra.mxu0 %v1284
    %1297 = vmatpush.bf16.msra.mxu0 %v1283
    %1298 = vmatmul.bf16.gmra.mxu0 %v1288
    %v1299 = vpop.f32.mrf.mxu0
    %v1300 = vadd.f32 0.0, %v1299
    %v1301 = vpop.f32.mrf.mxu0
    %1302 = vdwg.mxu0
    %v1303 = vadd.f32 %v1269, %v1300
    %s1304 = scalar_lea.vmem [#allocation3], 12
    %v1305 = vld [vmem:[%s1304] sm:$0xf]
    %v1306 = vunpack.c.l.bf16 %v1305
    %v1307 = vpack.c.bf16 %v1266, %v1266
    %v1308 = vld [vmem:[#allocation16] sm:$0xf]
    %v1309 = vld [vmem:[#allocation16 + $0x4] sm:$0xf]
    %v1310 = vld [vmem:[#allocation16 + $0x8] sm:$0xf]
    %v1311 = vld [vmem:[#allocation16 + $0xc] sm:$0xf]
    %v1316 = vunpack.c.l.b16 %v1308
    %v1317 = vunpack.c.l.b16 %v1309
    %v1318 = vunpack.c.l.b16 %v1310
    %v1319 = vunpack.c.l.b16 %v1311
    %v1320 = vpack.c.b16 %v1317, %v1316
    %v1321 = vpack.c.b16 %v1319, %v1318
    %v1325 = vsel %vm201, %v1307, 0
    %1327 = vmatpush.bf16.msra.mxu0 0
    %1328 = vmatpush.bf16.msra.mxu0 0
    %1329 = vmatpush.bf16.msra.mxu0 0
    %1330 = vmatpush.bf16.msra.mxu0 0
    %1331 = vmatpush.bf16.msra.mxu0 0
    %1332 = vmatpush.bf16.msra.mxu0 0
    %1333 = vmatpush.bf16.msra.mxu0 %v1321
    %1334 = vmatpush.bf16.msra.mxu0 %v1320
    %1335 = vmatmul.bf16.gmra.mxu0 %v1325
    %v1336 = vpop.f32.mrf.mxu0
    %v1337 = vadd.f32 0.0, %v1336
    %v1338 = vpop.f32.mrf.mxu0
    %1339 = vdwg.mxu0
    %v1340 = vadd.f32 %v1306, %v1337
    %v1341 = vtanh.pop %v1303
    %v1342 = vmul.f32 %v1303, 0.5
    %v1343 = vtanh.pop %v1342
    %v1344 = vadd.f32 %v1343, 1.0
    %v1345 = vmul.f32 %v1344, 0.5
    %v1346 = vsel %vm353, %v1341, %v1345
    %v1347 = vtanh.pop %v1340
    %v1348 = vmul.f32 %v1340, 0.5
    %v1349 = vtanh.pop %v1348
    %v1350 = vadd.f32 %v1349, 1.0
    %v1351 = vmul.f32 %v1350, 0.5
    %v1352 = vsel %vm353, %v1347, %v1351
    %v1353 = vld [vmem:[#allocation5] sm:$0xff]
    %1355 = vrot.lane.b32.xlu0 %v1353, 32
    %v1356 = vpop.permute.xlu0 %1355
    %v1358 = vmul.f32 %v1346, %v1356
    %1360 = vrot.lane.b32.xlu0 %v1346, 64
    %v1361 = vpop.permute.xlu0 %1360
    %v1363 = vmul.f32 %v1346, %v1361
    %1365 = vrot.lane.b32.xlu0 %v1363, 32
    %v1366 = vpop.permute.xlu0 %1365
    %v1368 = vadd.f32 %v1358, %v1366
    %v1369 = vld [vmem:[#allocation7] sm:$0xff]
    %1371 = vrot.lane.b32.xlu0 %v1369, 32
    %v1372 = vpop.permute.xlu0 %1371
    %v1374 = vmul.f32 %v1352, %v1372
    %1376 = vrot.lane.b32.xlu0 %v1352, 64
    %v1377 = vpop.permute.xlu0 %1376
    %v1379 = vmul.f32 %v1352, %v1377
    %1381 = vrot.lane.b32.xlu0 %v1379, 32
    %v1382 = vpop.permute.xlu0 %1381
    %v1384 = vadd.f32 %v1374, %v1382
    %1386 = vrot.lane.b32.xlu0 %v1368, 96
    %v1387 = vpop.permute.xlu0 %1386
    %1389 = vst.msk [vmem:[#allocation5] sm:$0xff] %vm201, %v1387
    %1391 = vrot.lane.b32.xlu0 %v1384, 96
    %v1392 = vpop.permute.xlu0 %1391
    %1394 = vst.msk [vmem:[#allocation7] sm:$0xff] %vm201, %v1392
    %v1395 = vtanh.pop %v1368
    %1397 = vrot.lane.b32.xlu0 %v1395, 64
    %v1398 = vpop.permute.xlu0 %1397
    %v1400 = vmul.f32 %v1346, %v1398
    %1402 = vrot.lane.b32.xlu0 %v1400, 32
    %v1403 = vpop.permute.xlu0 %1402
    %1405 = vst.msk [vmem:[#allocation4] sm:$0xff] %vm201, %v1403
    %v1406 = vtanh.pop %v1384
    %1408 = vrot.lane.b32.xlu0 %v1406, 64
    %v1409 = vpop.permute.xlu0 %1408
    %v1411 = vmul.f32 %v1352, %v1409
    %1413 = vrot.lane.b32.xlu0 %v1411, 32
    %v1414 = vpop.permute.xlu0 %1413
    %1416 = vst.msk [vmem:[#allocation6] sm:$0xff] %vm201, %v1414
    %v1417 = vld [vmem:[#allocation4] sm:$0xff]
    %v1418 = vld [vmem:[#allocation6] sm:$0xff]
    %s1419 = scalar_lea.vmem [#allocation2], 28
    %v1420 = vld [vmem:[%s1419] sm:$0xf]
    %v1421 = vunpack.c.l.bf16 %v1420
    %v1422 = vpack.c.bf16 %v1417, %v1417
    %v1423 = vld [vmem:[#allocation13] sm:$0xf]
    %v1424 = vld [vmem:[#allocation13 + $0x4] sm:$0xf]
    %v1425 = vld [vmem:[#allocation13 + $0x8] sm:$0xf]
    %v1426 = vld [vmem:[#allocation13 + $0xc] sm:$0xf]
    %v1431 = vunpack.c.l.b16 %v1423
    %v1432 = vunpack.c.l.b16 %v1424
    %v1433 = vunpack.c.l.b16 %v1425
    %v1434 = vunpack.c.l.b16 %v1426
    %v1435 = vpack.c.b16 %v1432, %v1431
    %v1436 = vpack.c.b16 %v1434, %v1433
    %v1440 = vsel %vm201, %v1422, 0
    %1442 = vmatpush.bf16.msra.mxu0 0
    %1443 = vmatpush.bf16.msra.mxu0 0
    %1444 = vmatpush.bf16.msra.mxu0 0
    %1445 = vmatpush.bf16.msra.mxu0 0
    %1446 = vmatpush.bf16.msra.mxu0 0
    %1447 = vmatpush.bf16.msra.mxu0 0
    %1448 = vmatpush.bf16.msra.mxu0 %v1436
    %1449 = vmatpush.bf16.msra.mxu0 %v1435
    %1450 = vmatmul.bf16.gmra.mxu0 %v1440
    %v1451 = vpop.f32.mrf.mxu0
    %v1452 = vadd.f32 0.0, %v1451
    %v1453 = vpop.f32.mrf.mxu0
    %1454 = vdwg.mxu0
    %v1455 = vadd.f32 %v1421, %v1452
    %s1456 = scalar_lea.vmem [#allocation3], 8
    %v1457 = vld [vmem:[%s1456] sm:$0xf]
    %v1458 = vunpack.c.l.bf16 %v1457
    %v1459 = vpack.c.bf16 %v1418, %v1418
    %v1460 = vld [vmem:[#allocation16] sm:$0xf]
    %v1461 = vld [vmem:[#allocation16 + $0x4] sm:$0xf]
    %v1462 = vld [vmem:[#allocation16 + $0x8] sm:$0xf]
    %v1463 = vld [vmem:[#allocation16 + $0xc] sm:$0xf]
    %v1468 = vunpack.c.l.b16 %v1460
    %v1469 = vunpack.c.l.b16 %v1461
    %v1470 = vunpack.c.l.b16 %v1462
    %v1471 = vunpack.c.l.b16 %v1463
    %v1472 = vpack.c.b16 %v1469, %v1468
    %v1473 = vpack.c.b16 %v1471, %v1470
    %v1477 = vsel %vm201, %v1459, 0
    %1479 = vmatpush.bf16.msra.mxu0 0
    %1480 = vmatpush.bf16.msra.mxu0 0
    %1481 = vmatpush.bf16.msra.mxu0 0
    %1482 = vmatpush.bf16.msra.mxu0 0
    %1483 = vmatpush.bf16.msra.mxu0 0
    %1484 = vmatpush.bf16.msra.mxu0 0
    %1485 = vmatpush.bf16.msra.mxu0 %v1473
    %1486 = vmatpush.bf16.msra.mxu0 %v1472
    %1487 = vmatmul.bf16.gmra.mxu0 %v1477
    %v1488 = vpop.f32.mrf.mxu0
    %v1489 = vadd.f32 0.0, %v1488
    %v1490 = vpop.f32.mrf.mxu0
    %1491 = vdwg.mxu0
    %v1492 = vadd.f32 %v1458, %v1489
    %v1493 = vtanh.pop %v1455
    %v1494 = vmul.f32 %v1455, 0.5
    %v1495 = vtanh.pop %v1494
    %v1496 = vadd.f32 %v1495, 1.0
    %v1497 = vmul.f32 %v1496, 0.5
    %v1498 = vsel %vm353, %v1493, %v1497
    %v1499 = vtanh.pop %v1492
    %v1500 = vmul.f32 %v1492, 0.5
    %v1501 = vtanh.pop %v1500
    %v1502 = vadd.f32 %v1501, 1.0
    %v1503 = vmul.f32 %v1502, 0.5
    %v1504 = vsel %vm353, %v1499, %v1503
    %v1505 = vld [vmem:[#allocation5] sm:$0xff]
    %1507 = vrot.lane.b32.xlu0 %v1505, 32
    %v1508 = vpop.permute.xlu0 %1507
    %v1510 = vmul.f32 %v1498, %v1508
    %1512 = vrot.lane.b32.xlu0 %v1498, 64
    %v1513 = vpop.permute.xlu0 %1512
    %v1515 = vmul.f32 %v1498, %v1513
    %1517 = vrot.lane.b32.xlu0 %v1515, 32
    %v1518 = vpop.permute.xlu0 %1517
    %v1520 = vadd.f32 %v1510, %v1518
    %v1521 = vld [vmem:[#allocation7] sm:$0xff]
    %1523 = vrot.lane.b32.xlu0 %v1521, 32
    %v1524 = vpop.permute.xlu0 %1523
    %v1526 = vmul.f32 %v1504, %v1524
    %1528 = vrot.lane.b32.xlu0 %v1504, 64
    %v1529 = vpop.permute.xlu0 %1528
    %v1531 = vmul.f32 %v1504, %v1529
    %1533 = vrot.lane.b32.xlu0 %v1531, 32
    %v1534 = vpop.permute.xlu0 %1533
    %v1536 = vadd.f32 %v1526, %v1534
    %1538 = vrot.lane.b32.xlu0 %v1520, 96
    %v1539 = vpop.permute.xlu0 %1538
    %1541 = vst.msk [vmem:[#allocation5] sm:$0xff] %vm201, %v1539
    %1543 = vrot.lane.b32.xlu0 %v1536, 96
    %v1544 = vpop.permute.xlu0 %1543
    %1546 = vst.msk [vmem:[#allocation7] sm:$0xff] %vm201, %v1544
    %v1547 = vtanh.pop %v1520
    %1549 = vrot.lane.b32.xlu0 %v1547, 64
    %v1550 = vpop.permute.xlu0 %1549
    %v1552 = vmul.f32 %v1498, %v1550
    %1554 = vrot.lane.b32.xlu0 %v1552, 32
    %v1555 = vpop.permute.xlu0 %1554
    %1557 = vst.msk [vmem:[#allocation4] sm:$0xff] %vm201, %v1555
    %v1558 = vtanh.pop %v1536
    %1560 = vrot.lane.b32.xlu0 %v1558, 64
    %v1561 = vpop.permute.xlu0 %1560
    %v1563 = vmul.f32 %v1504, %v1561
    %1565 = vrot.lane.b32.xlu0 %v1563, 32
    %v1566 = vpop.permute.xlu0 %1565
    %1568 = vst.msk [vmem:[#allocation6] sm:$0xff] %vm201, %v1566
    %v1569 = vld [vmem:[#allocation4] sm:$0xff]
    %v1570 = vld [vmem:[#allocation6] sm:$0xff]
    %s1571 = scalar_lea.vmem [#allocation2], 32
    %v1572 = vld [vmem:[%s1571] sm:$0xf]
    %v1573 = vunpack.c.l.bf16 %v1572
    %v1574 = vpack.c.bf16 %v1569, %v1569
    %v1575 = vld [vmem:[#allocation13] sm:$0xf]
    %v1576 = vld [vmem:[#allocation13 + $0x4] sm:$0xf]
    %v1577 = vld [vmem:[#allocation13 + $0x8] sm:$0xf]
    %v1578 = vld [vmem:[#allocation13 + $0xc] sm:$0xf]
    %v1583 = vunpack.c.l.b16 %v1575
    %v1584 = vunpack.c.l.b16 %v1576
    %v1585 = vunpack.c.l.b16 %v1577
    %v1586 = vunpack.c.l.b16 %v1578
    %v1587 = vpack.c.b16 %v1584, %v1583
    %v1588 = vpack.c.b16 %v1586, %v1585
    %v1592 = vsel %vm201, %v1574, 0
    %1594 = vmatpush.bf16.msra.mxu0 0
    %1595 = vmatpush.bf16.msra.mxu0 0
    %1596 = vmatpush.bf16.msra.mxu0 0
    %1597 = vmatpush.bf16.msra.mxu0 0
    %1598 = vmatpush.bf16.msra.mxu0 0
    %1599 = vmatpush.bf16.msra.mxu0 0
    %1600 = vmatpush.bf16.msra.mxu0 %v1588
    %1601 = vmatpush.bf16.msra.mxu0 %v1587
    %1602 = vmatmul.bf16.gmra.mxu0 %v1592
    %v1603 = vpop.f32.mrf.mxu0
    %v1604 = vadd.f32 0.0, %v1603
    %v1605 = vpop.f32.mrf.mxu0
    %1606 = vdwg.mxu0
    %v1607 = vadd.f32 %v1573, %v1604
    %s1608 = scalar_lea.vmem [#allocation3], 4
    %v1609 = vld [vmem:[%s1608] sm:$0xf]
    %v1610 = vunpack.c.l.bf16 %v1609
    %v1611 = vpack.c.bf16 %v1570, %v1570
    %v1612 = vld [vmem:[#allocation16] sm:$0xf]
    %v1613 = vld [vmem:[#allocation16 + $0x4] sm:$0xf]
    %v1614 = vld [vmem:[#allocation16 + $0x8] sm:$0xf]
    %v1615 = vld [vmem:[#allocation16 + $0xc] sm:$0xf]
    %v1620 = vunpack.c.l.b16 %v1612
    %v1621 = vunpack.c.l.b16 %v1613
    %v1622 = vunpack.c.l.b16 %v1614
    %v1623 = vunpack.c.l.b16 %v1615
    %v1624 = vpack.c.b16 %v1621, %v1620
    %v1625 = vpack.c.b16 %v1623, %v1622
    %v1629 = vsel %vm201, %v1611, 0
    %1631 = vmatpush.bf16.msra.mxu0 0
    %1632 = vmatpush.bf16.msra.mxu0 0
    %1633 = vmatpush.bf16.msra.mxu0 0
    %1634 = vmatpush.bf16.msra.mxu0 0
    %1635 = vmatpush.bf16.msra.mxu0 0
    %1636 = vmatpush.bf16.msra.mxu0 0
    %1637 = vmatpush.bf16.msra.mxu0 %v1625
    %1638 = vmatpush.bf16.msra.mxu0 %v1624
    %1639 = vmatmul.bf16.gmra.mxu0 %v1629
    %v1640 = vpop.f32.mrf.mxu0
    %v1641 = vadd.f32 0.0, %v1640
    %v1642 = vpop.f32.mrf.mxu0
    %1643 = vdwg.mxu0
    %v1644 = vadd.f32 %v1610, %v1641
    %v1645 = vtanh.pop %v1607
    %v1646 = vmul.f32 %v1607, 0.5
    %v1647 = vtanh.pop %v1646
    %v1648 = vadd.f32 %v1647, 1.0
    %v1649 = vmul.f32 %v1648, 0.5
    %v1650 = vsel %vm353, %v1645, %v1649
    %v1651 = vtanh.pop %v1644
    %v1652 = vmul.f32 %v1644, 0.5
    %v1653 = vtanh.pop %v1652
    %v1654 = vadd.f32 %v1653, 1.0
    %v1655 = vmul.f32 %v1654, 0.5
    %v1656 = vsel %vm353, %v1651, %v1655
    %v1657 = vld [vmem:[#allocation5] sm:$0xff]
    %1659 = vrot.lane.b32.xlu0 %v1657, 32
    %v1660 = vpop.permute.xlu0 %1659
    %v1662 = vmul.f32 %v1650, %v1660
    %1664 = vrot.lane.b32.xlu0 %v1650, 64
    %v1665 = vpop.permute.xlu0 %1664
    %v1667 = vmul.f32 %v1650, %v1665
    %1669 = vrot.lane.b32.xlu0 %v1667, 32
    %v1670 = vpop.permute.xlu0 %1669
    %v1672 = vadd.f32 %v1662, %v1670
    %v1673 = vld [vmem:[#allocation7] sm:$0xff]
    %1675 = vrot.lane.b32.xlu0 %v1673, 32
    %v1676 = vpop.permute.xlu0 %1675
    %v1678 = vmul.f32 %v1656, %v1676
    %1680 = vrot.lane.b32.xlu0 %v1656, 64
    %v1681 = vpop.permute.xlu0 %1680
    %v1683 = vmul.f32 %v1656, %v1681
    %1685 = vrot.lane.b32.xlu0 %v1683, 32
    %v1686 = vpop.permute.xlu0 %1685
    %v1688 = vadd.f32 %v1678, %v1686
    %1690 = vrot.lane.b32.xlu0 %v1672, 96
    %v1691 = vpop.permute.xlu0 %1690
    %1693 = vst.msk [vmem:[#allocation5] sm:$0xff] %vm201, %v1691
    %1695 = vrot.lane.b32.xlu0 %v1688, 96
    %v1696 = vpop.permute.xlu0 %1695
    %1698 = vst.msk [vmem:[#allocation7] sm:$0xff] %vm201, %v1696
    %v1699 = vtanh.pop %v1672
    %1701 = vrot.lane.b32.xlu0 %v1699, 64
    %v1702 = vpop.permute.xlu0 %1701
    %v1704 = vmul.f32 %v1650, %v1702
    %1706 = vrot.lane.b32.xlu0 %v1704, 32
    %v1707 = vpop.permute.xlu0 %1706
    %1709 = vst.msk [vmem:[#allocation4] sm:$0xff] %vm201, %v1707
    %v1710 = vtanh.pop %v1688
    %1712 = vrot.lane.b32.xlu0 %v1710, 64
    %v1713 = vpop.permute.xlu0 %1712
    %v1715 = vmul.f32 %v1656, %v1713
    %1717 = vrot.lane.b32.xlu0 %v1715, 32
    %v1718 = vpop.permute.xlu0 %1717
    %1720 = vst.msk [vmem:[#allocation6] sm:$0xff] %vm201, %v1718
    %v1721 = vld [vmem:[#allocation4] sm:$0xff]
    %v1722 = vld [vmem:[#allocation6] sm:$0xff]
    %s1723 = scalar_lea.vmem [#allocation2], 36
    %v1724 = vld [vmem:[%s1723] sm:$0xf]
    %v1725 = vunpack.c.l.bf16 %v1724
    %v1726 = vpack.c.bf16 %v1721, %v1721
    %v1727 = vld [vmem:[#allocation13] sm:$0xf]
    %v1728 = vld [vmem:[#allocation13 + $0x4] sm:$0xf]
    %v1729 = vld [vmem:[#allocation13 + $0x8] sm:$0xf]
    %v1730 = vld [vmem:[#allocation13 + $0xc] sm:$0xf]
    %v1735 = vunpack.c.l.b16 %v1727
    %v1736 = vunpack.c.l.b16 %v1728
    %v1737 = vunpack.c.l.b16 %v1729
    %v1738 = vunpack.c.l.b16 %v1730
    %v1739 = vpack.c.b16 %v1736, %v1735
    %v1740 = vpack.c.b16 %v1738, %v1737
    %v1744 = vsel %vm201, %v1726, 0
    %1746 = vmatpush.bf16.msra.mxu0 0
    %1747 = vmatpush.bf16.msra.mxu0 0
    %1748 = vmatpush.bf16.msra.mxu0 0
    %1749 = vmatpush.bf16.msra.mxu0 0
    %1750 = vmatpush.bf16.msra.mxu0 0
    %1751 = vmatpush.bf16.msra.mxu0 0
    %1752 = vmatpush.bf16.msra.mxu0 %v1740
    %1753 = vmatpush.bf16.msra.mxu0 %v1739
    %1754 = vmatmul.bf16.gmra.mxu0 %v1744
    %v1755 = vpop.f32.mrf.mxu0
    %v1756 = vadd.f32 0.0, %v1755
    %v1757 = vpop.f32.mrf.mxu0
    %1758 = vdwg.mxu0
    %v1759 = vadd.f32 %v1725, %v1756
    %v1760 = vld [vmem:[#allocation3] sm:$0xf]
    %v1761 = vunpack.c.l.bf16 %v1760
    %v1762 = vpack.c.bf16 %v1722, %v1722
    %v1763 = vld [vmem:[#allocation16] sm:$0xf]
    %v1764 = vld [vmem:[#allocation16 + $0x4] sm:$0xf]
    %v1765 = vld [vmem:[#allocation16 + $0x8] sm:$0xf]
    %v1766 = vld [vmem:[#allocation16 + $0xc] sm:$0xf]
    %v1771 = vunpack.c.l.b16 %v1763
    %v1772 = vunpack.c.l.b16 %v1764
    %v1773 = vunpack.c.l.b16 %v1765
    %v1774 = vunpack.c.l.b16 %v1766
    %v1775 = vpack.c.b16 %v1772, %v1771
    %v1776 = vpack.c.b16 %v1774, %v1773
    %v1780 = vsel %vm201, %v1762, 0
    %1782 = vmatpush.bf16.msra.mxu0 0
    %1783 = vmatpush.bf16.msra.mxu0 0
    %1784 = vmatpush.bf16.msra.mxu0 0
    %1785 = vmatpush.bf16.msra.mxu0 0
    %1786 = vmatpush.bf16.msra.mxu0 0
    %1787 = vmatpush.bf16.msra.mxu0 0
    %1788 = vmatpush.bf16.msra.mxu0 %v1776
    %1789 = vmatpush.bf16.msra.mxu0 %v1775
    %1790 = vmatmul.bf16.gmra.mxu0 %v1780
    %v1791 = vpop.f32.mrf.mxu0
    %v1792 = vadd.f32 0.0, %v1791
    %v1793 = vpop.f32.mrf.mxu0
    %1794 = vdwg.mxu0
    %v1795 = vadd.f32 %v1761, %v1792
    %v1796 = vtanh.pop %v1759
    %v1797 = vmul.f32 %v1759, 0.5
    %v1798 = vtanh.pop %v1797
    %v1799 = vadd.f32 %v1798, 1.0
    %v1800 = vmul.f32 %v1799, 0.5
    %v1801 = vsel %vm353, %v1796, %v1800
    %v1802 = vtanh.pop %v1795
    %v1803 = vmul.f32 %v1795, 0.5
    %v1804 = vtanh.pop %v1803
    %v1805 = vadd.f32 %v1804, 1.0
    %v1806 = vmul.f32 %v1805, 0.5
    %v1807 = vsel %vm353, %v1802, %v1806
    %v1808 = vld [vmem:[#allocation5] sm:$0xff]
    %1810 = vrot.lane.b32.xlu0 %v1808, 32
    %v1811 = vpop.permute.xlu0 %1810
    %v1813 = vmul.f32 %v1801, %v1811
    %1815 = vrot.lane.b32.xlu0 %v1801, 64
    %v1816 = vpop.permute.xlu0 %1815
    %v1818 = vmul.f32 %v1801, %v1816
    %1820 = vrot.lane.b32.xlu0 %v1818, 32
    %v1821 = vpop.permute.xlu0 %1820
    %v1823 = vadd.f32 %v1813, %v1821
    %v1824 = vld [vmem:[#allocation7] sm:$0xff]
    %1826 = vrot.lane.b32.xlu0 %v1824, 32
    %v1827 = vpop.permute.xlu0 %1826
    %v1829 = vmul.f32 %v1807, %v1827
    %1831 = vrot.lane.b32.xlu0 %v1807, 64
    %v1832 = vpop.permute.xlu0 %1831
    %v1834 = vmul.f32 %v1807, %v1832
    %1836 = vrot.lane.b32.xlu0 %v1834, 32
    %v1837 = vpop.permute.xlu0 %1836
    %v1839 = vadd.f32 %v1829, %v1837
    %1841 = vrot.lane.b32.xlu0 %v1823, 96
    %v1842 = vpop.permute.xlu0 %1841
    %1844 = vst.msk [vmem:[#allocation5] sm:$0xff] %vm201, %v1842
    %1846 = vrot.lane.b32.xlu0 %v1839, 96
    %v1847 = vpop.permute.xlu0 %1846
    %1849 = vst.msk [vmem:[#allocation7] sm:$0xff] %vm201, %v1847
    %v1850 = vtanh.pop %v1823
    %1852 = vrot.lane.b32.xlu0 %v1850, 64
    %v1853 = vpop.permute.xlu0 %1852
    %v1855 = vmul.f32 %v1801, %v1853
    %1857 = vrot.lane.b32.xlu0 %v1855, 32
    %v1858 = vpop.permute.xlu0 %1857
    %1860 = vst.msk [vmem:[#allocation4] sm:$0xff] %vm201, %v1858
    %v1861 = vtanh.pop %v1839
    %1863 = vrot.lane.b32.xlu0 %v1861, 64
    %v1864 = vpop.permute.xlu0 %1863
    %v1866 = vmul.f32 %v1807, %v1864
    %1868 = vrot.lane.b32.xlu0 %v1866, 32
    %v1869 = vpop.permute.xlu0 %1868
    %1871 = vst.msk [vmem:[#allocation6] sm:$0xff] %vm201, %v1869
    %v1872 = vld [vmem:[#allocation4] sm:$0xff]
    %v1873 = vpack.c.bf16 %v1872, %v1872
    %v1874 = vld [vmem:[#allocation17] sm:$0xf]
    %v1875 = vld [vmem:[#allocation17 + $0x4] sm:$0xf]
    %v1876 = vld [vmem:[#allocation17 + $0x8] sm:$0xf]
    %v1877 = vld [vmem:[#allocation17 + $0xc] sm:$0xf]
    %v1878 = vld [vmem:[#allocation6] sm:$0xff]
    %v1879 = vpack.c.bf16 %v1878, %v1878
    %v1880 = vld [vmem:[#allocation19] sm:$0xf]
    %v1881 = vld [vmem:[#allocation19 + $0x4] sm:$0xf]
    %v1882 = vld [vmem:[#allocation19 + $0x8] sm:$0xf]
    %v1883 = vld [vmem:[#allocation19 + $0xc] sm:$0xf]
    %v1888 = vunpack.c.l.b16 %v1880
    %v1889 = vunpack.c.l.b16 %v1881
    %v1890 = vunpack.c.l.b16 %v1882
    %v1891 = vunpack.c.l.b16 %v1883
    %v1892 = vpack.c.b16 %v1889, %v1888
    %v1893 = vpack.c.b16 %v1891, %v1890
    %v1897 = vsel %vm201, %v1879, 0
    %1899 = vmatpush.bf16.msra.mxu0 0
    %1900 = vmatpush.bf16.msra.mxu0 0
    %1901 = vmatpush.bf16.msra.mxu0 0
    %1902 = vmatpush.bf16.msra.mxu0 0
    %1903 = vmatpush.bf16.msra.mxu0 0
    %1904 = vmatpush.bf16.msra.mxu0 0
    %1905 = vmatpush.bf16.msra.mxu0 %v1893
    %1906 = vmatpush.bf16.msra.mxu0 %v1892
    %1907 = vmatmul.bf16.gmra.mxu0 %v1897
    %v1908 = vpop.f32.mrf.mxu0
    %v1909 = vadd.f32 0.0, %v1908
    %v1910 = vpop.f32.mrf.mxu0
    %1911 = vdwg.mxu0
    %v1916 = vunpack.c.l.b16 %v1874
    %v1917 = vunpack.c.l.b16 %v1875
    %v1918 = vunpack.c.l.b16 %v1876
    %v1919 = vunpack.c.l.b16 %v1877
    %v1920 = vpack.c.b16 %v1917, %v1916
    %v1921 = vpack.c.b16 %v1919, %v1918
    %v1925 = vsel %vm201, %v1873, 0
    %1927 = vmatpush.bf16.msra.mxu0 0
    %1928 = vmatpush.bf16.msra.mxu0 0
    %1929 = vmatpush.bf16.msra.mxu0 0
    %1930 = vmatpush.bf16.msra.mxu0 0
    %1931 = vmatpush.bf16.msra.mxu0 0
    %1932 = vmatpush.bf16.msra.mxu0 0
    %1933 = vmatpush.bf16.msra.mxu0 %v1921
    %1934 = vmatpush.bf16.msra.mxu0 %v1920
    %1935 = vmatmul.bf16.gmra.mxu0 %v1925
    %v1936 = vpop.f32.mrf.mxu0
    %v1937 = vadd.f32 %v1909, %v1936
    %v1938 = vpop.f32.mrf.mxu0
    %1939 = vdwg.mxu0
    %v1940 = vld [vmem:[%s9] sm:$0x1]
    %v1942 = vperm.slane %v1940, 0
    %v1944 = vadd.f32 %v1937, %v1942
    %1945 = vst [vmem:[#allocation20] sm:$0xff] %v1944
    // Predicated region
    $region70: #{tpu_custom_call.1} parent=1 // pred_check
      _
    $region71: #{tpu_custom_call.1} parent=1 // pred_check_branch
      %1947 = sbr.rel (0) target = $region73
    $region72: #{tpu_custom_call.1} parent=1 // pred_region
      %1949 = vsyncadd [#allocation10], 0
      %s1951 = sshll.u32 [#allocation20], 4
      %s1952 = int_to_ptr.vmem [resolvable:$true] %s1951
      %s1953 = sshll.u32 %s10, 4
      %s1954 = int_to_ptr.hbm [resolvable:$true] %s1953
      %1956 = dma.vmem_to_hbm [thread:$0]  %s1952, 128, %s1954, [#allocation10]
    $region73: #{tpu_custom_call.1} parent=1 // pred_fallthru
      _
    // Predicated region
    $region74: #{tpu_custom_call.1} parent=1 // pred_check
      _
    $region75: #{tpu_custom_call.1} parent=1 // pred_check_branch
      %1958 = sbr.rel (0) target = $region77
    $region76: #{tpu_custom_call.1} parent=1 // pred_region
      %1960 = dma.done [#allocation10], 128
    $region77: #{tpu_custom_call.1} parent=1 // pred_fallthru
      _
    %1961 = vsyncpa [#allocation9], 1
    %1962 = vsyncpa [#allocation12], 1
    %1963 = vsyncpa [#allocation15], 1
    %1964 = vsyncpa [#allocation18], 1
    %1965 = vsyncpa [#allocation10], 1

</llo_original>
